<compile_context>
chip_gen: v5e
topology: v5e:2x2
jax: 0.10.0
libtpu: 0.0.40
codegen_flags: <defaults>
</compile_context>

<pallas_src>
import functools

import jax
import jax.numpy as jnp
from jax import lax
from jax.experimental import pallas as pl
from jax.experimental.pallas import tpu as pltpu

_SQRT_HALF = 0.7071067811865476  # 1/sqrt(2) for exact (erf-based) GELU


def _gelu_linear_kernel(x_ref, w_ref, b_ref, o_ref, acc_ref, *, use_bf16_matmul):
    # x_ref:   (tm, tk)    activation tile
    # w_ref:   (Cout, tk)  weight tile, PyTorch (out_features, in_features) layout
    # b_ref:   (1, Cout)   bias
    # o_ref:   (tm, Cout)  output tile (resident across the K axis)
    # acc_ref: (tm, Cout)  f32 accumulator scratch
    k = pl.program_id(1)
    nk = pl.num_programs(1)

    @pl.when(k == 0)
    def _init():
        acc_ref[...] = jnp.zeros_like(acc_ref)

    x = x_ref[...].astype(jnp.float32)
    # exact erf-based GELU, matching GELU(approximate='none'); dropout p=0 -> identity
    g = 0.5 * x * (1.0 + lax.erf(x * _SQRT_HALF))

    w = w_ref[...]
    if use_bf16_matmul:
        # bf16 MXU inputs, f32 accumulation (v6e/v7x fast path; looser accuracy).
        g = g.astype(jnp.bfloat16)
        w = w.astype(jnp.bfloat16)
    else:
        w = w.astype(jnp.float32)

    # (tm, tk) x (Cout, tk) -> (tm, Cout): contract dim 1 of both operands, so the
    # weight is consumed directly in its PyTorch layout (no wrapper-side transpose).
    acc_ref[...] += lax.dot_general(
        g, w,
        dimension_numbers=(((1,), (1,)), ((), ())),
        preferred_element_type=jnp.float32)

    @pl.when(k == nk - 1)
    def _finalize():
        out = acc_ref[...] + b_ref[...].astype(jnp.float32)
        # dropout p=0 -> identity
        o_ref[...] = out.astype(o_ref.dtype)


def gelu_dropout_linear_dropout(x, weight, bias, *, tm=128, tk=512,
                                use_bf16_matmul=False):
    """x: (B, H, W, Cin); weight: (Cout, Cin) PyTorch convention; bias: (Cout,)."""
    B, H, W, Cin = x.shape
    Cout = weight.shape[0]
    assert weight.shape == (Cout, Cin)
    assert Cin % tk == 0, (Cin, tk)
    M = B * H * W

    # Explicitly pad rows so every block is full (sublane-aligned, no masked stores)
    # and the M axis can be sharded across TensorCores on v7x.
    M_pad = ((M + tm - 1) // tm) * tm
    x2d = x.reshape(M, Cin)
    if M_pad != M:
        x2d = jnp.pad(x2d, ((0, M_pad - M), (0, 0)))
    b2d = bias.reshape(1, Cout)

    grid = (M_pad // tm, Cin // tk)  # reduction axis (K) last

    kernel = functools.partial(_gelu_linear_kernel,
                               use_bf16_matmul=use_bf16_matmul)

    cost = pl.CostEstimate(
        flops=2 * M_pad * Cin * Cout,
        transcendentals=M_pad * Cin,
        bytes_accessed=4 * (M_pad * Cin + Cout * Cin + Cout + M_pad * Cout),
    )

    out2d = pl.pallas_call(
        kernel,
        out_shape=jax.ShapeDtypeStruct((M_pad, Cout), x.dtype),
        grid_spec=pltpu.PrefetchScalarGridSpec(
            num_scalar_prefetch=0,
            grid=grid,
            in_specs=[
                pl.BlockSpec((tm, tk), lambda m, k: (m, k)),      # activations
                pl.BlockSpec((Cout, tk), lambda m, k: (0, k)),    # weight (streamed over K)
                pl.BlockSpec((1, Cout), lambda m, k: (0, 0)),     # bias
            ],
            out_specs=pl.BlockSpec((tm, Cout), lambda m, k: (m, 0)),
            scratch_shapes=[pltpu.VMEM((tm, Cout), jnp.float32)],
        ),
        compiler_params=pltpu.CompilerParams(
            dimension_semantics=("parallel", "arbitrary")),
        cost_estimate=cost,
    )(x2d, weight, b2d)

    return out2d[:M].reshape(B, H, W, Cout)


def _reference(x, weight, bias):
    g = 0.5 * x * (1.0 + lax.erf(x / jnp.sqrt(2.0)))
    return jnp.einsum("bhwc,oc->bhwo", g, weight) + bias


if __name__ == "__main__":
    key = jax.random.PRNGKey(0)
    kx, kw, kb = jax.random.split(key, 3)

    B, H, W, Cin, Cout = 1, 14, 14, 1536, 384

    x = jax.random.normal(kx, (B, H, W, Cin), dtype=jnp.float32)

    # Deterministic Linear init (PyTorch default: U(-1/sqrt(in), 1/sqrt(in)))
    bound = 1.0 / jnp.sqrt(jnp.float32(Cin))
    weight = jax.random.uniform(kw, (Cout, Cin), dtype=jnp.float32,
                                minval=-bound, maxval=bound)
    bias = jax.random.uniform(kb, (Cout,), dtype=jnp.float32,
                              minval=-bound, maxval=bound)

    out = gelu_dropout_linear_dropout(x, weight, bias)
    out = jax.block_until_ready(out)

    ref = _reference(x, weight, bias)
    assert out.shape == (B, H, W, Cout), out.shape
    assert jnp.allclose(out, ref, atol=1e-4, rtol=1e-4), \
        float(jnp.max(jnp.abs(out - ref)))

    print("KERNEL_OK")
</pallas_src>

<mosaic_0001>
module attributes {stable_mosaic.version = 11 : i64} {
  func.func @_gelu_linear_kernel(%arg0: i32, %arg1: i32, %arg2: memref<128x512xf32, #tpu.memory_space<vmem>>, %arg3: memref<384x512xf32, #tpu.memory_space<vmem>>, %arg4: memref<1x384xf32, #tpu.memory_space<vmem>>, %arg5: memref<128x384xf32, #tpu.memory_space<vmem>>, %arg6: memref<128x384xf32, #tpu.memory_space<vmem>>) attributes {dimension_semantics = [#tpu.dimension_semantics<parallel>, #tpu.dimension_semantics<arbitrary>], iteration_bounds = array<i64: 2, 3>, scalar_prefetch = 0 : i64, scratch_operands = 1 : i64, tpu.core_type = #tpu.core_type<tc>, window_params = [{transform_indices = @transform_0, window_bounds = array<i64: 128, 512>}, {transform_indices = @transform_1, window_bounds = array<i64: 384, 512>}, {pipeline_mode = #tpu.pipeline_mode<synchronous>, transform_indices = @transform_2, window_bounds = array<i64: 1, 384>}, {transform_indices = @transform_3, window_bounds = array<i64: 128, 384>}]} {
    %c0_i32 = arith.constant 0 : i32
    %0 = arith.cmpi eq, %arg1, %c0_i32 : i32
    %1 = arith.extui %0 : i1 to i32
    %c0_i32_0 = arith.constant 0 : i32
    %2 = arith.cmpi ne, %1, %c0_i32_0 : i32
    scf.if %2 {
      %cst_12 = arith.constant 0.000000e+00 : f32
      %20 = vector.broadcast %cst_12 : f32 to vector<128x384xf32>
      %c0_13 = arith.constant 0 : index
      %c0_14 = arith.constant 0 : index
      %21 = vector.load %arg6[%c0_13, %c0_14] : memref<128x384xf32, #tpu.memory_space<vmem>>, vector<128x384xf32>
      tpu.vector_store %arg6[%c0_13, %c0_14], %20 {strides = array<i32>} : memref<128x384xf32, #tpu.memory_space<vmem>>, vector<128x384xf32>,
    } else {
    }
    %c0 = arith.constant 0 : index
    %c0_1 = arith.constant 0 : index
    %3 = vector.load %arg2[%c0, %c0_1] : memref<128x512xf32, #tpu.memory_space<vmem>>, vector<128x512xf32>
    %cst = arith.constant 5.000000e-01 : f32
    %4 = vector.broadcast %cst : f32 to vector<128x512xf32>
    %5 = arith.mulf %4, %3 : vector<128x512xf32>
    %cst_2 = arith.constant 0.707106769 : f32
    %6 = vector.broadcast %cst_2 : f32 to vector<128x512xf32>
    %7 = arith.mulf %3, %6 : vector<128x512xf32>
    %8 = math.erf %7 : vector<128x512xf32>
    %cst_3 = arith.constant 1.000000e+00 : f32
    %9 = vector.broadcast %cst_3 : f32 to vector<128x512xf32>
    %10 = arith.addf %9, %8 : vector<128x512xf32>
    %11 = arith.mulf %5, %10 : vector<128x512xf32>
    %c0_4 = arith.constant 0 : index
    %c0_5 = arith.constant 0 : index
    %12 = vector.load %arg3[%c0_4, %c0_5] : memref<384x512xf32, #tpu.memory_space<vmem>>, vector<384x512xf32>
    %c0_6 = arith.constant 0 : index
    %c0_7 = arith.constant 0 : index
    %13 = vector.load %arg6[%c0_6, %c0_7] : memref<128x384xf32, #tpu.memory_space<vmem>>, vector<128x384xf32>
    %cst_8 = arith.constant dense<0.000000e+00> : vector<128x384xf32>
    %14 = tpu.matmul %11, %12, %cst_8 {dimension_numbers = #tpu.dot_dimension_numbers<[1], [1], [0], [0], [0, 0, 1, 0], [], []>} : vector<128x512xf32>, vector<384x512xf32>, vector<128x384xf32> -> vector<128x384xf32>
    %15 = arith.addf %13, %14 : vector<128x384xf32>
    %c0_9 = arith.constant 0 : index
    %c0_10 = arith.constant 0 : index
    %16 = vector.load %arg6[%c0_9, %c0_10] : memref<128x384xf32, #tpu.memory_space<vmem>>, vector<128x384xf32>
    tpu.vector_store %arg6[%c0_9, %c0_10], %15 {strides = array<i32>} : memref<128x384xf32, #tpu.memory_space<vmem>>, vector<128x384xf32>,
    %c2_i32 = arith.constant 2 : i32
    %17 = arith.cmpi eq, %arg1, %c2_i32 : i32
    %18 = arith.extui %17 : i1 to i32
    %c0_i32_11 = arith.constant 0 : i32
    %19 = arith.cmpi ne, %18, %c0_i32_11 : i32
    scf.if %19 {
      %c0_12 = arith.constant 0 : index
      %c0_13 = arith.constant 0 : index
      %20 = vector.load %arg6[%c0_12, %c0_13] : memref<128x384xf32, #tpu.memory_space<vmem>>, vector<128x384xf32>
      %c0_14 = arith.constant 0 : index
      %c0_15 = arith.constant 0 : index
      %21 = vector.load %arg4[%c0_14, %c0_15] : memref<1x384xf32, #tpu.memory_space<vmem>>, vector<1x384xf32>
      %22 = vector.broadcast %21 : vector<1x384xf32> to vector<128x384xf32>
      %23 = arith.addf %20, %22 : vector<128x384xf32>
      %c0_16 = arith.constant 0 : index
      %c0_17 = arith.constant 0 : index
      %24 = vector.load %arg5[%c0_16, %c0_17] : memref<128x384xf32, #tpu.memory_space<vmem>>, vector<128x384xf32>
      tpu.vector_store %arg5[%c0_16, %c0_17], %23 {strides = array<i32>} : memref<128x384xf32, #tpu.memory_space<vmem>>, vector<128x384xf32>,
    } else {
    }
    return
  }
  func.func @transform_0(%arg0: i32, %arg1: i32) -> (i32, i32) {
    %c0_i32 = arith.constant 0 : i32
    return %arg0, %arg1 : i32, i32
  }
  func.func @transform_1(%arg0: i32, %arg1: i32) -> (i32, i32) {
    %c0_i32 = arith.constant 0 : i32
    %c0_i32_0 = arith.constant 0 : i32
    return %c0_i32, %arg1 : i32, i32
  }
  func.func @transform_2(%arg0: i32, %arg1: i32) -> (i32, i32) {
    %c0_i32 = arith.constant 0 : i32
    %c0_i32_0 = arith.constant 0 : i32
    %c0_i32_1 = arith.constant 0 : i32
    return %c0_i32, %c0_i32_0 : i32, i32
  }
  func.func @transform_3(%arg0: i32, %arg1: i32) -> (i32, i32) {
    %c0_i32 = arith.constant 0 : i32
    %c0_i32_0 = arith.constant 0 : i32
    return %arg0, %c0_i32 : i32, i32
  }
}

</mosaic_0001>

<llo_original>
// kernel: tpu_custom_call.1
$region0: #{tpu_custom_call.1}
  #allocation0 [shape = 'u32[]', space=smem, size = 0x4, offset = 0x4, fixed_abs, tag = 'smem constant byte address 0x4 - core index']
  #allocation1 [shape = 'u32[72,128]{1,0:T(1,128)}', space=vmem, size = 0x9000, scoped, tag = 'internal scratch']
  #allocation2 [shape = 'f32[128,384]{1,0:T(8,128)}', space=vmem, size = 0x30000, scoped, tag = 'scratch operand']
  %s0 = inlined_call_operand.hbm [shape: f32[256,1536], index: 0, kind: input, shape index: {}]
  %s1 = inlined_call_operand.hbm [shape: f32[384,1536], index: 1, kind: input, shape index: {}]
  %s2 = inlined_call_operand.hbm [shape: f32[1,384], index: 2, kind: input, shape index: {}]
  %s3 = inlined_call_operand.hbm [shape: f32[256,384], index: 3, kind: output, shape index: {}]
  %s4 = sld [smem:[#allocation0]]
  $region65: #{tpu_custom_call.1} parent=0
    _
  %s6 = ssub.s32 1, %s4
  %s7 = scalar_select 0, %s6, %s4
  $region1: #{tpu_custom_call.1} parent=0
    #allocation3 [shape = 'u8[524288]{0}', space=vmem, size = 0x80000, scoped, tag = 'input window, operand 0']
    #allocation4 [shape = 's32[2]{0}', space=sflag, size = 0x8, scoped, tag = 'scoped memory for tpu_custom_call.1']
    #allocation5 [shape = 's32[2]{0}', space=sflag, size = 0x8, scoped, tag = 'scoped memory for tpu_custom_call.1']
    #allocation6 [shape = 'u8[1572864]{0}', space=vmem, size = 0x180000, scoped, tag = 'input window, operand 1']
    #allocation7 [shape = 's32[2]{0}', space=sflag, size = 0x8, scoped, tag = 'scoped memory for tpu_custom_call.1']
    #allocation8 [shape = 'u8[1536]{0}', space=vmem, size = 0x800, scoped, tag = 'input window, operand 2, single buffered']
    #allocation9 [shape = 'u8[393216]{0}', space=vmem, size = 0x60000, scoped, tag = 'output window, operand 0']
    %8 = vsyncpa [#allocation4], 0
    %s9 = scalar_lea.sflag [#allocation4], 1
    %10 = vsyncpa %s9, 0
    %11 = vsyncpa [#allocation7], 0
    %s12 = scalar_lea.sflag [#allocation7], 1
    %13 = vsyncpa %s12, 0
    %14 = vsyncpa [#allocation5], 0
    %s15 = scalar_lea.sflag [#allocation5], 1
    %16 = vsyncpa %s15, 0
    loop: start=0, step=1, limit=8
    $region2: #{tpu_custom_call.1} parent=1 // loop_pre_header
      _
    $region3: #{tpu_custom_call.1} parent=1 // loop_header
      %s18 = sphi 0, %s22
      %p19 = scmp.ge.s32.totalorder %s18, 8
      %s25 = sphi 0, %s37
      %s26 = sphi 0, %s33
      %s27 = sphi 0, %s25
      %s28 = sphi 0, %s26
      %s29 = sphi 0, %s27
      %s30 = sphi 0, %s28
      %s42 = sphi 0, %s44
      %s45 = sphi 0, %s42
      %s46 = sphi 0, %s45
      %s62 = sphi 0, %s46
      %s68 = sphi 0, %s70
      %s71 = sphi 0, %s68
      %s72 = sphi 0, %s71
      %s88 = sphi 0, %s72
      %s92 = sphi 0, %s92
      %s94 = sphi 0, %s92
      %s95 = sphi 0, %s94
      %s109 = sphi 0, %s95
      %s115 = sphi 0, %s117
      %s118 = sphi 0, %s115
      %s119 = sphi 0, %s118
      %s135 = sphi 0, %s119
    $region4: #{tpu_custom_call.1} parent=1 // loop_header_branch
      %21 = sbr.rel (%p19) target = $region8
    $region5: #{tpu_custom_call.1} parent=1 // loop_body
      %s23 = ssub.s32 %s18, 1
      %s24 = ssub.s32 %s18, 2
      %s31 = sadd.s32 1, %s26
      %p32 = scmp.ge.s32.totalorder %s31, 3
      %s33 = scalar_select %p32, 0, %s31
      %s34 = sadd.s32 1, %s25
      %s35 = scalar_select %p32, %s34, %s25
      %p36 = scmp.ge.s32.totalorder %s35, 2
      %s37 = scalar_select %p36, 0, %s35
      %s38 = ssub.s32 %s25, %s37
      %s39 = ssub.s32 %s26, %s33
      %s40 = sor.u32 %s38, %s39
      %p41 = scmp.eq.s32.totalorder %s40, 0
      %s43 = sadd.s32 %s42, 1
      %s44 = scalar_select %p41, %s42, %s43
      %p47 = pneg %p41
      %p48 = scmp.eq.s32.totalorder %s18, 5
      %p49 = por %p47, %p48
      %p50 = scmp.ne.s32.totalorder %s42, %s45
      %p51 = scmp.eq.s32.totalorder %s18, 0
      %p52 = por %p50, %p51
      %p53 = scmp.ne.s32.totalorder %s42, %s45
      %p54 = scmp.eq.s32.totalorder %s23, 5
      %p55 = por %p53, %p54
      %p56 = scmp.ne.s32.totalorder %s45, %s46
      %p57 = scmp.eq.s32.totalorder %s23, 0
      %p58 = por %p56, %p57
      %p59 = scmp.ne.s32.totalorder %s45, %s46
      %p60 = scmp.eq.s32.totalorder %s24, 5
      %p61 = por %p59, %p60
      %p63 = scmp.ne.s32.totalorder %s46, %s62
      %p64 = scmp.eq.s32.totalorder %s24, 0
      %p65 = por %p63, %p64
      %s66 = ssub.s32 %s26, %s33
      %p67 = scmp.eq.s32.totalorder %s66, 0
      %s69 = sadd.s32 %s68, 1
      %s70 = scalar_select %p67, %s68, %s69
      %p73 = pneg %p67
      %p74 = scmp.eq.s32.totalorder %s18, 5
      %p75 = por %p73, %p74
      %p76 = scmp.ne.s32.totalorder %s68, %s71
      %p77 = scmp.eq.s32.totalorder %s18, 0
      %p78 = por %p76, %p77
      %p79 = scmp.ne.s32.totalorder %s68, %s71
      %p80 = scmp.eq.s32.totalorder %s23, 5
      %p81 = por %p79, %p80
      %p82 = scmp.ne.s32.totalorder %s71, %s72
      %p83 = scmp.eq.s32.totalorder %s23, 0
      %p84 = por %p82, %p83
      %p85 = scmp.ne.s32.totalorder %s71, %s72
      %p86 = scmp.eq.s32.totalorder %s24, 5
      %p87 = por %p85, %p86
      %p89 = scmp.ne.s32.totalorder %s72, %s88
      %p90 = scmp.eq.s32.totalorder %s24, 0
      %p91 = por %p89, %p90
      %s93 = sadd.s32 %s92, 1
      %p96 = scmp.eq.s32.totalorder %s18, 5
      %p97 = scmp.ne.s32.totalorder %s92, %s94
      %p98 = scmp.eq.s32.totalorder %s18, 0
      %p99 = por %p97, %p98
      %p100 = scmp.ne.s32.totalorder %s92, %s94
      %p101 = scmp.eq.s32.totalorder %s23, 5
      %p102 = por %p100, %p101
      %p103 = scmp.ne.s32.totalorder %s94, %s95
      %p104 = scmp.eq.s32.totalorder %s23, 0
      %p105 = por %p103, %p104
      %p106 = scmp.ne.s32.totalorder %s94, %s95
      %p107 = scmp.eq.s32.totalorder %s24, 5
      %p108 = por %p106, %p107
      %p110 = scmp.ne.s32.totalorder %s95, %s109
      %p111 = scmp.eq.s32.totalorder %s24, 0
      %p112 = por %p110, %p111
      %s113 = ssub.s32 %s25, %s37
      %p114 = scmp.eq.s32.totalorder %s113, 0
      %s116 = sadd.s32 %s115, 1
      %s117 = scalar_select %p114, %s115, %s116
      %p120 = pneg %p114
      %p121 = scmp.eq.s32.totalorder %s18, 5
      %p122 = por %p120, %p121
      %p123 = scmp.ne.s32.totalorder %s115, %s118
      %p124 = scmp.eq.s32.totalorder %s18, 0
      %p125 = por %p123, %p124
      %p126 = scmp.ne.s32.totalorder %s115, %s118
      %p127 = scmp.eq.s32.totalorder %s23, 5
      %p128 = por %p126, %p127
      %p129 = scmp.ne.s32.totalorder %s118, %s119
      %p130 = scmp.eq.s32.totalorder %s23, 0
      %p131 = por %p129, %p130
      %p132 = scmp.ne.s32.totalorder %s118, %s119
      %p133 = scmp.eq.s32.totalorder %s24, 5
      %p134 = por %p132, %p133
      %p136 = scmp.ne.s32.totalorder %s119, %s135
      %p137 = scmp.eq.s32.totalorder %s24, 0
      %p138 = por %p136, %p137
      %p139 = scmp.le.s32.totalorder 1, %s18
      %p140 = scmp.lt.s32.totalorder %s18, 7
      %p141 = pnand %p139, %p140
      %p142 = pneg %p141
      // Predicated region
      $region9: #{tpu_custom_call.1} parent=5 // pred_check
        _
      $region10: #{tpu_custom_call.1} parent=5 // pred_check_branch
        %144 = sbr.rel (%p141) target = $region12
      $region11: #{tpu_custom_call.1} parent=5 // pred_region
        %s145 = ssub.s32 %s18, 1
        // Predicated region
        $region13: #{tpu_custom_call.1} parent=11 // pred_check
          %p146 = pneg %p105
        $region14: #{tpu_custom_call.1} parent=11 // pred_check_branch
          %148 = sbr.rel (%p146) target = $region16
        $region15: #{tpu_custom_call.1} parent=11 // pred_region
          %150 = vsyncadd [#allocation7], 0
          %s152 = sshll.u32 %s2, 4
          %s153 = int_to_ptr.hbm [resolvable:$true] %s152
          %s154 = sshll.u32 [#allocation8], 4
          %s155 = int_to_ptr.vmem [resolvable:$true] %s154
          %157 = dma.hbm_to_vmem [thread:$0]  %s153, 48, %s155, [#allocation7]
        $region16: #{tpu_custom_call.1} parent=11 // pred_fallthru
          _
      $region12: #{tpu_custom_call.1} parent=5 // pred_fallthru
        _
      %p158 = scmp.lt.s32.totalorder %s18, 6
      // Predicated region
      $region17: #{tpu_custom_call.1} parent=5 // pred_check
        %p159 = pneg %p158
      $region18: #{tpu_custom_call.1} parent=5 // pred_check_branch
        %161 = sbr.rel (%p159) target = $region20
      $region19: #{tpu_custom_call.1} parent=5 // pred_region
        // Predicated region
        $region21: #{tpu_custom_call.1} parent=19 // pred_check
          %p162 = pneg %p52
        $region22: #{tpu_custom_call.1} parent=19 // pred_check_branch
          %164 = sbr.rel (%p162) target = $region24
        $region23: #{tpu_custom_call.1} parent=19 // pred_region
          %s165 = sand.u32 %s42, 1
          %s166 = scalar_lea.sflag [#allocation4], %s165
          %s167 = sand.u32 %s42, 1
          %s168 = smul.addr %s167, 512
          %s169 = scalar_lea.vmem [#allocation3], %s168
          %s170 = smul.u32 16, %s25
          %s171 = smul.u32 4, %s26
          %173 = vsyncadd %s166, 0
          %s174 = smul.addr %s170, 12
          %s175 = sadd.s32 %s171, %s174
          %s176 = smul.addr %s175, 8
          %s177 = scalar_lea.hbm %s0, %s176
          %s178 = sshll.u32 %s177, 4
          %s179 = int_to_ptr.hbm [resolvable:$true] %s178
          %s180 = sshll.u32 %s169, 4
          %s181 = int_to_ptr.vmem [resolvable:$true] %s180
          %186 = dma.hbm_to_vmem [thread:$0]  %s179, 8192, %s181, %s166, 1536, 512, 32
        $region24: #{tpu_custom_call.1} parent=19 // pred_fallthru
          _
        // Predicated region
        $region25: #{tpu_custom_call.1} parent=19 // pred_check
          %p187 = pneg %p78
        $region26: #{tpu_custom_call.1} parent=19 // pred_check_branch
          %189 = sbr.rel (%p187) target = $region28
        $region27: #{tpu_custom_call.1} parent=19 // pred_region
          %s190 = sand.u32 %s18, 1
          %s191 = scalar_lea.sflag [#allocation7], %s190
          %s192 = sand.u32 %s68, 1
          %s193 = smul.addr %s192, 1536
          %s194 = scalar_lea.vmem [#allocation6], %s193
          %s195 = smul.u32 4, %s26
          %197 = vsyncadd %s191, 0
          %s198 = smul.addr %s195, 8
          %s199 = scalar_lea.hbm %s1, %s198
          %s200 = sshll.u32 %s199, 4
          %s201 = int_to_ptr.hbm [resolvable:$true] %s200
          %s202 = sshll.u32 %s194, 4
          %s203 = int_to_ptr.vmem [resolvable:$true] %s202
          %208 = dma.hbm_to_vmem [thread:$0]  %s201, 24576, %s203, %s191, 1536, 512, 32
        $region28: #{tpu_custom_call.1} parent=19 // pred_fallthru
          _
      $region20: #{tpu_custom_call.1} parent=5 // pred_fallthru
        _
      %p209 = scmp.le.s32.totalorder 1, %s18
      %p210 = scmp.lt.s32.totalorder %s18, 7
      %p211 = pnand %p209, %p210
      %p212 = pneg %p211
      // Predicated region
      $region29: #{tpu_custom_call.1} parent=5 // pred_check
        _
      $region30: #{tpu_custom_call.1} parent=5 // pred_check_branch
        %214 = sbr.rel (%p211) target = $region32
      $region31: #{tpu_custom_call.1} parent=5 // pred_region
        %s215 = ssub.s32 %s18, 1
        %s216 = sand.u32 %s45, 1
        %s217 = scalar_lea.sflag [#allocation4], %s216
        %s218 = sand.u32 %s45, 1
        %s219 = smul.addr %s218, 512
        %s220 = scalar_lea.vmem [#allocation3], %s219
        // Predicated region
        $region33: #{tpu_custom_call.1} parent=31 // pred_check
          %p221 = pneg %p58
        $region34: #{tpu_custom_call.1} parent=31 // pred_check_branch
          %223 = sbr.rel (%p221) target = $region36
        $region35: #{tpu_custom_call.1} parent=31 // pred_region
          %225 = dma.done %s217, 8192
        $region36: #{tpu_custom_call.1} parent=31 // pred_fallthru
          _
        %s226 = sand.u32 %s23, 1
        %s227 = scalar_lea.sflag [#allocation7], %s226
        %s228 = sand.u32 %s71, 1
        %s229 = smul.addr %s228, 1536
        %s230 = scalar_lea.vmem [#allocation6], %s229
        // Predicated region
        $region37: #{tpu_custom_call.1} parent=31 // pred_check
          %p231 = pneg %p84
        $region38: #{tpu_custom_call.1} parent=31 // pred_check_branch
          %233 = sbr.rel (%p231) target = $region40
        $region39: #{tpu_custom_call.1} parent=31 // pred_region
          %235 = dma.done %s227, 24576
        $region40: #{tpu_custom_call.1} parent=31 // pred_fallthru
          _
        // Predicated region
        $region41: #{tpu_custom_call.1} parent=31 // pred_check
          %p236 = pneg %p105
        $region42: #{tpu_custom_call.1} parent=31 // pred_check_branch
          %238 = sbr.rel (%p236) target = $region44
        $region43: #{tpu_custom_call.1} parent=31 // pred_region
          %240 = dma.done [#allocation7], 48
        $region44: #{tpu_custom_call.1} parent=31 // pred_fallthru
          _
        %s241 = sand.u32 %s45, 1
        %s242 = scalar_lea.sflag [#allocation4], %s241
        %s243 = sand.u32 %s45, 1
        %s244 = smul.addr %s243, 512
        %s245 = scalar_lea.vmem [#allocation3], %s244
        %p246 = pneg %p58
        %p247 = pneg %p55
        %s248 = sand.u32 %s23, 1
        %s249 = scalar_lea.sflag [#allocation7], %s248
        %s250 = sand.u32 %s71, 1
        %s251 = smul.addr %s250, 1536
        %s252 = scalar_lea.vmem [#allocation6], %s251
        %p253 = pneg %p84
        %p254 = pneg %p81
        %p255 = pneg %p105
        %p256 = pneg %p102
        %p257 = pneg %p131
        %p258 = pneg %p128
        %s259 = sand.u32 %s118, 1
        %s260 = scalar_lea.sflag [#allocation5], %s259
        %s261 = sand.u32 %s118, 1
        %s262 = smul.addr %s261, 384
        %s263 = scalar_lea.vmem [#allocation9], %s262
        %s264 = smul.u32 16, %s27
        %s265 = smul.u32 4, %s28
        %s266 = smul.u32 4, %s28
        %s267 = smul.u32 16, %s27
        %p268 = scmp.eq.s32.totalorder %s28, 0
        // Predicated region
        $region45: #{tpu_custom_call.1} parent=31 // pred_check
          %p269 = pneg %p268
        $region46: #{tpu_custom_call.1} parent=31 // pred_check_branch
          %271 = sbr.rel (%p269) target = $region48
        $region47: #{tpu_custom_call.1} parent=31 // pred_region
          %272 = vst [vmem:[#allocation2] sm:$0xff] 0.0
          %273 = vst [vmem:[#allocation2 + $0x8] sm:$0xff] 0.0
          %274 = vst [vmem:[#allocation2 + $0x10] sm:$0xff] 0.0
          %275 = vst [vmem:[#allocation2 + $0x18] sm:$0xff] 0.0
          %276 = vst [vmem:[#allocation2 + $0x20] sm:$0xff] 0.0
          %277 = vst [vmem:[#allocation2 + $0x28] sm:$0xff] 0.0
          %278 = vst [vmem:[#allocation2 + $0x30] sm:$0xff] 0.0
          %279 = vst [vmem:[#allocation2 + $0x38] sm:$0xff] 0.0
          %280 = vst [vmem:[#allocation2 + $0x40] sm:$0xff] 0.0
          %281 = vst [vmem:[#allocation2 + $0x48] sm:$0xff] 0.0
          %282 = vst [vmem:[#allocation2 + $0x50] sm:$0xff] 0.0
          %283 = vst [vmem:[#allocation2 + $0x58] sm:$0xff] 0.0
          %284 = vst [vmem:[#allocation2 + $0x60] sm:$0xff] 0.0
          %285 = vst [vmem:[#allocation2 + $0x68] sm:$0xff] 0.0
          %286 = vst [vmem:[#allocation2 + $0x70] sm:$0xff] 0.0
          %287 = vst [vmem:[#allocation2 + $0x78] sm:$0xff] 0.0
          %288 = vst [vmem:[#allocation2 + $0x80] sm:$0xff] 0.0
          %289 = vst [vmem:[#allocation2 + $0x88] sm:$0xff] 0.0
          %290 = vst [vmem:[#allocation2 + $0x90] sm:$0xff] 0.0
          %291 = vst [vmem:[#allocation2 + $0x98] sm:$0xff] 0.0
          %292 = vst [vmem:[#allocation2 + $0xa0] sm:$0xff] 0.0
          %293 = vst [vmem:[#allocation2 + $0xa8] sm:$0xff] 0.0
          %294 = vst [vmem:[#allocation2 + $0xb0] sm:$0xff] 0.0
          %295 = vst [vmem:[#allocation2 + $0xb8] sm:$0xff] 0.0
          %296 = vst [vmem:[#allocation2 + $0xc0] sm:$0xff] 0.0
          %297 = vst [vmem:[#allocation2 + $0xc8] sm:$0xff] 0.0
          %298 = vst [vmem:[#allocation2 + $0xd0] sm:$0xff] 0.0
          %299 = vst [vmem:[#allocation2 + $0xd8] sm:$0xff] 0.0
          %300 = vst [vmem:[#allocation2 + $0xe0] sm:$0xff] 0.0
          %301 = vst [vmem:[#allocation2 + $0xe8] sm:$0xff] 0.0
          %302 = vst [vmem:[#allocation2 + $0xf0] sm:$0xff] 0.0
          %303 = vst [vmem:[#allocation2 + $0xf8] sm:$0xff] 0.0
          %304 = vst [vmem:[#allocation2 + $0x100] sm:$0xff] 0.0
          %305 = vst [vmem:[#allocation2 + $0x108] sm:$0xff] 0.0
          %306 = vst [vmem:[#allocation2 + $0x110] sm:$0xff] 0.0
          %307 = vst [vmem:[#allocation2 + $0x118] sm:$0xff] 0.0
          %308 = vst [vmem:[#allocation2 + $0x120] sm:$0xff] 0.0
          %309 = vst [vmem:[#allocation2 + $0x128] sm:$0xff] 0.0
          %310 = vst [vmem:[#allocation2 + $0x130] sm:$0xff] 0.0
          %311 = vst [vmem:[#allocation2 + $0x138] sm:$0xff] 0.0
          %312 = vst [vmem:[#allocation2 + $0x140] sm:$0xff] 0.0
          %313 = vst [vmem:[#allocation2 + $0x148] sm:$0xff] 0.0
          %314 = vst [vmem:[#allocation2 + $0x150] sm:$0xff] 0.0
          %315 = vst [vmem:[#allocation2 + $0x158] sm:$0xff] 0.0
          %316 = vst [vmem:[#allocation2 + $0x160] sm:$0xff] 0.0
          %317 = vst [vmem:[#allocation2 + $0x168] sm:$0xff] 0.0
          %318 = vst [vmem:[#allocation2 + $0x170] sm:$0xff] 0.0
          %319 = vst [vmem:[#allocation2 + $0x178] sm:$0xff] 0.0
        $region48: #{tpu_custom_call.1} parent=31 // pred_fallthru
          _
        %v320 = vld [vmem:[%s220] sm:$0xff]
        %v321 = vld [vmem:[%s220 + $0x8] sm:$0xff]
        %v322 = vld [vmem:[%s220 + $0x10] sm:$0xff]
        %v323 = vld [vmem:[%s220 + $0x18] sm:$0xff]
        %v324 = vld [vmem:[%s220 + $0x20] sm:$0xff]
        %v325 = vld [vmem:[%s220 + $0x28] sm:$0xff]
        %v326 = vld [vmem:[%s220 + $0x30] sm:$0xff]
        %v327 = vld [vmem:[%s220 + $0x38] sm:$0xff]
        %v328 = vld [vmem:[%s220 + $0x40] sm:$0xff]
        %v329 = vld [vmem:[%s220 + $0x48] sm:$0xff]
        %v330 = vld [vmem:[%s220 + $0x50] sm:$0xff]
        %v331 = vld [vmem:[%s220 + $0x58] sm:$0xff]
        %v332 = vld [vmem:[%s220 + $0x60] sm:$0xff]
        %v333 = vld [vmem:[%s220 + $0x68] sm:$0xff]
        %v334 = vld [vmem:[%s220 + $0x70] sm:$0xff]
        %v335 = vld [vmem:[%s220 + $0x78] sm:$0xff]
        %v336 = vld [vmem:[%s220 + $0x80] sm:$0xff]
        %v337 = vld [vmem:[%s220 + $0x88] sm:$0xff]
        %v338 = vld [vmem:[%s220 + $0x90] sm:$0xff]
        %v339 = vld [vmem:[%s220 + $0x98] sm:$0xff]
        %v340 = vld [vmem:[%s220 + $0xa0] sm:$0xff]
        %v341 = vld [vmem:[%s220 + $0xa8] sm:$0xff]
        %v342 = vld [vmem:[%s220 + $0xb0] sm:$0xff]
        %v343 = vld [vmem:[%s220 + $0xb8] sm:$0xff]
        %v344 = vld [vmem:[%s220 + $0xc0] sm:$0xff]
        %v345 = vld [vmem:[%s220 + $0xc8] sm:$0xff]
        %v346 = vld [vmem:[%s220 + $0xd0] sm:$0xff]
        %v347 = vld [vmem:[%s220 + $0xd8] sm:$0xff]
        %v348 = vld [vmem:[%s220 + $0xe0] sm:$0xff]
        %v349 = vld [vmem:[%s220 + $0xe8] sm:$0xff]
        %v350 = vld [vmem:[%s220 + $0xf0] sm:$0xff]
        %v351 = vld [vmem:[%s220 + $0xf8] sm:$0xff]
        %v352 = vld [vmem:[%s220 + $0x100] sm:$0xff]
        %v353 = vld [vmem:[%s220 + $0x108] sm:$0xff]
        %v354 = vld [vmem:[%s220 + $0x110] sm:$0xff]
        %v355 = vld [vmem:[%s220 + $0x118] sm:$0xff]
        %v356 = vld [vmem:[%s220 + $0x120] sm:$0xff]
        %v357 = vld [vmem:[%s220 + $0x128] sm:$0xff]
        %v358 = vld [vmem:[%s220 + $0x130] sm:$0xff]
        %v359 = vld [vmem:[%s220 + $0x138] sm:$0xff]
        %v360 = vld [vmem:[%s220 + $0x140] sm:$0xff]
        %v361 = vld [vmem:[%s220 + $0x148] sm:$0xff]
        %v362 = vld [vmem:[%s220 + $0x150] sm:$0xff]
        %v363 = vld [vmem:[%s220 + $0x158] sm:$0xff]
        %v364 = vld [vmem:[%s220 + $0x160] sm:$0xff]
        %v365 = vld [vmem:[%s220 + $0x168] sm:$0xff]
        %v366 = vld [vmem:[%s220 + $0x170] sm:$0xff]
        %v367 = vld [vmem:[%s220 + $0x178] sm:$0xff]
        %v368 = vld [vmem:[%s220 + $0x180] sm:$0xff]
        %v369 = vld [vmem:[%s220 + $0x188] sm:$0xff]
        %v370 = vld [vmem:[%s220 + $0x190] sm:$0xff]
        %v371 = vld [vmem:[%s220 + $0x198] sm:$0xff]
        %v372 = vld [vmem:[%s220 + $0x1a0] sm:$0xff]
        %v373 = vld [vmem:[%s220 + $0x1a8] sm:$0xff]
        %v374 = vld [vmem:[%s220 + $0x1b0] sm:$0xff]
        %v375 = vld [vmem:[%s220 + $0x1b8] sm:$0xff]
        %v376 = vld [vmem:[%s220 + $0x1c0] sm:$0xff]
        %v377 = vld [vmem:[%s220 + $0x1c8] sm:$0xff]
        %v378 = vld [vmem:[%s220 + $0x1d0] sm:$0xff]
        %v379 = vld [vmem:[%s220 + $0x1d8] sm:$0xff]
        %v380 = vld [vmem:[%s220 + $0x1e0] sm:$0xff]
        %v381 = vld [vmem:[%s220 + $0x1e8] sm:$0xff]
        %v382 = vld [vmem:[%s220 + $0x1f0] sm:$0xff]
        %v383 = vld [vmem:[%s220 + $0x1f8] sm:$0xff]
        %v384 = vmul.f32 %v320, 0.5
        %v385 = vmul.f32 %v321, 0.5
        %v386 = vmul.f32 %v322, 0.5
        %v387 = vmul.f32 %v323, 0.5
        %v388 = vmul.f32 %v324, 0.5
        %v389 = vmul.f32 %v325, 0.5
        %v390 = vmul.f32 %v326, 0.5
        %v391 = vmul.f32 %v327, 0.5
        %v392 = vmul.f32 %v328, 0.5
        %v393 = vmul.f32 %v329, 0.5
        %v394 = vmul.f32 %v330, 0.5
        %v395 = vmul.f32 %v331, 0.5
        %v396 = vmul.f32 %v332, 0.5
        %v397 = vmul.f32 %v333, 0.5
        %v398 = vmul.f32 %v334, 0.5
        %v399 = vmul.f32 %v335, 0.5
        %v400 = vmul.f32 %v336, 0.5
        %v401 = vmul.f32 %v337, 0.5
        %v402 = vmul.f32 %v338, 0.5
        %v403 = vmul.f32 %v339, 0.5
        %v404 = vmul.f32 %v340, 0.5
        %v405 = vmul.f32 %v341, 0.5
        %v406 = vmul.f32 %v342, 0.5
        %v407 = vmul.f32 %v343, 0.5
        %v408 = vmul.f32 %v344, 0.5
        %v409 = vmul.f32 %v345, 0.5
        %v410 = vmul.f32 %v346, 0.5
        %v411 = vmul.f32 %v347, 0.5
        %v412 = vmul.f32 %v348, 0.5
        %v413 = vmul.f32 %v349, 0.5
        %v414 = vmul.f32 %v350, 0.5
        %v415 = vmul.f32 %v351, 0.5
        %v416 = vmul.f32 %v352, 0.5
        %v417 = vmul.f32 %v353, 0.5
        %v418 = vmul.f32 %v354, 0.5
        %v419 = vmul.f32 %v355, 0.5
        %v420 = vmul.f32 %v356, 0.5
        %v421 = vmul.f32 %v357, 0.5
        %v422 = vmul.f32 %v358, 0.5
        %v423 = vmul.f32 %v359, 0.5
        %v424 = vmul.f32 %v360, 0.5
        %v425 = vmul.f32 %v361, 0.5
        %v426 = vmul.f32 %v362, 0.5
        %v427 = vmul.f32 %v363, 0.5
        %v428 = vmul.f32 %v364, 0.5
        %v429 = vmul.f32 %v365, 0.5
        %v430 = vmul.f32 %v366, 0.5
        %v431 = vmul.f32 %v367, 0.5
        %v432 = vmul.f32 %v368, 0.5
        %v433 = vmul.f32 %v369, 0.5
        %v434 = vmul.f32 %v370, 0.5
        %v435 = vmul.f32 %v371, 0.5
        %v436 = vmul.f32 %v372, 0.5
        %v437 = vmul.f32 %v373, 0.5
        %v438 = vmul.f32 %v374, 0.5
        %v439 = vmul.f32 %v375, 0.5
        %v440 = vmul.f32 %v376, 0.5
        %v441 = vmul.f32 %v377, 0.5
        %v442 = vmul.f32 %v378, 0.5
        %v443 = vmul.f32 %v379, 0.5
        %v444 = vmul.f32 %v380, 0.5
        %v445 = vmul.f32 %v381, 0.5
        %v446 = vmul.f32 %v382, 0.5
        %v447 = vmul.f32 %v383, 0.5
        %v448 = vmul.f32 %v320, 0.70710677
        %v449 = vmul.f32 %v321, 0.70710677
        %v450 = vmul.f32 %v322, 0.70710677
        %v451 = vmul.f32 %v323, 0.70710677
        %v452 = vmul.f32 %v324, 0.70710677
        %v453 = vmul.f32 %v325, 0.70710677
        %v454 = vmul.f32 %v326, 0.70710677
        %v455 = vmul.f32 %v327, 0.70710677
        %v456 = vmul.f32 %v328, 0.70710677
        %v457 = vmul.f32 %v329, 0.70710677
        %v458 = vmul.f32 %v330, 0.70710677
        %v459 = vmul.f32 %v331, 0.70710677
        %v460 = vmul.f32 %v332, 0.70710677
        %v461 = vmul.f32 %v333, 0.70710677
        %v462 = vmul.f32 %v334, 0.70710677
        %v463 = vmul.f32 %v335, 0.70710677
        %v464 = vmul.f32 %v336, 0.70710677
        %v465 = vmul.f32 %v337, 0.70710677
        %v466 = vmul.f32 %v338, 0.70710677
        %v467 = vmul.f32 %v339, 0.70710677
        %v468 = vmul.f32 %v340, 0.70710677
        %v469 = vmul.f32 %v341, 0.70710677
        %v470 = vmul.f32 %v342, 0.70710677
        %v471 = vmul.f32 %v343, 0.70710677
        %v472 = vmul.f32 %v344, 0.70710677
        %v473 = vmul.f32 %v345, 0.70710677
        %v474 = vmul.f32 %v346, 0.70710677
        %v475 = vmul.f32 %v347, 0.70710677
        %v476 = vmul.f32 %v348, 0.70710677
        %v477 = vmul.f32 %v349, 0.70710677
        %v478 = vmul.f32 %v350, 0.70710677
        %v479 = vmul.f32 %v351, 0.70710677
        %v480 = vmul.f32 %v352, 0.70710677
        %v481 = vmul.f32 %v353, 0.70710677
        %v482 = vmul.f32 %v354, 0.70710677
        %v483 = vmul.f32 %v355, 0.70710677
        %v484 = vmul.f32 %v356, 0.70710677
        %v485 = vmul.f32 %v357, 0.70710677
        %v486 = vmul.f32 %v358, 0.70710677
        %v487 = vmul.f32 %v359, 0.70710677
        %v488 = vmul.f32 %v360, 0.70710677
        %v489 = vmul.f32 %v361, 0.70710677
        %v490 = vmul.f32 %v362, 0.70710677
        %v491 = vmul.f32 %v363, 0.70710677
        %v492 = vmul.f32 %v364, 0.70710677
        %v493 = vmul.f32 %v365, 0.70710677
        %v494 = vmul.f32 %v366, 0.70710677
        %v495 = vmul.f32 %v367, 0.70710677
        %v496 = vmul.f32 %v368, 0.70710677
        %v497 = vmul.f32 %v369, 0.70710677
        %v498 = vmul.f32 %v370, 0.70710677
        %v499 = vmul.f32 %v371, 0.70710677
        %v500 = vmul.f32 %v372, 0.70710677
        %v501 = vmul.f32 %v373, 0.70710677
        %v502 = vmul.f32 %v374, 0.70710677
        %v503 = vmul.f32 %v375, 0.70710677
        %v504 = vmul.f32 %v376, 0.70710677
        %v505 = vmul.f32 %v377, 0.70710677
        %v506 = vmul.f32 %v378, 0.70710677
        %v507 = vmul.f32 %v379, 0.70710677
        %v508 = vmul.f32 %v380, 0.70710677
        %v509 = vmul.f32 %v381, 0.70710677
        %v510 = vmul.f32 %v382, 0.70710677
        %v511 = vmul.f32 %v383, 0.70710677
        %v512 = vmul.f32 %v448, %v448
        %v513 = vmin.f32 16.0, %v512
        %v514 = vmul.f32 %v513, 2.1237322e-06
        %v515 = vadd.f32 %v514, 0.00028619796
        %v516 = vmul.f32 %v513, %v515
        %v517 = vadd.f32 %v516, 0.0036580483
        %v518 = vmul.f32 %v513, %v517
        %v519 = vadd.f32 %v518, 0.05243302
        %v520 = vmul.f32 %v513, %v519
        %v521 = vadd.f32 %v520, 0.18741608
        %v522 = vmul.f32 %v513, %v521
        %v523 = vadd.f32 %v522, 1.1283791
        %v524 = vmul.f32 %v448, %v523
        %v525 = vmul.f32 %v513, 3.8918573e-05
        %v526 = vadd.f32 %v525, 0.001143296
        %v527 = vmul.f32 %v513, %v526
        %v528 = vadd.f32 %v527, 0.014752088
        %v529 = vmul.f32 %v513, %v528
        %v530 = vadd.f32 %v529, 0.112945676
        %v531 = vmul.f32 %v513, %v530
        %v532 = vadd.f32 %v531, 0.4994258
        %v533 = vmul.f32 %v513, %v532
        %v534 = vadd.f32 %v533, 1.0
        %v535 = vrcp.pop %v534
        %v536 = vmul.f32 %v534, %v535
        %v537 = vsub.f32 1.0, %v536
        %v538 = vmul.f32 %v535, %v537
        %v539 = vadd.f32 %v535, %v538
        %vm540 = vweird.f32 %v534
        %vm541 = vweird.f32 %v535
        %vm542 = vmor %vm540, %vm541
        %v543 = vsel %vm542, %v535, %v539
        %v544 = vand.u32 2147483647, %v534
        %vm545 = vcmp.eq.f32.partialorder %v544, 8.507059e+37
        %v546 = vand.u32 %v534, 2147483648
        %v547 = vor.u32 1.1754944e-38, %v546
        %v548 = vsel %vm545, %v547, %v543
        %v549 = vmul.f32 %v524, %v548
        %v550 = vmin.f32 %v549, 1.0
        %v551 = vmax.f32 %v550, -1.0
        %v552 = vmul.f32 %v449, %v449
        %v553 = vmin.f32 16.0, %v552
        %v554 = vmul.f32 %v553, 2.1237322e-06
        %v555 = vadd.f32 %v554, 0.00028619796
        %v556 = vmul.f32 %v553, %v555
        %v557 = vadd.f32 %v556, 0.0036580483
        %v558 = vmul.f32 %v553, %v557
        %v559 = vadd.f32 %v558, 0.05243302
        %v560 = vmul.f32 %v553, %v559
        %v561 = vadd.f32 %v560, 0.18741608
        %v562 = vmul.f32 %v553, %v561
        %v563 = vadd.f32 %v562, 1.1283791
        %v564 = vmul.f32 %v449, %v563
        %v565 = vmul.f32 %v553, 3.8918573e-05
        %v566 = vadd.f32 %v565, 0.001143296
        %v567 = vmul.f32 %v553, %v566
        %v568 = vadd.f32 %v567, 0.014752088
        %v569 = vmul.f32 %v553, %v568
        %v570 = vadd.f32 %v569, 0.112945676
        %v571 = vmul.f32 %v553, %v570
        %v572 = vadd.f32 %v571, 0.4994258
        %v573 = vmul.f32 %v553, %v572
        %v574 = vadd.f32 %v573, 1.0
        %v575 = vrcp.pop %v574
        %v576 = vmul.f32 %v574, %v575
        %v577 = vsub.f32 1.0, %v576
        %v578 = vmul.f32 %v575, %v577
        %v579 = vadd.f32 %v575, %v578
        %vm580 = vweird.f32 %v574
        %vm581 = vweird.f32 %v575
        %vm582 = vmor %vm580, %vm581
        %v583 = vsel %vm582, %v575, %v579
        %v584 = vand.u32 2147483647, %v574
        %vm585 = vcmp.eq.f32.partialorder %v584, 8.507059e+37
        %v586 = vand.u32 %v574, 2147483648
        %v587 = vor.u32 1.1754944e-38, %v586
        %v588 = vsel %vm585, %v587, %v583
        %v589 = vmul.f32 %v564, %v588
        %v590 = vmin.f32 %v589, 1.0
        %v591 = vmax.f32 %v590, -1.0
        %v592 = vmul.f32 %v450, %v450
        %v593 = vmin.f32 16.0, %v592
        %v594 = vmul.f32 %v593, 2.1237322e-06
        %v595 = vadd.f32 %v594, 0.00028619796
        %v596 = vmul.f32 %v593, %v595
        %v597 = vadd.f32 %v596, 0.0036580483
        %v598 = vmul.f32 %v593, %v597
        %v599 = vadd.f32 %v598, 0.05243302
        %v600 = vmul.f32 %v593, %v599
        %v601 = vadd.f32 %v600, 0.18741608
        %v602 = vmul.f32 %v593, %v601
        %v603 = vadd.f32 %v602, 1.1283791
        %v604 = vmul.f32 %v450, %v603
        %v605 = vmul.f32 %v593, 3.8918573e-05
        %v606 = vadd.f32 %v605, 0.001143296
        %v607 = vmul.f32 %v593, %v606
        %v608 = vadd.f32 %v607, 0.014752088
        %v609 = vmul.f32 %v593, %v608
        %v610 = vadd.f32 %v609, 0.112945676
        %v611 = vmul.f32 %v593, %v610
        %v612 = vadd.f32 %v611, 0.4994258
        %v613 = vmul.f32 %v593, %v612
        %v614 = vadd.f32 %v613, 1.0
        %v615 = vrcp.pop %v614
        %v616 = vmul.f32 %v614, %v615
        %v617 = vsub.f32 1.0, %v616
        %v618 = vmul.f32 %v615, %v617
        %v619 = vadd.f32 %v615, %v618
        %vm620 = vweird.f32 %v614
        %vm621 = vweird.f32 %v615
        %vm622 = vmor %vm620, %vm621
        %v623 = vsel %vm622, %v615, %v619
        %v624 = vand.u32 2147483647, %v614
        %vm625 = vcmp.eq.f32.partialorder %v624, 8.507059e+37
        %v626 = vand.u32 %v614, 2147483648
        %v627 = vor.u32 1.1754944e-38, %v626
        %v628 = vsel %vm625, %v627, %v623
        %v629 = vmul.f32 %v604, %v628
        %v630 = vmin.f32 %v629, 1.0
        %v631 = vmax.f32 %v630, -1.0
        %v632 = vmul.f32 %v451, %v451
        %v633 = vmin.f32 16.0, %v632
        %v634 = vmul.f32 %v633, 2.1237322e-06
        %v635 = vadd.f32 %v634, 0.00028619796
        %v636 = vmul.f32 %v633, %v635
        %v637 = vadd.f32 %v636, 0.0036580483
        %v638 = vmul.f32 %v633, %v637
        %v639 = vadd.f32 %v638, 0.05243302
        %v640 = vmul.f32 %v633, %v639
        %v641 = vadd.f32 %v640, 0.18741608
        %v642 = vmul.f32 %v633, %v641
        %v643 = vadd.f32 %v642, 1.1283791
        %v644 = vmul.f32 %v451, %v643
        %v645 = vmul.f32 %v633, 3.8918573e-05
        %v646 = vadd.f32 %v645, 0.001143296
        %v647 = vmul.f32 %v633, %v646
        %v648 = vadd.f32 %v647, 0.014752088
        %v649 = vmul.f32 %v633, %v648
        %v650 = vadd.f32 %v649, 0.112945676
        %v651 = vmul.f32 %v633, %v650
        %v652 = vadd.f32 %v651, 0.4994258
        %v653 = vmul.f32 %v633, %v652
        %v654 = vadd.f32 %v653, 1.0
        %v655 = vrcp.pop %v654
        %v656 = vmul.f32 %v654, %v655
        %v657 = vsub.f32 1.0, %v656
        %v658 = vmul.f32 %v655, %v657
        %v659 = vadd.f32 %v655, %v658
        %vm660 = vweird.f32 %v654
        %vm661 = vweird.f32 %v655
        %vm662 = vmor %vm660, %vm661
        %v663 = vsel %vm662, %v655, %v659
        %v664 = vand.u32 2147483647, %v654
        %vm665 = vcmp.eq.f32.partialorder %v664, 8.507059e+37
        %v666 = vand.u32 %v654, 2147483648
        %v667 = vor.u32 1.1754944e-38, %v666
        %v668 = vsel %vm665, %v667, %v663
        %v669 = vmul.f32 %v644, %v668
        %v670 = vmin.f32 %v669, 1.0
        %v671 = vmax.f32 %v670, -1.0
        %v672 = vmul.f32 %v452, %v452
        %v673 = vmin.f32 16.0, %v672
        %v674 = vmul.f32 %v673, 2.1237322e-06
        %v675 = vadd.f32 %v674, 0.00028619796
        %v676 = vmul.f32 %v673, %v675
        %v677 = vadd.f32 %v676, 0.0036580483
        %v678 = vmul.f32 %v673, %v677
        %v679 = vadd.f32 %v678, 0.05243302
        %v680 = vmul.f32 %v673, %v679
        %v681 = vadd.f32 %v680, 0.18741608
        %v682 = vmul.f32 %v673, %v681
        %v683 = vadd.f32 %v682, 1.1283791
        %v684 = vmul.f32 %v452, %v683
        %v685 = vmul.f32 %v673, 3.8918573e-05
        %v686 = vadd.f32 %v685, 0.001143296
        %v687 = vmul.f32 %v673, %v686
        %v688 = vadd.f32 %v687, 0.014752088
        %v689 = vmul.f32 %v673, %v688
        %v690 = vadd.f32 %v689, 0.112945676
        %v691 = vmul.f32 %v673, %v690
        %v692 = vadd.f32 %v691, 0.4994258
        %v693 = vmul.f32 %v673, %v692
        %v694 = vadd.f32 %v693, 1.0
        %v695 = vrcp.pop %v694
        %v696 = vmul.f32 %v694, %v695
        %v697 = vsub.f32 1.0, %v696
        %v698 = vmul.f32 %v695, %v697
        %v699 = vadd.f32 %v695, %v698
        %vm700 = vweird.f32 %v694
        %vm701 = vweird.f32 %v695
        %vm702 = vmor %vm700, %vm701
        %v703 = vsel %vm702, %v695, %v699
        %v704 = vand.u32 2147483647, %v694
        %vm705 = vcmp.eq.f32.partialorder %v704, 8.507059e+37
        %v706 = vand.u32 %v694, 2147483648
        %v707 = vor.u32 1.1754944e-38, %v706
        %v708 = vsel %vm705, %v707, %v703
        %v709 = vmul.f32 %v684, %v708
        %v710 = vmin.f32 %v709, 1.0
        %v711 = vmax.f32 %v710, -1.0
        %v712 = vmul.f32 %v453, %v453
        %v713 = vmin.f32 16.0, %v712
        %v714 = vmul.f32 %v713, 2.1237322e-06
        %v715 = vadd.f32 %v714, 0.00028619796
        %v716 = vmul.f32 %v713, %v715
        %v717 = vadd.f32 %v716, 0.0036580483
        %v718 = vmul.f32 %v713, %v717
        %v719 = vadd.f32 %v718, 0.05243302
        %v720 = vmul.f32 %v713, %v719
        %v721 = vadd.f32 %v720, 0.18741608
        %v722 = vmul.f32 %v713, %v721
        %v723 = vadd.f32 %v722, 1.1283791
        %v724 = vmul.f32 %v453, %v723
        %v725 = vmul.f32 %v713, 3.8918573e-05
        %v726 = vadd.f32 %v725, 0.001143296
        %v727 = vmul.f32 %v713, %v726
        %v728 = vadd.f32 %v727, 0.014752088
        %v729 = vmul.f32 %v713, %v728
        %v730 = vadd.f32 %v729, 0.112945676
        %v731 = vmul.f32 %v713, %v730
        %v732 = vadd.f32 %v731, 0.4994258
        %v733 = vmul.f32 %v713, %v732
        %v734 = vadd.f32 %v733, 1.0
        %v735 = vrcp.pop %v734
        %v736 = vmul.f32 %v734, %v735
        %v737 = vsub.f32 1.0, %v736
        %v738 = vmul.f32 %v735, %v737
        %v739 = vadd.f32 %v735, %v738
        %vm740 = vweird.f32 %v734
        %vm741 = vweird.f32 %v735
        %vm742 = vmor %vm740, %vm741
        %v743 = vsel %vm742, %v735, %v739
        %v744 = vand.u32 2147483647, %v734
        %vm745 = vcmp.eq.f32.partialorder %v744, 8.507059e+37
        %v746 = vand.u32 %v734, 2147483648
        %v747 = vor.u32 1.1754944e-38, %v746
        %v748 = vsel %vm745, %v747, %v743
        %v749 = vmul.f32 %v724, %v748
        %v750 = vmin.f32 %v749, 1.0
        %v751 = vmax.f32 %v750, -1.0
        %v752 = vmul.f32 %v454, %v454
        %v753 = vmin.f32 16.0, %v752
        %v754 = vmul.f32 %v753, 2.1237322e-06
        %v755 = vadd.f32 %v754, 0.00028619796
        %v756 = vmul.f32 %v753, %v755
        %v757 = vadd.f32 %v756, 0.0036580483
        %v758 = vmul.f32 %v753, %v757
        %v759 = vadd.f32 %v758, 0.05243302
        %v760 = vmul.f32 %v753, %v759
        %v761 = vadd.f32 %v760, 0.18741608
        %v762 = vmul.f32 %v753, %v761
        %v763 = vadd.f32 %v762, 1.1283791
        %v764 = vmul.f32 %v454, %v763
        %v765 = vmul.f32 %v753, 3.8918573e-05
        %v766 = vadd.f32 %v765, 0.001143296
        %v767 = vmul.f32 %v753, %v766
        %v768 = vadd.f32 %v767, 0.014752088
        %v769 = vmul.f32 %v753, %v768
        %v770 = vadd.f32 %v769, 0.112945676
        %v771 = vmul.f32 %v753, %v770
        %v772 = vadd.f32 %v771, 0.4994258
        %v773 = vmul.f32 %v753, %v772
        %v774 = vadd.f32 %v773, 1.0
        %v775 = vrcp.pop %v774
        %v776 = vmul.f32 %v774, %v775
        %v777 = vsub.f32 1.0, %v776
        %v778 = vmul.f32 %v775, %v777
        %v779 = vadd.f32 %v775, %v778
        %vm780 = vweird.f32 %v774
        %vm781 = vweird.f32 %v775
        %vm782 = vmor %vm780, %vm781
        %v783 = vsel %vm782, %v775, %v779
        %v784 = vand.u32 2147483647, %v774
        %vm785 = vcmp.eq.f32.partialorder %v784, 8.507059e+37
        %v786 = vand.u32 %v774, 2147483648
        %v787 = vor.u32 1.1754944e-38, %v786
        %v788 = vsel %vm785, %v787, %v783
        %v789 = vmul.f32 %v764, %v788
        %v790 = vmin.f32 %v789, 1.0
        %v791 = vmax.f32 %v790, -1.0
        %v792 = vmul.f32 %v455, %v455
        %v793 = vmin.f32 16.0, %v792
        %v794 = vmul.f32 %v793, 2.1237322e-06
        %v795 = vadd.f32 %v794, 0.00028619796
        %v796 = vmul.f32 %v793, %v795
        %v797 = vadd.f32 %v796, 0.0036580483
        %v798 = vmul.f32 %v793, %v797
        %v799 = vadd.f32 %v798, 0.05243302
        %v800 = vmul.f32 %v793, %v799
        %v801 = vadd.f32 %v800, 0.18741608
        %v802 = vmul.f32 %v793, %v801
        %v803 = vadd.f32 %v802, 1.1283791
        %v804 = vmul.f32 %v455, %v803
        %v805 = vmul.f32 %v793, 3.8918573e-05
        %v806 = vadd.f32 %v805, 0.001143296
        %v807 = vmul.f32 %v793, %v806
        %v808 = vadd.f32 %v807, 0.014752088
        %v809 = vmul.f32 %v793, %v808
        %v810 = vadd.f32 %v809, 0.112945676
        %v811 = vmul.f32 %v793, %v810
        %v812 = vadd.f32 %v811, 0.4994258
        %v813 = vmul.f32 %v793, %v812
        %v814 = vadd.f32 %v813, 1.0
        %v815 = vrcp.pop %v814
        %v816 = vmul.f32 %v814, %v815
        %v817 = vsub.f32 1.0, %v816
        %v818 = vmul.f32 %v815, %v817
        %v819 = vadd.f32 %v815, %v818
        %vm820 = vweird.f32 %v814
        %vm821 = vweird.f32 %v815
        %vm822 = vmor %vm820, %vm821
        %v823 = vsel %vm822, %v815, %v819
        %v824 = vand.u32 2147483647, %v814
        %vm825 = vcmp.eq.f32.partialorder %v824, 8.507059e+37
        %v826 = vand.u32 %v814, 2147483648
        %v827 = vor.u32 1.1754944e-38, %v826
        %v828 = vsel %vm825, %v827, %v823
        %v829 = vmul.f32 %v804, %v828
        %v830 = vmin.f32 %v829, 1.0
        %v831 = vmax.f32 %v830, -1.0
        %v832 = vmul.f32 %v456, %v456
        %v833 = vmin.f32 16.0, %v832
        %v834 = vmul.f32 %v833, 2.1237322e-06
        %v835 = vadd.f32 %v834, 0.00028619796
        %v836 = vmul.f32 %v833, %v835
        %v837 = vadd.f32 %v836, 0.0036580483
        %v838 = vmul.f32 %v833, %v837
        %v839 = vadd.f32 %v838, 0.05243302
        %v840 = vmul.f32 %v833, %v839
        %v841 = vadd.f32 %v840, 0.18741608
        %v842 = vmul.f32 %v833, %v841
        %v843 = vadd.f32 %v842, 1.1283791
        %v844 = vmul.f32 %v456, %v843
        %v845 = vmul.f32 %v833, 3.8918573e-05
        %v846 = vadd.f32 %v845, 0.001143296
        %v847 = vmul.f32 %v833, %v846
        %v848 = vadd.f32 %v847, 0.014752088
        %v849 = vmul.f32 %v833, %v848
        %v850 = vadd.f32 %v849, 0.112945676
        %v851 = vmul.f32 %v833, %v850
        %v852 = vadd.f32 %v851, 0.4994258
        %v853 = vmul.f32 %v833, %v852
        %v854 = vadd.f32 %v853, 1.0
        %v855 = vrcp.pop %v854
        %v856 = vmul.f32 %v854, %v855
        %v857 = vsub.f32 1.0, %v856
        %v858 = vmul.f32 %v855, %v857
        %v859 = vadd.f32 %v855, %v858
        %vm860 = vweird.f32 %v854
        %vm861 = vweird.f32 %v855
        %vm862 = vmor %vm860, %vm861
        %v863 = vsel %vm862, %v855, %v859
        %v864 = vand.u32 2147483647, %v854
        %vm865 = vcmp.eq.f32.partialorder %v864, 8.507059e+37
        %v866 = vand.u32 %v854, 2147483648
        %v867 = vor.u32 1.1754944e-38, %v866
        %v868 = vsel %vm865, %v867, %v863
        %v869 = vmul.f32 %v844, %v868
        %v870 = vmin.f32 %v869, 1.0
        %v871 = vmax.f32 %v870, -1.0
        %v872 = vmul.f32 %v457, %v457
        %v873 = vmin.f32 16.0, %v872
        %v874 = vmul.f32 %v873, 2.1237322e-06
        %v875 = vadd.f32 %v874, 0.00028619796
        %v876 = vmul.f32 %v873, %v875
        %v877 = vadd.f32 %v876, 0.0036580483
        %v878 = vmul.f32 %v873, %v877
        %v879 = vadd.f32 %v878, 0.05243302
        %v880 = vmul.f32 %v873, %v879
        %v881 = vadd.f32 %v880, 0.18741608
        %v882 = vmul.f32 %v873, %v881
        %v883 = vadd.f32 %v882, 1.1283791
        %v884 = vmul.f32 %v457, %v883
        %v885 = vmul.f32 %v873, 3.8918573e-05
        %v886 = vadd.f32 %v885, 0.001143296
        %v887 = vmul.f32 %v873, %v886
        %v888 = vadd.f32 %v887, 0.014752088
        %v889 = vmul.f32 %v873, %v888
        %v890 = vadd.f32 %v889, 0.112945676
        %v891 = vmul.f32 %v873, %v890
        %v892 = vadd.f32 %v891, 0.4994258
        %v893 = vmul.f32 %v873, %v892
        %v894 = vadd.f32 %v893, 1.0
        %v895 = vrcp.pop %v894
        %v896 = vmul.f32 %v894, %v895
        %v897 = vsub.f32 1.0, %v896
        %v898 = vmul.f32 %v895, %v897
        %v899 = vadd.f32 %v895, %v898
        %vm900 = vweird.f32 %v894
        %vm901 = vweird.f32 %v895
        %vm902 = vmor %vm900, %vm901
        %v903 = vsel %vm902, %v895, %v899
        %v904 = vand.u32 2147483647, %v894
        %vm905 = vcmp.eq.f32.partialorder %v904, 8.507059e+37
        %v906 = vand.u32 %v894, 2147483648
        %v907 = vor.u32 1.1754944e-38, %v906
        %v908 = vsel %vm905, %v907, %v903
        %v909 = vmul.f32 %v884, %v908
        %v910 = vmin.f32 %v909, 1.0
        %v911 = vmax.f32 %v910, -1.0
        %v912 = vmul.f32 %v458, %v458
        %v913 = vmin.f32 16.0, %v912
        %v914 = vmul.f32 %v913, 2.1237322e-06
        %v915 = vadd.f32 %v914, 0.00028619796
        %v916 = vmul.f32 %v913, %v915
        %v917 = vadd.f32 %v916, 0.0036580483
        %v918 = vmul.f32 %v913, %v917
        %v919 = vadd.f32 %v918, 0.05243302
        %v920 = vmul.f32 %v913, %v919
        %v921 = vadd.f32 %v920, 0.18741608
        %v922 = vmul.f32 %v913, %v921
        %v923 = vadd.f32 %v922, 1.1283791
        %v924 = vmul.f32 %v458, %v923
        %v925 = vmul.f32 %v913, 3.8918573e-05
        %v926 = vadd.f32 %v925, 0.001143296
        %v927 = vmul.f32 %v913, %v926
        %v928 = vadd.f32 %v927, 0.014752088
        %v929 = vmul.f32 %v913, %v928
        %v930 = vadd.f32 %v929, 0.112945676
        %v931 = vmul.f32 %v913, %v930
        %v932 = vadd.f32 %v931, 0.4994258
        %v933 = vmul.f32 %v913, %v932
        %v934 = vadd.f32 %v933, 1.0
        %v935 = vrcp.pop %v934
        %v936 = vmul.f32 %v934, %v935
        %v937 = vsub.f32 1.0, %v936
        %v938 = vmul.f32 %v935, %v937
        %v939 = vadd.f32 %v935, %v938
        %vm940 = vweird.f32 %v934
        %vm941 = vweird.f32 %v935
        %vm942 = vmor %vm940, %vm941
        %v943 = vsel %vm942, %v935, %v939
        %v944 = vand.u32 2147483647, %v934
        %vm945 = vcmp.eq.f32.partialorder %v944, 8.507059e+37
        %v946 = vand.u32 %v934, 2147483648
        %v947 = vor.u32 1.1754944e-38, %v946
        %v948 = vsel %vm945, %v947, %v943
        %v949 = vmul.f32 %v924, %v948
        %v950 = vmin.f32 %v949, 1.0
        %v951 = vmax.f32 %v950, -1.0
        %v952 = vmul.f32 %v459, %v459
        %v953 = vmin.f32 16.0, %v952
        %v954 = vmul.f32 %v953, 2.1237322e-06
        %v955 = vadd.f32 %v954, 0.00028619796
        %v956 = vmul.f32 %v953, %v955
        %v957 = vadd.f32 %v956, 0.0036580483
        %v958 = vmul.f32 %v953, %v957
        %v959 = vadd.f32 %v958, 0.05243302
        %v960 = vmul.f32 %v953, %v959
        %v961 = vadd.f32 %v960, 0.18741608
        %v962 = vmul.f32 %v953, %v961
        %v963 = vadd.f32 %v962, 1.1283791
        %v964 = vmul.f32 %v459, %v963
        %v965 = vmul.f32 %v953, 3.8918573e-05
        %v966 = vadd.f32 %v965, 0.001143296
        %v967 = vmul.f32 %v953, %v966
        %v968 = vadd.f32 %v967, 0.014752088
        %v969 = vmul.f32 %v953, %v968
        %v970 = vadd.f32 %v969, 0.112945676
        %v971 = vmul.f32 %v953, %v970
        %v972 = vadd.f32 %v971, 0.4994258
        %v973 = vmul.f32 %v953, %v972
        %v974 = vadd.f32 %v973, 1.0
        %v975 = vrcp.pop %v974
        %v976 = vmul.f32 %v974, %v975
        %v977 = vsub.f32 1.0, %v976
        %v978 = vmul.f32 %v975, %v977
        %v979 = vadd.f32 %v975, %v978
        %vm980 = vweird.f32 %v974
        %vm981 = vweird.f32 %v975
        %vm982 = vmor %vm980, %vm981
        %v983 = vsel %vm982, %v975, %v979
        %v984 = vand.u32 2147483647, %v974
        %vm985 = vcmp.eq.f32.partialorder %v984, 8.507059e+37
        %v986 = vand.u32 %v974, 2147483648
        %v987 = vor.u32 1.1754944e-38, %v986
        %v988 = vsel %vm985, %v987, %v983
        %v989 = vmul.f32 %v964, %v988
        %v990 = vmin.f32 %v989, 1.0
        %v991 = vmax.f32 %v990, -1.0
        %v992 = vmul.f32 %v460, %v460
        %v993 = vmin.f32 16.0, %v992
        %v994 = vmul.f32 %v993, 2.1237322e-06
        %v995 = vadd.f32 %v994, 0.00028619796
        %v996 = vmul.f32 %v993, %v995
        %v997 = vadd.f32 %v996, 0.0036580483
        %v998 = vmul.f32 %v993, %v997
        %v999 = vadd.f32 %v998, 0.05243302
        %v1000 = vmul.f32 %v993, %v999
        %v1001 = vadd.f32 %v1000, 0.18741608
        %v1002 = vmul.f32 %v993, %v1001
        %v1003 = vadd.f32 %v1002, 1.1283791
        %v1004 = vmul.f32 %v460, %v1003
        %v1005 = vmul.f32 %v993, 3.8918573e-05
        %v1006 = vadd.f32 %v1005, 0.001143296
        %v1007 = vmul.f32 %v993, %v1006
        %v1008 = vadd.f32 %v1007, 0.014752088
        %v1009 = vmul.f32 %v993, %v1008
        %v1010 = vadd.f32 %v1009, 0.112945676
        %v1011 = vmul.f32 %v993, %v1010
        %v1012 = vadd.f32 %v1011, 0.4994258
        %v1013 = vmul.f32 %v993, %v1012
        %v1014 = vadd.f32 %v1013, 1.0
        %v1015 = vrcp.pop %v1014
        %v1016 = vmul.f32 %v1014, %v1015
        %v1017 = vsub.f32 1.0, %v1016
        %v1018 = vmul.f32 %v1015, %v1017
        %v1019 = vadd.f32 %v1015, %v1018
        %vm1020 = vweird.f32 %v1014
        %vm1021 = vweird.f32 %v1015
        %vm1022 = vmor %vm1020, %vm1021
        %v1023 = vsel %vm1022, %v1015, %v1019
        %v1024 = vand.u32 2147483647, %v1014
        %vm1025 = vcmp.eq.f32.partialorder %v1024, 8.507059e+37
        %v1026 = vand.u32 %v1014, 2147483648
        %v1027 = vor.u32 1.1754944e-38, %v1026
        %v1028 = vsel %vm1025, %v1027, %v1023
        %v1029 = vmul.f32 %v1004, %v1028
        %v1030 = vmin.f32 %v1029, 1.0
        %v1031 = vmax.f32 %v1030, -1.0
        %v1032 = vmul.f32 %v461, %v461
        %v1033 = vmin.f32 16.0, %v1032
        %v1034 = vmul.f32 %v1033, 2.1237322e-06
        %v1035 = vadd.f32 %v1034, 0.00028619796
        %v1036 = vmul.f32 %v1033, %v1035
        %v1037 = vadd.f32 %v1036, 0.0036580483
        %v1038 = vmul.f32 %v1033, %v1037
        %v1039 = vadd.f32 %v1038, 0.05243302
        %v1040 = vmul.f32 %v1033, %v1039
        %v1041 = vadd.f32 %v1040, 0.18741608
        %v1042 = vmul.f32 %v1033, %v1041
        %v1043 = vadd.f32 %v1042, 1.1283791
        %v1044 = vmul.f32 %v461, %v1043
        %v1045 = vmul.f32 %v1033, 3.8918573e-05
        %v1046 = vadd.f32 %v1045, 0.001143296
        %v1047 = vmul.f32 %v1033, %v1046
        %v1048 = vadd.f32 %v1047, 0.014752088
        %v1049 = vmul.f32 %v1033, %v1048
        %v1050 = vadd.f32 %v1049, 0.112945676
        %v1051 = vmul.f32 %v1033, %v1050
        %v1052 = vadd.f32 %v1051, 0.4994258
        %v1053 = vmul.f32 %v1033, %v1052
        %v1054 = vadd.f32 %v1053, 1.0
        %v1055 = vrcp.pop %v1054
        %v1056 = vmul.f32 %v1054, %v1055
        %v1057 = vsub.f32 1.0, %v1056
        %v1058 = vmul.f32 %v1055, %v1057
        %v1059 = vadd.f32 %v1055, %v1058
        %vm1060 = vweird.f32 %v1054
        %vm1061 = vweird.f32 %v1055
        %vm1062 = vmor %vm1060, %vm1061
        %v1063 = vsel %vm1062, %v1055, %v1059
        %v1064 = vand.u32 2147483647, %v1054
        %vm1065 = vcmp.eq.f32.partialorder %v1064, 8.507059e+37
        %v1066 = vand.u32 %v1054, 2147483648
        %v1067 = vor.u32 1.1754944e-38, %v1066
        %v1068 = vsel %vm1065, %v1067, %v1063
        %v1069 = vmul.f32 %v1044, %v1068
        %v1070 = vmin.f32 %v1069, 1.0
        %v1071 = vmax.f32 %v1070, -1.0
        %v1072 = vmul.f32 %v462, %v462
        %v1073 = vmin.f32 16.0, %v1072
        %v1074 = vmul.f32 %v1073, 2.1237322e-06
        %v1075 = vadd.f32 %v1074, 0.00028619796
        %v1076 = vmul.f32 %v1073, %v1075
        %v1077 = vadd.f32 %v1076, 0.0036580483
        %v1078 = vmul.f32 %v1073, %v1077
        %v1079 = vadd.f32 %v1078, 0.05243302
        %v1080 = vmul.f32 %v1073, %v1079
        %v1081 = vadd.f32 %v1080, 0.18741608
        %v1082 = vmul.f32 %v1073, %v1081
        %v1083 = vadd.f32 %v1082, 1.1283791
        %v1084 = vmul.f32 %v462, %v1083
        %v1085 = vmul.f32 %v1073, 3.8918573e-05
        %v1086 = vadd.f32 %v1085, 0.001143296
        %v1087 = vmul.f32 %v1073, %v1086
        %v1088 = vadd.f32 %v1087, 0.014752088
        %v1089 = vmul.f32 %v1073, %v1088
        %v1090 = vadd.f32 %v1089, 0.112945676
        %v1091 = vmul.f32 %v1073, %v1090
        %v1092 = vadd.f32 %v1091, 0.4994258
        %v1093 = vmul.f32 %v1073, %v1092
        %v1094 = vadd.f32 %v1093, 1.0
        %v1095 = vrcp.pop %v1094
        %v1096 = vmul.f32 %v1094, %v1095
        %v1097 = vsub.f32 1.0, %v1096
        %v1098 = vmul.f32 %v1095, %v1097
        %v1099 = vadd.f32 %v1095, %v1098
        %vm1100 = vweird.f32 %v1094
        %vm1101 = vweird.f32 %v1095
        %vm1102 = vmor %vm1100, %vm1101
        %v1103 = vsel %vm1102, %v1095, %v1099
        %v1104 = vand.u32 2147483647, %v1094
        %vm1105 = vcmp.eq.f32.partialorder %v1104, 8.507059e+37
        %v1106 = vand.u32 %v1094, 2147483648
        %v1107 = vor.u32 1.1754944e-38, %v1106
        %v1108 = vsel %vm1105, %v1107, %v1103
        %v1109 = vmul.f32 %v1084, %v1108
        %v1110 = vmin.f32 %v1109, 1.0
        %v1111 = vmax.f32 %v1110, -1.0
        %v1112 = vmul.f32 %v463, %v463
        %v1113 = vmin.f32 16.0, %v1112
        %v1114 = vmul.f32 %v1113, 2.1237322e-06
        %v1115 = vadd.f32 %v1114, 0.00028619796
        %v1116 = vmul.f32 %v1113, %v1115
        %v1117 = vadd.f32 %v1116, 0.0036580483
        %v1118 = vmul.f32 %v1113, %v1117
        %v1119 = vadd.f32 %v1118, 0.05243302
        %v1120 = vmul.f32 %v1113, %v1119
        %v1121 = vadd.f32 %v1120, 0.18741608
        %v1122 = vmul.f32 %v1113, %v1121
        %v1123 = vadd.f32 %v1122, 1.1283791
        %v1124 = vmul.f32 %v463, %v1123
        %v1125 = vmul.f32 %v1113, 3.8918573e-05
        %v1126 = vadd.f32 %v1125, 0.001143296
        %v1127 = vmul.f32 %v1113, %v1126
        %v1128 = vadd.f32 %v1127, 0.014752088
        %v1129 = vmul.f32 %v1113, %v1128
        %v1130 = vadd.f32 %v1129, 0.112945676
        %v1131 = vmul.f32 %v1113, %v1130
        %v1132 = vadd.f32 %v1131, 0.4994258
        %v1133 = vmul.f32 %v1113, %v1132
        %v1134 = vadd.f32 %v1133, 1.0
        %v1135 = vrcp.pop %v1134
        %v1136 = vmul.f32 %v1134, %v1135
        %v1137 = vsub.f32 1.0, %v1136
        %v1138 = vmul.f32 %v1135, %v1137
        %v1139 = vadd.f32 %v1135, %v1138
        %vm1140 = vweird.f32 %v1134
        %vm1141 = vweird.f32 %v1135
        %vm1142 = vmor %vm1140, %vm1141
        %v1143 = vsel %vm1142, %v1135, %v1139
        %v1144 = vand.u32 2147483647, %v1134
        %vm1145 = vcmp.eq.f32.partialorder %v1144, 8.507059e+37
        %v1146 = vand.u32 %v1134, 2147483648
        %v1147 = vor.u32 1.1754944e-38, %v1146
        %v1148 = vsel %vm1145, %v1147, %v1143
        %v1149 = vmul.f32 %v1124, %v1148
        %v1150 = vmin.f32 %v1149, 1.0
        %v1151 = vmax.f32 %v1150, -1.0
        %v1152 = vmul.f32 %v464, %v464
        %v1153 = vmin.f32 16.0, %v1152
        %v1154 = vmul.f32 %v1153, 2.1237322e-06
        %v1155 = vadd.f32 %v1154, 0.00028619796
        %v1156 = vmul.f32 %v1153, %v1155
        %v1157 = vadd.f32 %v1156, 0.0036580483
        %v1158 = vmul.f32 %v1153, %v1157
        %v1159 = vadd.f32 %v1158, 0.05243302
        %v1160 = vmul.f32 %v1153, %v1159
        %v1161 = vadd.f32 %v1160, 0.18741608
        %v1162 = vmul.f32 %v1153, %v1161
        %v1163 = vadd.f32 %v1162, 1.1283791
        %v1164 = vmul.f32 %v464, %v1163
        %v1165 = vmul.f32 %v1153, 3.8918573e-05
        %v1166 = vadd.f32 %v1165, 0.001143296
        %v1167 = vmul.f32 %v1153, %v1166
        %v1168 = vadd.f32 %v1167, 0.014752088
        %v1169 = vmul.f32 %v1153, %v1168
        %v1170 = vadd.f32 %v1169, 0.112945676
        %v1171 = vmul.f32 %v1153, %v1170
        %v1172 = vadd.f32 %v1171, 0.4994258
        %v1173 = vmul.f32 %v1153, %v1172
        %v1174 = vadd.f32 %v1173, 1.0
        %v1175 = vrcp.pop %v1174
        %v1176 = vmul.f32 %v1174, %v1175
        %v1177 = vsub.f32 1.0, %v1176
        %v1178 = vmul.f32 %v1175, %v1177
        %v1179 = vadd.f32 %v1175, %v1178
        %vm1180 = vweird.f32 %v1174
        %vm1181 = vweird.f32 %v1175
        %vm1182 = vmor %vm1180, %vm1181
        %v1183 = vsel %vm1182, %v1175, %v1179
        %v1184 = vand.u32 2147483647, %v1174
        %vm1185 = vcmp.eq.f32.partialorder %v1184, 8.507059e+37
        %v1186 = vand.u32 %v1174, 2147483648
        %v1187 = vor.u32 1.1754944e-38, %v1186
        %v1188 = vsel %vm1185, %v1187, %v1183
        %v1189 = vmul.f32 %v1164, %v1188
        %v1190 = vmin.f32 %v1189, 1.0
        %v1191 = vmax.f32 %v1190, -1.0
        %v1192 = vmul.f32 %v465, %v465
        %v1193 = vmin.f32 16.0, %v1192
        %v1194 = vmul.f32 %v1193, 2.1237322e-06
        %v1195 = vadd.f32 %v1194, 0.00028619796
        %v1196 = vmul.f32 %v1193, %v1195
        %v1197 = vadd.f32 %v1196, 0.0036580483
        %v1198 = vmul.f32 %v1193, %v1197
        %v1199 = vadd.f32 %v1198, 0.05243302
        %v1200 = vmul.f32 %v1193, %v1199
        %v1201 = vadd.f32 %v1200, 0.18741608
        %v1202 = vmul.f32 %v1193, %v1201
        %v1203 = vadd.f32 %v1202, 1.1283791
        %v1204 = vmul.f32 %v465, %v1203
        %v1205 = vmul.f32 %v1193, 3.8918573e-05
        %v1206 = vadd.f32 %v1205, 0.001143296
        %v1207 = vmul.f32 %v1193, %v1206
        %v1208 = vadd.f32 %v1207, 0.014752088
        %v1209 = vmul.f32 %v1193, %v1208
        %v1210 = vadd.f32 %v1209, 0.112945676
        %v1211 = vmul.f32 %v1193, %v1210
        %v1212 = vadd.f32 %v1211, 0.4994258
        %v1213 = vmul.f32 %v1193, %v1212
        %v1214 = vadd.f32 %v1213, 1.0
        %v1215 = vrcp.pop %v1214
        %v1216 = vmul.f32 %v1214, %v1215
        %v1217 = vsub.f32 1.0, %v1216
        %v1218 = vmul.f32 %v1215, %v1217
        %v1219 = vadd.f32 %v1215, %v1218
        %vm1220 = vweird.f32 %v1214
        %vm1221 = vweird.f32 %v1215
        %vm1222 = vmor %vm1220, %vm1221
        %v1223 = vsel %vm1222, %v1215, %v1219
        %v1224 = vand.u32 2147483647, %v1214
        %vm1225 = vcmp.eq.f32.partialorder %v1224, 8.507059e+37
        %v1226 = vand.u32 %v1214, 2147483648
        %v1227 = vor.u32 1.1754944e-38, %v1226
        %v1228 = vsel %vm1225, %v1227, %v1223
        %v1229 = vmul.f32 %v1204, %v1228
        %v1230 = vmin.f32 %v1229, 1.0
        %v1231 = vmax.f32 %v1230, -1.0
        %v1232 = vmul.f32 %v466, %v466
        %v1233 = vmin.f32 16.0, %v1232
        %v1234 = vmul.f32 %v1233, 2.1237322e-06
        %v1235 = vadd.f32 %v1234, 0.00028619796
        %v1236 = vmul.f32 %v1233, %v1235
        %v1237 = vadd.f32 %v1236, 0.0036580483
        %v1238 = vmul.f32 %v1233, %v1237
        %v1239 = vadd.f32 %v1238, 0.05243302
        %v1240 = vmul.f32 %v1233, %v1239
        %v1241 = vadd.f32 %v1240, 0.18741608
        %v1242 = vmul.f32 %v1233, %v1241
        %v1243 = vadd.f32 %v1242, 1.1283791
        %v1244 = vmul.f32 %v466, %v1243
        %v1245 = vmul.f32 %v1233, 3.8918573e-05
        %v1246 = vadd.f32 %v1245, 0.001143296
        %v1247 = vmul.f32 %v1233, %v1246
        %v1248 = vadd.f32 %v1247, 0.014752088
        %v1249 = vmul.f32 %v1233, %v1248
        %v1250 = vadd.f32 %v1249, 0.112945676
        %v1251 = vmul.f32 %v1233, %v1250
        %v1252 = vadd.f32 %v1251, 0.4994258
        %v1253 = vmul.f32 %v1233, %v1252
        %v1254 = vadd.f32 %v1253, 1.0
        %v1255 = vrcp.pop %v1254
        %v1256 = vmul.f32 %v1254, %v1255
        %v1257 = vsub.f32 1.0, %v1256
        %v1258 = vmul.f32 %v1255, %v1257
        %v1259 = vadd.f32 %v1255, %v1258
        %vm1260 = vweird.f32 %v1254
        %vm1261 = vweird.f32 %v1255
        %vm1262 = vmor %vm1260, %vm1261
        %v1263 = vsel %vm1262, %v1255, %v1259
        %v1264 = vand.u32 2147483647, %v1254
        %vm1265 = vcmp.eq.f32.partialorder %v1264, 8.507059e+37
        %v1266 = vand.u32 %v1254, 2147483648
        %v1267 = vor.u32 1.1754944e-38, %v1266
        %v1268 = vsel %vm1265, %v1267, %v1263
        %v1269 = vmul.f32 %v1244, %v1268
        %v1270 = vmin.f32 %v1269, 1.0
        %v1271 = vmax.f32 %v1270, -1.0
        %v1272 = vmul.f32 %v467, %v467
        %v1273 = vmin.f32 16.0, %v1272
        %v1274 = vmul.f32 %v1273, 2.1237322e-06
        %v1275 = vadd.f32 %v1274, 0.00028619796
        %v1276 = vmul.f32 %v1273, %v1275
        %v1277 = vadd.f32 %v1276, 0.0036580483
        %v1278 = vmul.f32 %v1273, %v1277
        %v1279 = vadd.f32 %v1278, 0.05243302
        %v1280 = vmul.f32 %v1273, %v1279
        %v1281 = vadd.f32 %v1280, 0.18741608
        %v1282 = vmul.f32 %v1273, %v1281
        %v1283 = vadd.f32 %v1282, 1.1283791
        %v1284 = vmul.f32 %v467, %v1283
        %v1285 = vmul.f32 %v1273, 3.8918573e-05
        %v1286 = vadd.f32 %v1285, 0.001143296
        %v1287 = vmul.f32 %v1273, %v1286
        %v1288 = vadd.f32 %v1287, 0.014752088
        %v1289 = vmul.f32 %v1273, %v1288
        %v1290 = vadd.f32 %v1289, 0.112945676
        %v1291 = vmul.f32 %v1273, %v1290
        %v1292 = vadd.f32 %v1291, 0.4994258
        %v1293 = vmul.f32 %v1273, %v1292
        %v1294 = vadd.f32 %v1293, 1.0
        %v1295 = vrcp.pop %v1294
        %v1296 = vmul.f32 %v1294, %v1295
        %v1297 = vsub.f32 1.0, %v1296
        %v1298 = vmul.f32 %v1295, %v1297
        %v1299 = vadd.f32 %v1295, %v1298
        %vm1300 = vweird.f32 %v1294
        %vm1301 = vweird.f32 %v1295
        %vm1302 = vmor %vm1300, %vm1301
        %v1303 = vsel %vm1302, %v1295, %v1299
        %v1304 = vand.u32 2147483647, %v1294
        %vm1305 = vcmp.eq.f32.partialorder %v1304, 8.507059e+37
        %v1306 = vand.u32 %v1294, 2147483648
        %v1307 = vor.u32 1.1754944e-38, %v1306
        %v1308 = vsel %vm1305, %v1307, %v1303
        %v1309 = vmul.f32 %v1284, %v1308
        %v1310 = vmin.f32 %v1309, 1.0
        %v1311 = vmax.f32 %v1310, -1.0
        %v1312 = vmul.f32 %v468, %v468
        %v1313 = vmin.f32 16.0, %v1312
        %v1314 = vmul.f32 %v1313, 2.1237322e-06
        %v1315 = vadd.f32 %v1314, 0.00028619796
        %v1316 = vmul.f32 %v1313, %v1315
        %v1317 = vadd.f32 %v1316, 0.0036580483
        %v1318 = vmul.f32 %v1313, %v1317
        %v1319 = vadd.f32 %v1318, 0.05243302
        %v1320 = vmul.f32 %v1313, %v1319
        %v1321 = vadd.f32 %v1320, 0.18741608
        %v1322 = vmul.f32 %v1313, %v1321
        %v1323 = vadd.f32 %v1322, 1.1283791
        %v1324 = vmul.f32 %v468, %v1323
        %v1325 = vmul.f32 %v1313, 3.8918573e-05
        %v1326 = vadd.f32 %v1325, 0.001143296
        %v1327 = vmul.f32 %v1313, %v1326
        %v1328 = vadd.f32 %v1327, 0.014752088
        %v1329 = vmul.f32 %v1313, %v1328
        %v1330 = vadd.f32 %v1329, 0.112945676
        %v1331 = vmul.f32 %v1313, %v1330
        %v1332 = vadd.f32 %v1331, 0.4994258
        %v1333 = vmul.f32 %v1313, %v1332
        %v1334 = vadd.f32 %v1333, 1.0
        %v1335 = vrcp.pop %v1334
        %v1336 = vmul.f32 %v1334, %v1335
        %v1337 = vsub.f32 1.0, %v1336
        %v1338 = vmul.f32 %v1335, %v1337
        %v1339 = vadd.f32 %v1335, %v1338
        %vm1340 = vweird.f32 %v1334
        %vm1341 = vweird.f32 %v1335
        %vm1342 = vmor %vm1340, %vm1341
        %v1343 = vsel %vm1342, %v1335, %v1339
        %v1344 = vand.u32 2147483647, %v1334
        %vm1345 = vcmp.eq.f32.partialorder %v1344, 8.507059e+37
        %v1346 = vand.u32 %v1334, 2147483648
        %v1347 = vor.u32 1.1754944e-38, %v1346
        %v1348 = vsel %vm1345, %v1347, %v1343
        %v1349 = vmul.f32 %v1324, %v1348
        %v1350 = vmin.f32 %v1349, 1.0
        %v1351 = vmax.f32 %v1350, -1.0
        %v1352 = vmul.f32 %v469, %v469
        %v1353 = vmin.f32 16.0, %v1352
        %v1354 = vmul.f32 %v1353, 2.1237322e-06
        %v1355 = vadd.f32 %v1354, 0.00028619796
        %v1356 = vmul.f32 %v1353, %v1355
        %v1357 = vadd.f32 %v1356, 0.0036580483
        %v1358 = vmul.f32 %v1353, %v1357
        %v1359 = vadd.f32 %v1358, 0.05243302
        %v1360 = vmul.f32 %v1353, %v1359
        %v1361 = vadd.f32 %v1360, 0.18741608
        %v1362 = vmul.f32 %v1353, %v1361
        %v1363 = vadd.f32 %v1362, 1.1283791
        %v1364 = vmul.f32 %v469, %v1363
        %v1365 = vmul.f32 %v1353, 3.8918573e-05
        %v1366 = vadd.f32 %v1365, 0.001143296
        %v1367 = vmul.f32 %v1353, %v1366
        %v1368 = vadd.f32 %v1367, 0.014752088
        %v1369 = vmul.f32 %v1353, %v1368
        %v1370 = vadd.f32 %v1369, 0.112945676
        %v1371 = vmul.f32 %v1353, %v1370
        %v1372 = vadd.f32 %v1371, 0.4994258
        %v1373 = vmul.f32 %v1353, %v1372
        %v1374 = vadd.f32 %v1373, 1.0
        %v1375 = vrcp.pop %v1374
        %v1376 = vmul.f32 %v1374, %v1375
        %v1377 = vsub.f32 1.0, %v1376
        %v1378 = vmul.f32 %v1375, %v1377
        %v1379 = vadd.f32 %v1375, %v1378
        %vm1380 = vweird.f32 %v1374
        %vm1381 = vweird.f32 %v1375
        %vm1382 = vmor %vm1380, %vm1381
        %v1383 = vsel %vm1382, %v1375, %v1379
        %v1384 = vand.u32 2147483647, %v1374
        %vm1385 = vcmp.eq.f32.partialorder %v1384, 8.507059e+37
        %v1386 = vand.u32 %v1374, 2147483648
        %v1387 = vor.u32 1.1754944e-38, %v1386
        %v1388 = vsel %vm1385, %v1387, %v1383
        %v1389 = vmul.f32 %v1364, %v1388
        %v1390 = vmin.f32 %v1389, 1.0
        %v1391 = vmax.f32 %v1390, -1.0
        %v1392 = vmul.f32 %v470, %v470
        %v1393 = vmin.f32 16.0, %v1392
        %v1394 = vmul.f32 %v1393, 2.1237322e-06
        %v1395 = vadd.f32 %v1394, 0.00028619796
        %v1396 = vmul.f32 %v1393, %v1395
        %v1397 = vadd.f32 %v1396, 0.0036580483
        %v1398 = vmul.f32 %v1393, %v1397
        %v1399 = vadd.f32 %v1398, 0.05243302
        %v1400 = vmul.f32 %v1393, %v1399
        %v1401 = vadd.f32 %v1400, 0.18741608
        %v1402 = vmul.f32 %v1393, %v1401
        %v1403 = vadd.f32 %v1402, 1.1283791
        %v1404 = vmul.f32 %v470, %v1403
        %v1405 = vmul.f32 %v1393, 3.8918573e-05
        %v1406 = vadd.f32 %v1405, 0.001143296
        %v1407 = vmul.f32 %v1393, %v1406
        %v1408 = vadd.f32 %v1407, 0.014752088
        %v1409 = vmul.f32 %v1393, %v1408
        %v1410 = vadd.f32 %v1409, 0.112945676
        %v1411 = vmul.f32 %v1393, %v1410
        %v1412 = vadd.f32 %v1411, 0.4994258
        %v1413 = vmul.f32 %v1393, %v1412
        %v1414 = vadd.f32 %v1413, 1.0
        %v1415 = vrcp.pop %v1414
        %v1416 = vmul.f32 %v1414, %v1415
        %v1417 = vsub.f32 1.0, %v1416
        %v1418 = vmul.f32 %v1415, %v1417
        %v1419 = vadd.f32 %v1415, %v1418
        %vm1420 = vweird.f32 %v1414
        %vm1421 = vweird.f32 %v1415
        %vm1422 = vmor %vm1420, %vm1421
        %v1423 = vsel %vm1422, %v1415, %v1419
        %v1424 = vand.u32 2147483647, %v1414
        %vm1425 = vcmp.eq.f32.partialorder %v1424, 8.507059e+37
        %v1426 = vand.u32 %v1414, 2147483648
        %v1427 = vor.u32 1.1754944e-38, %v1426
        %v1428 = vsel %vm1425, %v1427, %v1423
        %v1429 = vmul.f32 %v1404, %v1428
        %v1430 = vmin.f32 %v1429, 1.0
        %v1431 = vmax.f32 %v1430, -1.0
        %v1432 = vmul.f32 %v471, %v471
        %v1433 = vmin.f32 16.0, %v1432
        %v1434 = vmul.f32 %v1433, 2.1237322e-06
        %v1435 = vadd.f32 %v1434, 0.00028619796
        %v1436 = vmul.f32 %v1433, %v1435
        %v1437 = vadd.f32 %v1436, 0.0036580483
        %v1438 = vmul.f32 %v1433, %v1437
        %v1439 = vadd.f32 %v1438, 0.05243302
        %v1440 = vmul.f32 %v1433, %v1439
        %v1441 = vadd.f32 %v1440, 0.18741608
        %v1442 = vmul.f32 %v1433, %v1441
        %v1443 = vadd.f32 %v1442, 1.1283791
        %v1444 = vmul.f32 %v471, %v1443
        %v1445 = vmul.f32 %v1433, 3.8918573e-05
        %v1446 = vadd.f32 %v1445, 0.001143296
        %v1447 = vmul.f32 %v1433, %v1446
        %v1448 = vadd.f32 %v1447, 0.014752088
        %v1449 = vmul.f32 %v1433, %v1448
        %v1450 = vadd.f32 %v1449, 0.112945676
        %v1451 = vmul.f32 %v1433, %v1450
        %v1452 = vadd.f32 %v1451, 0.4994258
        %v1453 = vmul.f32 %v1433, %v1452
        %v1454 = vadd.f32 %v1453, 1.0
        %v1455 = vrcp.pop %v1454
        %v1456 = vmul.f32 %v1454, %v1455
        %v1457 = vsub.f32 1.0, %v1456
        %v1458 = vmul.f32 %v1455, %v1457
        %v1459 = vadd.f32 %v1455, %v1458
        %vm1460 = vweird.f32 %v1454
        %vm1461 = vweird.f32 %v1455
        %vm1462 = vmor %vm1460, %vm1461
        %v1463 = vsel %vm1462, %v1455, %v1459
        %v1464 = vand.u32 2147483647, %v1454
        %vm1465 = vcmp.eq.f32.partialorder %v1464, 8.507059e+37
        %v1466 = vand.u32 %v1454, 2147483648
        %v1467 = vor.u32 1.1754944e-38, %v1466
        %v1468 = vsel %vm1465, %v1467, %v1463
        %v1469 = vmul.f32 %v1444, %v1468
        %v1470 = vmin.f32 %v1469, 1.0
        %v1471 = vmax.f32 %v1470, -1.0
        %v1472 = vmul.f32 %v472, %v472
        %v1473 = vmin.f32 16.0, %v1472
        %v1474 = vmul.f32 %v1473, 2.1237322e-06
        %v1475 = vadd.f32 %v1474, 0.00028619796
        %v1476 = vmul.f32 %v1473, %v1475
        %v1477 = vadd.f32 %v1476, 0.0036580483
        %v1478 = vmul.f32 %v1473, %v1477
        %v1479 = vadd.f32 %v1478, 0.05243302
        %v1480 = vmul.f32 %v1473, %v1479
        %v1481 = vadd.f32 %v1480, 0.18741608
        %v1482 = vmul.f32 %v1473, %v1481
        %v1483 = vadd.f32 %v1482, 1.1283791
        %v1484 = vmul.f32 %v472, %v1483
        %v1485 = vmul.f32 %v1473, 3.8918573e-05
        %v1486 = vadd.f32 %v1485, 0.001143296
        %v1487 = vmul.f32 %v1473, %v1486
        %v1488 = vadd.f32 %v1487, 0.014752088
        %v1489 = vmul.f32 %v1473, %v1488
        %v1490 = vadd.f32 %v1489, 0.112945676
        %v1491 = vmul.f32 %v1473, %v1490
        %v1492 = vadd.f32 %v1491, 0.4994258
        %v1493 = vmul.f32 %v1473, %v1492
        %v1494 = vadd.f32 %v1493, 1.0
        %v1495 = vrcp.pop %v1494
        %v1496 = vmul.f32 %v1494, %v1495
        %v1497 = vsub.f32 1.0, %v1496
        %v1498 = vmul.f32 %v1495, %v1497
        %v1499 = vadd.f32 %v1495, %v1498
        %vm1500 = vweird.f32 %v1494
        %vm1501 = vweird.f32 %v1495
        %vm1502 = vmor %vm1500, %vm1501
        %v1503 = vsel %vm1502, %v1495, %v1499
        %v1504 = vand.u32 2147483647, %v1494
        %vm1505 = vcmp.eq.f32.partialorder %v1504, 8.507059e+37
        %v1506 = vand.u32 %v1494, 2147483648
        %v1507 = vor.u32 1.1754944e-38, %v1506
        %v1508 = vsel %vm1505, %v1507, %v1503
        %v1509 = vmul.f32 %v1484, %v1508
        %v1510 = vmin.f32 %v1509, 1.0
        %v1511 = vmax.f32 %v1510, -1.0
        %v1512 = vmul.f32 %v473, %v473
        %v1513 = vmin.f32 16.0, %v1512
        %v1514 = vmul.f32 %v1513, 2.1237322e-06
        %v1515 = vadd.f32 %v1514, 0.00028619796
        %v1516 = vmul.f32 %v1513, %v1515
        %v1517 = vadd.f32 %v1516, 0.0036580483
        %v1518 = vmul.f32 %v1513, %v1517
        %v1519 = vadd.f32 %v1518, 0.05243302
        %v1520 = vmul.f32 %v1513, %v1519
        %v1521 = vadd.f32 %v1520, 0.18741608
        %v1522 = vmul.f32 %v1513, %v1521
        %v1523 = vadd.f32 %v1522, 1.1283791
        %v1524 = vmul.f32 %v473, %v1523
        %v1525 = vmul.f32 %v1513, 3.8918573e-05
        %v1526 = vadd.f32 %v1525, 0.001143296
        %v1527 = vmul.f32 %v1513, %v1526
        %v1528 = vadd.f32 %v1527, 0.014752088
        %v1529 = vmul.f32 %v1513, %v1528
        %v1530 = vadd.f32 %v1529, 0.112945676
        %v1531 = vmul.f32 %v1513, %v1530
        %v1532 = vadd.f32 %v1531, 0.4994258
        %v1533 = vmul.f32 %v1513, %v1532
        %v1534 = vadd.f32 %v1533, 1.0
        %v1535 = vrcp.pop %v1534
        %v1536 = vmul.f32 %v1534, %v1535
        %v1537 = vsub.f32 1.0, %v1536
        %v1538 = vmul.f32 %v1535, %v1537
        %v1539 = vadd.f32 %v1535, %v1538
        %vm1540 = vweird.f32 %v1534
        %vm1541 = vweird.f32 %v1535
        %vm1542 = vmor %vm1540, %vm1541
        %v1543 = vsel %vm1542, %v1535, %v1539
        %v1544 = vand.u32 2147483647, %v1534
        %vm1545 = vcmp.eq.f32.partialorder %v1544, 8.507059e+37
        %v1546 = vand.u32 %v1534, 2147483648
        %v1547 = vor.u32 1.1754944e-38, %v1546
        %v1548 = vsel %vm1545, %v1547, %v1543
        %v1549 = vmul.f32 %v1524, %v1548
        %v1550 = vmin.f32 %v1549, 1.0
        %v1551 = vmax.f32 %v1550, -1.0
        %v1552 = vmul.f32 %v474, %v474
        %v1553 = vmin.f32 16.0, %v1552
        %v1554 = vmul.f32 %v1553, 2.1237322e-06
        %v1555 = vadd.f32 %v1554, 0.00028619796
        %v1556 = vmul.f32 %v1553, %v1555
        %v1557 = vadd.f32 %v1556, 0.0036580483
        %v1558 = vmul.f32 %v1553, %v1557
        %v1559 = vadd.f32 %v1558, 0.05243302
        %v1560 = vmul.f32 %v1553, %v1559
        %v1561 = vadd.f32 %v1560, 0.18741608
        %v1562 = vmul.f32 %v1553, %v1561
        %v1563 = vadd.f32 %v1562, 1.1283791
        %v1564 = vmul.f32 %v474, %v1563
        %v1565 = vmul.f32 %v1553, 3.8918573e-05
        %v1566 = vadd.f32 %v1565, 0.001143296
        %v1567 = vmul.f32 %v1553, %v1566
        %v1568 = vadd.f32 %v1567, 0.014752088
        %v1569 = vmul.f32 %v1553, %v1568
        %v1570 = vadd.f32 %v1569, 0.112945676
        %v1571 = vmul.f32 %v1553, %v1570
        %v1572 = vadd.f32 %v1571, 0.4994258
        %v1573 = vmul.f32 %v1553, %v1572
        %v1574 = vadd.f32 %v1573, 1.0
        %v1575 = vrcp.pop %v1574
        %v1576 = vmul.f32 %v1574, %v1575
        %v1577 = vsub.f32 1.0, %v1576
        %v1578 = vmul.f32 %v1575, %v1577
        %v1579 = vadd.f32 %v1575, %v1578
        %vm1580 = vweird.f32 %v1574
        %vm1581 = vweird.f32 %v1575
        %vm1582 = vmor %vm1580, %vm1581
        %v1583 = vsel %vm1582, %v1575, %v1579
        %v1584 = vand.u32 2147483647, %v1574
        %vm1585 = vcmp.eq.f32.partialorder %v1584, 8.507059e+37
        %v1586 = vand.u32 %v1574, 2147483648
        %v1587 = vor.u32 1.1754944e-38, %v1586
        %v1588 = vsel %vm1585, %v1587, %v1583
        %v1589 = vmul.f32 %v1564, %v1588
        %v1590 = vmin.f32 %v1589, 1.0
        %v1591 = vmax.f32 %v1590, -1.0
        %v1592 = vmul.f32 %v475, %v475
        %v1593 = vmin.f32 16.0, %v1592
        %v1594 = vmul.f32 %v1593, 2.1237322e-06
        %v1595 = vadd.f32 %v1594, 0.00028619796
        %v1596 = vmul.f32 %v1593, %v1595
        %v1597 = vadd.f32 %v1596, 0.0036580483
        %v1598 = vmul.f32 %v1593, %v1597
        %v1599 = vadd.f32 %v1598, 0.05243302
        %v1600 = vmul.f32 %v1593, %v1599
        %v1601 = vadd.f32 %v1600, 0.18741608
        %v1602 = vmul.f32 %v1593, %v1601
        %v1603 = vadd.f32 %v1602, 1.1283791
        %v1604 = vmul.f32 %v475, %v1603
        %v1605 = vmul.f32 %v1593, 3.8918573e-05
        %v1606 = vadd.f32 %v1605, 0.001143296
        %v1607 = vmul.f32 %v1593, %v1606
        %v1608 = vadd.f32 %v1607, 0.014752088
        %v1609 = vmul.f32 %v1593, %v1608
        %v1610 = vadd.f32 %v1609, 0.112945676
        %v1611 = vmul.f32 %v1593, %v1610
        %v1612 = vadd.f32 %v1611, 0.4994258
        %v1613 = vmul.f32 %v1593, %v1612
        %v1614 = vadd.f32 %v1613, 1.0
        %v1615 = vrcp.pop %v1614
        %v1616 = vmul.f32 %v1614, %v1615
        %v1617 = vsub.f32 1.0, %v1616
        %v1618 = vmul.f32 %v1615, %v1617
        %v1619 = vadd.f32 %v1615, %v1618
        %vm1620 = vweird.f32 %v1614
        %vm1621 = vweird.f32 %v1615
        %vm1622 = vmor %vm1620, %vm1621
        %v1623 = vsel %vm1622, %v1615, %v1619
        %v1624 = vand.u32 2147483647, %v1614
        %vm1625 = vcmp.eq.f32.partialorder %v1624, 8.507059e+37
        %v1626 = vand.u32 %v1614, 2147483648
        %v1627 = vor.u32 1.1754944e-38, %v1626
        %v1628 = vsel %vm1625, %v1627, %v1623
        %v1629 = vmul.f32 %v1604, %v1628
        %v1630 = vmin.f32 %v1629, 1.0
        %v1631 = vmax.f32 %v1630, -1.0
        %v1632 = vmul.f32 %v476, %v476
        %v1633 = vmin.f32 16.0, %v1632
        %v1634 = vmul.f32 %v1633, 2.1237322e-06
        %v1635 = vadd.f32 %v1634, 0.00028619796
        %v1636 = vmul.f32 %v1633, %v1635
        %v1637 = vadd.f32 %v1636, 0.0036580483
        %v1638 = vmul.f32 %v1633, %v1637
        %v1639 = vadd.f32 %v1638, 0.05243302
        %v1640 = vmul.f32 %v1633, %v1639
        %v1641 = vadd.f32 %v1640, 0.18741608
        %v1642 = vmul.f32 %v1633, %v1641
        %v1643 = vadd.f32 %v1642, 1.1283791
        %v1644 = vmul.f32 %v476, %v1643
        %v1645 = vmul.f32 %v1633, 3.8918573e-05
        %v1646 = vadd.f32 %v1645, 0.001143296
        %v1647 = vmul.f32 %v1633, %v1646
        %v1648 = vadd.f32 %v1647, 0.014752088
        %v1649 = vmul.f32 %v1633, %v1648
        %v1650 = vadd.f32 %v1649, 0.112945676
        %v1651 = vmul.f32 %v1633, %v1650
        %v1652 = vadd.f32 %v1651, 0.4994258
        %v1653 = vmul.f32 %v1633, %v1652
        %v1654 = vadd.f32 %v1653, 1.0
        %v1655 = vrcp.pop %v1654
        %v1656 = vmul.f32 %v1654, %v1655
        %v1657 = vsub.f32 1.0, %v1656
        %v1658 = vmul.f32 %v1655, %v1657
        %v1659 = vadd.f32 %v1655, %v1658
        %vm1660 = vweird.f32 %v1654
        %vm1661 = vweird.f32 %v1655
        %vm1662 = vmor %vm1660, %vm1661
        %v1663 = vsel %vm1662, %v1655, %v1659
        %v1664 = vand.u32 2147483647, %v1654
        %vm1665 = vcmp.eq.f32.partialorder %v1664, 8.507059e+37
        %v1666 = vand.u32 %v1654, 2147483648
        %v1667 = vor.u32 1.1754944e-38, %v1666
        %v1668 = vsel %vm1665, %v1667, %v1663
        %v1669 = vmul.f32 %v1644, %v1668
        %v1670 = vmin.f32 %v1669, 1.0
        %v1671 = vmax.f32 %v1670, -1.0
        %v1672 = vmul.f32 %v477, %v477
        %v1673 = vmin.f32 16.0, %v1672
        %v1674 = vmul.f32 %v1673, 2.1237322e-06
        %v1675 = vadd.f32 %v1674, 0.00028619796
        %v1676 = vmul.f32 %v1673, %v1675
        %v1677 = vadd.f32 %v1676, 0.0036580483
        %v1678 = vmul.f32 %v1673, %v1677
        %v1679 = vadd.f32 %v1678, 0.05243302
        %v1680 = vmul.f32 %v1673, %v1679
        %v1681 = vadd.f32 %v1680, 0.18741608
        %v1682 = vmul.f32 %v1673, %v1681
        %v1683 = vadd.f32 %v1682, 1.1283791
        %v1684 = vmul.f32 %v477, %v1683
        %v1685 = vmul.f32 %v1673, 3.8918573e-05
        %v1686 = vadd.f32 %v1685, 0.001143296
        %v1687 = vmul.f32 %v1673, %v1686
        %v1688 = vadd.f32 %v1687, 0.014752088
        %v1689 = vmul.f32 %v1673, %v1688
        %v1690 = vadd.f32 %v1689, 0.112945676
        %v1691 = vmul.f32 %v1673, %v1690
        %v1692 = vadd.f32 %v1691, 0.4994258
        %v1693 = vmul.f32 %v1673, %v1692
        %v1694 = vadd.f32 %v1693, 1.0
        %v1695 = vrcp.pop %v1694
        %v1696 = vmul.f32 %v1694, %v1695
        %v1697 = vsub.f32 1.0, %v1696
        %v1698 = vmul.f32 %v1695, %v1697
        %v1699 = vadd.f32 %v1695, %v1698
        %vm1700 = vweird.f32 %v1694
        %vm1701 = vweird.f32 %v1695
        %vm1702 = vmor %vm1700, %vm1701
        %v1703 = vsel %vm1702, %v1695, %v1699
        %v1704 = vand.u32 2147483647, %v1694
        %vm1705 = vcmp.eq.f32.partialorder %v1704, 8.507059e+37
        %v1706 = vand.u32 %v1694, 2147483648
        %v1707 = vor.u32 1.1754944e-38, %v1706
        %v1708 = vsel %vm1705, %v1707, %v1703
        %v1709 = vmul.f32 %v1684, %v1708
        %v1710 = vmin.f32 %v1709, 1.0
        %v1711 = vmax.f32 %v1710, -1.0
        %v1712 = vmul.f32 %v478, %v478
        %v1713 = vmin.f32 16.0, %v1712
        %v1714 = vmul.f32 %v1713, 2.1237322e-06
        %v1715 = vadd.f32 %v1714, 0.00028619796
        %v1716 = vmul.f32 %v1713, %v1715
        %v1717 = vadd.f32 %v1716, 0.0036580483
        %v1718 = vmul.f32 %v1713, %v1717
        %v1719 = vadd.f32 %v1718, 0.05243302
        %v1720 = vmul.f32 %v1713, %v1719
        %v1721 = vadd.f32 %v1720, 0.18741608
        %v1722 = vmul.f32 %v1713, %v1721
        %v1723 = vadd.f32 %v1722, 1.1283791
        %v1724 = vmul.f32 %v478, %v1723
        %v1725 = vmul.f32 %v1713, 3.8918573e-05
        %v1726 = vadd.f32 %v1725, 0.001143296
        %v1727 = vmul.f32 %v1713, %v1726
        %v1728 = vadd.f32 %v1727, 0.014752088
        %v1729 = vmul.f32 %v1713, %v1728
        %v1730 = vadd.f32 %v1729, 0.112945676
        %v1731 = vmul.f32 %v1713, %v1730
        %v1732 = vadd.f32 %v1731, 0.4994258
        %v1733 = vmul.f32 %v1713, %v1732
        %v1734 = vadd.f32 %v1733, 1.0
        %v1735 = vrcp.pop %v1734
        %v1736 = vmul.f32 %v1734, %v1735
        %v1737 = vsub.f32 1.0, %v1736
        %v1738 = vmul.f32 %v1735, %v1737
        %v1739 = vadd.f32 %v1735, %v1738
        %vm1740 = vweird.f32 %v1734
        %vm1741 = vweird.f32 %v1735
        %vm1742 = vmor %vm1740, %vm1741
        %v1743 = vsel %vm1742, %v1735, %v1739
        %v1744 = vand.u32 2147483647, %v1734
        %vm1745 = vcmp.eq.f32.partialorder %v1744, 8.507059e+37
        %v1746 = vand.u32 %v1734, 2147483648
        %v1747 = vor.u32 1.1754944e-38, %v1746
        %v1748 = vsel %vm1745, %v1747, %v1743
        %v1749 = vmul.f32 %v1724, %v1748
        %v1750 = vmin.f32 %v1749, 1.0
        %v1751 = vmax.f32 %v1750, -1.0
        %v1752 = vmul.f32 %v479, %v479
        %v1753 = vmin.f32 16.0, %v1752
        %v1754 = vmul.f32 %v1753, 2.1237322e-06
        %v1755 = vadd.f32 %v1754, 0.00028619796
        %v1756 = vmul.f32 %v1753, %v1755
        %v1757 = vadd.f32 %v1756, 0.0036580483
        %v1758 = vmul.f32 %v1753, %v1757
        %v1759 = vadd.f32 %v1758, 0.05243302
        %v1760 = vmul.f32 %v1753, %v1759
        %v1761 = vadd.f32 %v1760, 0.18741608
        %v1762 = vmul.f32 %v1753, %v1761
        %v1763 = vadd.f32 %v1762, 1.1283791
        %v1764 = vmul.f32 %v479, %v1763
        %v1765 = vmul.f32 %v1753, 3.8918573e-05
        %v1766 = vadd.f32 %v1765, 0.001143296
        %v1767 = vmul.f32 %v1753, %v1766
        %v1768 = vadd.f32 %v1767, 0.014752088
        %v1769 = vmul.f32 %v1753, %v1768
        %v1770 = vadd.f32 %v1769, 0.112945676
        %v1771 = vmul.f32 %v1753, %v1770
        %v1772 = vadd.f32 %v1771, 0.4994258
        %v1773 = vmul.f32 %v1753, %v1772
        %v1774 = vadd.f32 %v1773, 1.0
        %v1775 = vrcp.pop %v1774
        %v1776 = vmul.f32 %v1774, %v1775
        %v1777 = vsub.f32 1.0, %v1776
        %v1778 = vmul.f32 %v1775, %v1777
        %v1779 = vadd.f32 %v1775, %v1778
        %vm1780 = vweird.f32 %v1774
        %vm1781 = vweird.f32 %v1775
        %vm1782 = vmor %vm1780, %vm1781
        %v1783 = vsel %vm1782, %v1775, %v1779
        %v1784 = vand.u32 2147483647, %v1774
        %vm1785 = vcmp.eq.f32.partialorder %v1784, 8.507059e+37
        %v1786 = vand.u32 %v1774, 2147483648
        %v1787 = vor.u32 1.1754944e-38, %v1786
        %v1788 = vsel %vm1785, %v1787, %v1783
        %v1789 = vmul.f32 %v1764, %v1788
        %v1790 = vmin.f32 %v1789, 1.0
        %v1791 = vmax.f32 %v1790, -1.0
        %v1792 = vmul.f32 %v480, %v480
        %v1793 = vmin.f32 16.0, %v1792
        %v1794 = vmul.f32 %v1793, 2.1237322e-06
        %v1795 = vadd.f32 %v1794, 0.00028619796
        %v1796 = vmul.f32 %v1793, %v1795
        %v1797 = vadd.f32 %v1796, 0.0036580483
        %v1798 = vmul.f32 %v1793, %v1797
        %v1799 = vadd.f32 %v1798, 0.05243302
        %v1800 = vmul.f32 %v1793, %v1799
        %v1801 = vadd.f32 %v1800, 0.18741608
        %v1802 = vmul.f32 %v1793, %v1801
        %v1803 = vadd.f32 %v1802, 1.1283791
        %v1804 = vmul.f32 %v480, %v1803
        %v1805 = vmul.f32 %v1793, 3.8918573e-05
        %v1806 = vadd.f32 %v1805, 0.001143296
        %v1807 = vmul.f32 %v1793, %v1806
        %v1808 = vadd.f32 %v1807, 0.014752088
        %v1809 = vmul.f32 %v1793, %v1808
        %v1810 = vadd.f32 %v1809, 0.112945676
        %v1811 = vmul.f32 %v1793, %v1810
        %v1812 = vadd.f32 %v1811, 0.4994258
        %v1813 = vmul.f32 %v1793, %v1812
        %v1814 = vadd.f32 %v1813, 1.0
        %v1815 = vrcp.pop %v1814
        %v1816 = vmul.f32 %v1814, %v1815
        %v1817 = vsub.f32 1.0, %v1816
        %v1818 = vmul.f32 %v1815, %v1817
        %v1819 = vadd.f32 %v1815, %v1818
        %vm1820 = vweird.f32 %v1814
        %vm1821 = vweird.f32 %v1815
        %vm1822 = vmor %vm1820, %vm1821
        %v1823 = vsel %vm1822, %v1815, %v1819
        %v1824 = vand.u32 2147483647, %v1814
        %vm1825 = vcmp.eq.f32.partialorder %v1824, 8.507059e+37
        %v1826 = vand.u32 %v1814, 2147483648
        %v1827 = vor.u32 1.1754944e-38, %v1826
        %v1828 = vsel %vm1825, %v1827, %v1823
        %v1829 = vmul.f32 %v1804, %v1828
        %v1830 = vmin.f32 %v1829, 1.0
        %v1831 = vmax.f32 %v1830, -1.0
        %v1832 = vmul.f32 %v481, %v481
        %v1833 = vmin.f32 16.0, %v1832
        %v1834 = vmul.f32 %v1833, 2.1237322e-06
        %v1835 = vadd.f32 %v1834, 0.00028619796
        %v1836 = vmul.f32 %v1833, %v1835
        %v1837 = vadd.f32 %v1836, 0.0036580483
        %v1838 = vmul.f32 %v1833, %v1837
        %v1839 = vadd.f32 %v1838, 0.05243302
        %v1840 = vmul.f32 %v1833, %v1839
        %v1841 = vadd.f32 %v1840, 0.18741608
        %v1842 = vmul.f32 %v1833, %v1841
        %v1843 = vadd.f32 %v1842, 1.1283791
        %v1844 = vmul.f32 %v481, %v1843
        %v1845 = vmul.f32 %v1833, 3.8918573e-05
        %v1846 = vadd.f32 %v1845, 0.001143296
        %v1847 = vmul.f32 %v1833, %v1846
        %v1848 = vadd.f32 %v1847, 0.014752088
        %v1849 = vmul.f32 %v1833, %v1848
        %v1850 = vadd.f32 %v1849, 0.112945676
        %v1851 = vmul.f32 %v1833, %v1850
        %v1852 = vadd.f32 %v1851, 0.4994258
        %v1853 = vmul.f32 %v1833, %v1852
        %v1854 = vadd.f32 %v1853, 1.0
        %v1855 = vrcp.pop %v1854
        %v1856 = vmul.f32 %v1854, %v1855
        %v1857 = vsub.f32 1.0, %v1856
        %v1858 = vmul.f32 %v1855, %v1857
        %v1859 = vadd.f32 %v1855, %v1858
        %vm1860 = vweird.f32 %v1854
        %vm1861 = vweird.f32 %v1855
        %vm1862 = vmor %vm1860, %vm1861
        %v1863 = vsel %vm1862, %v1855, %v1859
        %v1864 = vand.u32 2147483647, %v1854
        %vm1865 = vcmp.eq.f32.partialorder %v1864, 8.507059e+37
        %v1866 = vand.u32 %v1854, 2147483648
        %v1867 = vor.u32 1.1754944e-38, %v1866
        %v1868 = vsel %vm1865, %v1867, %v1863
        %v1869 = vmul.f32 %v1844, %v1868
        %v1870 = vmin.f32 %v1869, 1.0
        %v1871 = vmax.f32 %v1870, -1.0
        %v1872 = vmul.f32 %v482, %v482
        %v1873 = vmin.f32 16.0, %v1872
        %v1874 = vmul.f32 %v1873, 2.1237322e-06
        %v1875 = vadd.f32 %v1874, 0.00028619796
        %v1876 = vmul.f32 %v1873, %v1875
        %v1877 = vadd.f32 %v1876, 0.0036580483
        %v1878 = vmul.f32 %v1873, %v1877
        %v1879 = vadd.f32 %v1878, 0.05243302
        %v1880 = vmul.f32 %v1873, %v1879
        %v1881 = vadd.f32 %v1880, 0.18741608
        %v1882 = vmul.f32 %v1873, %v1881
        %v1883 = vadd.f32 %v1882, 1.1283791
        %v1884 = vmul.f32 %v482, %v1883
        %v1885 = vmul.f32 %v1873, 3.8918573e-05
        %v1886 = vadd.f32 %v1885, 0.001143296
        %v1887 = vmul.f32 %v1873, %v1886
        %v1888 = vadd.f32 %v1887, 0.014752088
        %v1889 = vmul.f32 %v1873, %v1888
        %v1890 = vadd.f32 %v1889, 0.112945676
        %v1891 = vmul.f32 %v1873, %v1890
        %v1892 = vadd.f32 %v1891, 0.4994258
        %v1893 = vmul.f32 %v1873, %v1892
        %v1894 = vadd.f32 %v1893, 1.0
        %v1895 = vrcp.pop %v1894
        %v1896 = vmul.f32 %v1894, %v1895
        %v1897 = vsub.f32 1.0, %v1896
        %v1898 = vmul.f32 %v1895, %v1897
        %v1899 = vadd.f32 %v1895, %v1898
        %vm1900 = vweird.f32 %v1894
        %vm1901 = vweird.f32 %v1895
        %vm1902 = vmor %vm1900, %vm1901
        %v1903 = vsel %vm1902, %v1895, %v1899
        %v1904 = vand.u32 2147483647, %v1894
        %vm1905 = vcmp.eq.f32.partialorder %v1904, 8.507059e+37
        %v1906 = vand.u32 %v1894, 2147483648
        %v1907 = vor.u32 1.1754944e-38, %v1906
        %v1908 = vsel %vm1905, %v1907, %v1903
        %v1909 = vmul.f32 %v1884, %v1908
        %v1910 = vmin.f32 %v1909, 1.0
        %v1911 = vmax.f32 %v1910, -1.0
        %v1912 = vmul.f32 %v483, %v483
        %v1913 = vmin.f32 16.0, %v1912
        %v1914 = vmul.f32 %v1913, 2.1237322e-06
        %v1915 = vadd.f32 %v1914, 0.00028619796
        %v1916 = vmul.f32 %v1913, %v1915
        %v1917 = vadd.f32 %v1916, 0.0036580483
        %v1918 = vmul.f32 %v1913, %v1917
        %v1919 = vadd.f32 %v1918, 0.05243302
        %v1920 = vmul.f32 %v1913, %v1919
        %v1921 = vadd.f32 %v1920, 0.18741608
        %v1922 = vmul.f32 %v1913, %v1921
        %v1923 = vadd.f32 %v1922, 1.1283791
        %v1924 = vmul.f32 %v483, %v1923
        %v1925 = vmul.f32 %v1913, 3.8918573e-05
        %v1926 = vadd.f32 %v1925, 0.001143296
        %v1927 = vmul.f32 %v1913, %v1926
        %v1928 = vadd.f32 %v1927, 0.014752088
        %v1929 = vmul.f32 %v1913, %v1928
        %v1930 = vadd.f32 %v1929, 0.112945676
        %v1931 = vmul.f32 %v1913, %v1930
        %v1932 = vadd.f32 %v1931, 0.4994258
        %v1933 = vmul.f32 %v1913, %v1932
        %v1934 = vadd.f32 %v1933, 1.0
        %v1935 = vrcp.pop %v1934
        %v1936 = vmul.f32 %v1934, %v1935
        %v1937 = vsub.f32 1.0, %v1936
        %v1938 = vmul.f32 %v1935, %v1937
        %v1939 = vadd.f32 %v1935, %v1938
        %vm1940 = vweird.f32 %v1934
        %vm1941 = vweird.f32 %v1935
        %vm1942 = vmor %vm1940, %vm1941
        %v1943 = vsel %vm1942, %v1935, %v1939
        %v1944 = vand.u32 2147483647, %v1934
        %vm1945 = vcmp.eq.f32.partialorder %v1944, 8.507059e+37
        %v1946 = vand.u32 %v1934, 2147483648
        %v1947 = vor.u32 1.1754944e-38, %v1946
        %v1948 = vsel %vm1945, %v1947, %v1943
        %v1949 = vmul.f32 %v1924, %v1948
        %v1950 = vmin.f32 %v1949, 1.0
        %v1951 = vmax.f32 %v1950, -1.0
        %v1952 = vmul.f32 %v484, %v484
        %v1953 = vmin.f32 16.0, %v1952
        %v1954 = vmul.f32 %v1953, 2.1237322e-06
        %v1955 = vadd.f32 %v1954, 0.00028619796
        %v1956 = vmul.f32 %v1953, %v1955
        %v1957 = vadd.f32 %v1956, 0.0036580483
        %v1958 = vmul.f32 %v1953, %v1957
        %v1959 = vadd.f32 %v1958, 0.05243302
        %v1960 = vmul.f32 %v1953, %v1959
        %v1961 = vadd.f32 %v1960, 0.18741608
        %v1962 = vmul.f32 %v1953, %v1961
        %v1963 = vadd.f32 %v1962, 1.1283791
        %v1964 = vmul.f32 %v484, %v1963
        %v1965 = vmul.f32 %v1953, 3.8918573e-05
        %v1966 = vadd.f32 %v1965, 0.001143296
        %v1967 = vmul.f32 %v1953, %v1966
        %v1968 = vadd.f32 %v1967, 0.014752088
        %v1969 = vmul.f32 %v1953, %v1968
        %v1970 = vadd.f32 %v1969, 0.112945676
        %v1971 = vmul.f32 %v1953, %v1970
        %v1972 = vadd.f32 %v1971, 0.4994258
        %v1973 = vmul.f32 %v1953, %v1972
        %v1974 = vadd.f32 %v1973, 1.0
        %v1975 = vrcp.pop %v1974
        %v1976 = vmul.f32 %v1974, %v1975
        %v1977 = vsub.f32 1.0, %v1976
        %v1978 = vmul.f32 %v1975, %v1977
        %v1979 = vadd.f32 %v1975, %v1978
        %vm1980 = vweird.f32 %v1974
        %vm1981 = vweird.f32 %v1975
        %vm1982 = vmor %vm1980, %vm1981
        %v1983 = vsel %vm1982, %v1975, %v1979
        %v1984 = vand.u32 2147483647, %v1974
        %vm1985 = vcmp.eq.f32.partialorder %v1984, 8.507059e+37
        %v1986 = vand.u32 %v1974, 2147483648
        %v1987 = vor.u32 1.1754944e-38, %v1986
        %v1988 = vsel %vm1985, %v1987, %v1983
        %v1989 = vmul.f32 %v1964, %v1988
        %v1990 = vmin.f32 %v1989, 1.0
        %v1991 = vmax.f32 %v1990, -1.0
        %v1992 = vmul.f32 %v485, %v485
        %v1993 = vmin.f32 16.0, %v1992
        %v1994 = vmul.f32 %v1993, 2.1237322e-06
        %v1995 = vadd.f32 %v1994, 0.00028619796
        %v1996 = vmul.f32 %v1993, %v1995
        %v1997 = vadd.f32 %v1996, 0.0036580483
        %v1998 = vmul.f32 %v1993, %v1997
        %v1999 = vadd.f32 %v1998, 0.05243302
        %v2000 = vmul.f32 %v1993, %v1999
        %v2001 = vadd.f32 %v2000, 0.18741608
        %v2002 = vmul.f32 %v1993, %v2001
        %v2003 = vadd.f32 %v2002, 1.1283791
        %v2004 = vmul.f32 %v485, %v2003
        %v2005 = vmul.f32 %v1993, 3.8918573e-05
        %v2006 = vadd.f32 %v2005, 0.001143296
        %v2007 = vmul.f32 %v1993, %v2006
        %v2008 = vadd.f32 %v2007, 0.014752088
        %v2009 = vmul.f32 %v1993, %v2008
        %v2010 = vadd.f32 %v2009, 0.112945676
        %v2011 = vmul.f32 %v1993, %v2010
        %v2012 = vadd.f32 %v2011, 0.4994258
        %v2013 = vmul.f32 %v1993, %v2012
        %v2014 = vadd.f32 %v2013, 1.0
        %v2015 = vrcp.pop %v2014
        %v2016 = vmul.f32 %v2014, %v2015
        %v2017 = vsub.f32 1.0, %v2016
        %v2018 = vmul.f32 %v2015, %v2017
        %v2019 = vadd.f32 %v2015, %v2018
        %vm2020 = vweird.f32 %v2014
        %vm2021 = vweird.f32 %v2015
        %vm2022 = vmor %vm2020, %vm2021
        %v2023 = vsel %vm2022, %v2015, %v2019
        %v2024 = vand.u32 2147483647, %v2014
        %vm2025 = vcmp.eq.f32.partialorder %v2024, 8.507059e+37
        %v2026 = vand.u32 %v2014, 2147483648
        %v2027 = vor.u32 1.1754944e-38, %v2026
        %v2028 = vsel %vm2025, %v2027, %v2023
        %v2029 = vmul.f32 %v2004, %v2028
        %v2030 = vmin.f32 %v2029, 1.0
        %v2031 = vmax.f32 %v2030, -1.0
        %v2032 = vmul.f32 %v486, %v486
        %v2033 = vmin.f32 16.0, %v2032
        %v2034 = vmul.f32 %v2033, 2.1237322e-06
        %v2035 = vadd.f32 %v2034, 0.00028619796
        %v2036 = vmul.f32 %v2033, %v2035
        %v2037 = vadd.f32 %v2036, 0.0036580483
        %v2038 = vmul.f32 %v2033, %v2037
        %v2039 = vadd.f32 %v2038, 0.05243302
        %v2040 = vmul.f32 %v2033, %v2039
        %v2041 = vadd.f32 %v2040, 0.18741608
        %v2042 = vmul.f32 %v2033, %v2041
        %v2043 = vadd.f32 %v2042, 1.1283791
        %v2044 = vmul.f32 %v486, %v2043
        %v2045 = vmul.f32 %v2033, 3.8918573e-05
        %v2046 = vadd.f32 %v2045, 0.001143296
        %v2047 = vmul.f32 %v2033, %v2046
        %v2048 = vadd.f32 %v2047, 0.014752088
        %v2049 = vmul.f32 %v2033, %v2048
        %v2050 = vadd.f32 %v2049, 0.112945676
        %v2051 = vmul.f32 %v2033, %v2050
        %v2052 = vadd.f32 %v2051, 0.4994258
        %v2053 = vmul.f32 %v2033, %v2052
        %v2054 = vadd.f32 %v2053, 1.0
        %v2055 = vrcp.pop %v2054
        %v2056 = vmul.f32 %v2054, %v2055
        %v2057 = vsub.f32 1.0, %v2056
        %v2058 = vmul.f32 %v2055, %v2057
        %v2059 = vadd.f32 %v2055, %v2058
        %vm2060 = vweird.f32 %v2054
        %vm2061 = vweird.f32 %v2055
        %vm2062 = vmor %vm2060, %vm2061
        %v2063 = vsel %vm2062, %v2055, %v2059
        %v2064 = vand.u32 2147483647, %v2054
        %vm2065 = vcmp.eq.f32.partialorder %v2064, 8.507059e+37
        %v2066 = vand.u32 %v2054, 2147483648
        %v2067 = vor.u32 1.1754944e-38, %v2066
        %v2068 = vsel %vm2065, %v2067, %v2063
        %v2069 = vmul.f32 %v2044, %v2068
        %v2070 = vmin.f32 %v2069, 1.0
        %v2071 = vmax.f32 %v2070, -1.0
        %v2072 = vmul.f32 %v487, %v487
        %v2073 = vmin.f32 16.0, %v2072
        %v2074 = vmul.f32 %v2073, 2.1237322e-06
        %v2075 = vadd.f32 %v2074, 0.00028619796
        %v2076 = vmul.f32 %v2073, %v2075
        %v2077 = vadd.f32 %v2076, 0.0036580483
        %v2078 = vmul.f32 %v2073, %v2077
        %v2079 = vadd.f32 %v2078, 0.05243302
        %v2080 = vmul.f32 %v2073, %v2079
        %v2081 = vadd.f32 %v2080, 0.18741608
        %v2082 = vmul.f32 %v2073, %v2081
        %v2083 = vadd.f32 %v2082, 1.1283791
        %v2084 = vmul.f32 %v487, %v2083
        %v2085 = vmul.f32 %v2073, 3.8918573e-05
        %v2086 = vadd.f32 %v2085, 0.001143296
        %v2087 = vmul.f32 %v2073, %v2086
        %v2088 = vadd.f32 %v2087, 0.014752088
        %v2089 = vmul.f32 %v2073, %v2088
        %v2090 = vadd.f32 %v2089, 0.112945676
        %v2091 = vmul.f32 %v2073, %v2090
        %v2092 = vadd.f32 %v2091, 0.4994258
        %v2093 = vmul.f32 %v2073, %v2092
        %v2094 = vadd.f32 %v2093, 1.0
        %v2095 = vrcp.pop %v2094
        %v2096 = vmul.f32 %v2094, %v2095
        %v2097 = vsub.f32 1.0, %v2096
        %v2098 = vmul.f32 %v2095, %v2097
        %v2099 = vadd.f32 %v2095, %v2098
        %vm2100 = vweird.f32 %v2094
        %vm2101 = vweird.f32 %v2095
        %vm2102 = vmor %vm2100, %vm2101
        %v2103 = vsel %vm2102, %v2095, %v2099
        %v2104 = vand.u32 2147483647, %v2094
        %vm2105 = vcmp.eq.f32.partialorder %v2104, 8.507059e+37
        %v2106 = vand.u32 %v2094, 2147483648
        %v2107 = vor.u32 1.1754944e-38, %v2106
        %v2108 = vsel %vm2105, %v2107, %v2103
        %v2109 = vmul.f32 %v2084, %v2108
        %v2110 = vmin.f32 %v2109, 1.0
        %v2111 = vmax.f32 %v2110, -1.0
        %v2112 = vmul.f32 %v488, %v488
        %v2113 = vmin.f32 16.0, %v2112
        %v2114 = vmul.f32 %v2113, 2.1237322e-06
        %v2115 = vadd.f32 %v2114, 0.00028619796
        %v2116 = vmul.f32 %v2113, %v2115
        %v2117 = vadd.f32 %v2116, 0.0036580483
        %v2118 = vmul.f32 %v2113, %v2117
        %v2119 = vadd.f32 %v2118, 0.05243302
        %v2120 = vmul.f32 %v2113, %v2119
        %v2121 = vadd.f32 %v2120, 0.18741608
        %v2122 = vmul.f32 %v2113, %v2121
        %v2123 = vadd.f32 %v2122, 1.1283791
        %v2124 = vmul.f32 %v488, %v2123
        %v2125 = vmul.f32 %v2113, 3.8918573e-05
        %v2126 = vadd.f32 %v2125, 0.001143296
        %v2127 = vmul.f32 %v2113, %v2126
        %v2128 = vadd.f32 %v2127, 0.014752088
        %v2129 = vmul.f32 %v2113, %v2128
        %v2130 = vadd.f32 %v2129, 0.112945676
        %v2131 = vmul.f32 %v2113, %v2130
        %v2132 = vadd.f32 %v2131, 0.4994258
        %v2133 = vmul.f32 %v2113, %v2132
        %v2134 = vadd.f32 %v2133, 1.0
        %v2135 = vrcp.pop %v2134
        %v2136 = vmul.f32 %v2134, %v2135
        %v2137 = vsub.f32 1.0, %v2136
        %v2138 = vmul.f32 %v2135, %v2137
        %v2139 = vadd.f32 %v2135, %v2138
        %vm2140 = vweird.f32 %v2134
        %vm2141 = vweird.f32 %v2135
        %vm2142 = vmor %vm2140, %vm2141
        %v2143 = vsel %vm2142, %v2135, %v2139
        %v2144 = vand.u32 2147483647, %v2134
        %vm2145 = vcmp.eq.f32.partialorder %v2144, 8.507059e+37
        %v2146 = vand.u32 %v2134, 2147483648
        %v2147 = vor.u32 1.1754944e-38, %v2146
        %v2148 = vsel %vm2145, %v2147, %v2143
        %v2149 = vmul.f32 %v2124, %v2148
        %v2150 = vmin.f32 %v2149, 1.0
        %v2151 = vmax.f32 %v2150, -1.0
        %v2152 = vmul.f32 %v489, %v489
        %v2153 = vmin.f32 16.0, %v2152
        %v2154 = vmul.f32 %v2153, 2.1237322e-06
        %v2155 = vadd.f32 %v2154, 0.00028619796
        %v2156 = vmul.f32 %v2153, %v2155
        %v2157 = vadd.f32 %v2156, 0.0036580483
        %v2158 = vmul.f32 %v2153, %v2157
        %v2159 = vadd.f32 %v2158, 0.05243302
        %v2160 = vmul.f32 %v2153, %v2159
        %v2161 = vadd.f32 %v2160, 0.18741608
        %v2162 = vmul.f32 %v2153, %v2161
        %v2163 = vadd.f32 %v2162, 1.1283791
        %v2164 = vmul.f32 %v489, %v2163
        %v2165 = vmul.f32 %v2153, 3.8918573e-05
        %v2166 = vadd.f32 %v2165, 0.001143296
        %v2167 = vmul.f32 %v2153, %v2166
        %v2168 = vadd.f32 %v2167, 0.014752088
        %v2169 = vmul.f32 %v2153, %v2168
        %v2170 = vadd.f32 %v2169, 0.112945676
        %v2171 = vmul.f32 %v2153, %v2170
        %v2172 = vadd.f32 %v2171, 0.4994258
        %v2173 = vmul.f32 %v2153, %v2172
        %v2174 = vadd.f32 %v2173, 1.0
        %v2175 = vrcp.pop %v2174
        %v2176 = vmul.f32 %v2174, %v2175
        %v2177 = vsub.f32 1.0, %v2176
        %v2178 = vmul.f32 %v2175, %v2177
        %v2179 = vadd.f32 %v2175, %v2178
        %vm2180 = vweird.f32 %v2174
        %vm2181 = vweird.f32 %v2175
        %vm2182 = vmor %vm2180, %vm2181
        %v2183 = vsel %vm2182, %v2175, %v2179
        %v2184 = vand.u32 2147483647, %v2174
        %vm2185 = vcmp.eq.f32.partialorder %v2184, 8.507059e+37
        %v2186 = vand.u32 %v2174, 2147483648
        %v2187 = vor.u32 1.1754944e-38, %v2186
        %v2188 = vsel %vm2185, %v2187, %v2183
        %v2189 = vmul.f32 %v2164, %v2188
        %v2190 = vmin.f32 %v2189, 1.0
        %v2191 = vmax.f32 %v2190, -1.0
        %v2192 = vmul.f32 %v490, %v490
        %v2193 = vmin.f32 16.0, %v2192
        %v2194 = vmul.f32 %v2193, 2.1237322e-06
        %v2195 = vadd.f32 %v2194, 0.00028619796
        %v2196 = vmul.f32 %v2193, %v2195
        %v2197 = vadd.f32 %v2196, 0.0036580483
        %v2198 = vmul.f32 %v2193, %v2197
        %v2199 = vadd.f32 %v2198, 0.05243302
        %v2200 = vmul.f32 %v2193, %v2199
        %v2201 = vadd.f32 %v2200, 0.18741608
        %v2202 = vmul.f32 %v2193, %v2201
        %v2203 = vadd.f32 %v2202, 1.1283791
        %v2204 = vmul.f32 %v490, %v2203
        %v2205 = vmul.f32 %v2193, 3.8918573e-05
        %v2206 = vadd.f32 %v2205, 0.001143296
        %v2207 = vmul.f32 %v2193, %v2206
        %v2208 = vadd.f32 %v2207, 0.014752088
        %v2209 = vmul.f32 %v2193, %v2208
        %v2210 = vadd.f32 %v2209, 0.112945676
        %v2211 = vmul.f32 %v2193, %v2210
        %v2212 = vadd.f32 %v2211, 0.4994258
        %v2213 = vmul.f32 %v2193, %v2212
        %v2214 = vadd.f32 %v2213, 1.0
        %v2215 = vrcp.pop %v2214
        %v2216 = vmul.f32 %v2214, %v2215
        %v2217 = vsub.f32 1.0, %v2216
        %v2218 = vmul.f32 %v2215, %v2217
        %v2219 = vadd.f32 %v2215, %v2218
        %vm2220 = vweird.f32 %v2214
        %vm2221 = vweird.f32 %v2215
        %vm2222 = vmor %vm2220, %vm2221
        %v2223 = vsel %vm2222, %v2215, %v2219
        %v2224 = vand.u32 2147483647, %v2214
        %vm2225 = vcmp.eq.f32.partialorder %v2224, 8.507059e+37
        %v2226 = vand.u32 %v2214, 2147483648
        %v2227 = vor.u32 1.1754944e-38, %v2226
        %v2228 = vsel %vm2225, %v2227, %v2223
        %v2229 = vmul.f32 %v2204, %v2228
        %v2230 = vmin.f32 %v2229, 1.0
        %v2231 = vmax.f32 %v2230, -1.0
        %v2232 = vmul.f32 %v491, %v491
        %v2233 = vmin.f32 16.0, %v2232
        %v2234 = vmul.f32 %v2233, 2.1237322e-06
        %v2235 = vadd.f32 %v2234, 0.00028619796
        %v2236 = vmul.f32 %v2233, %v2235
        %v2237 = vadd.f32 %v2236, 0.0036580483
        %v2238 = vmul.f32 %v2233, %v2237
        %v2239 = vadd.f32 %v2238, 0.05243302
        %v2240 = vmul.f32 %v2233, %v2239
        %v2241 = vadd.f32 %v2240, 0.18741608
        %v2242 = vmul.f32 %v2233, %v2241
        %v2243 = vadd.f32 %v2242, 1.1283791
        %v2244 = vmul.f32 %v491, %v2243
        %v2245 = vmul.f32 %v2233, 3.8918573e-05
        %v2246 = vadd.f32 %v2245, 0.001143296
        %v2247 = vmul.f32 %v2233, %v2246
        %v2248 = vadd.f32 %v2247, 0.014752088
        %v2249 = vmul.f32 %v2233, %v2248
        %v2250 = vadd.f32 %v2249, 0.112945676
        %v2251 = vmul.f32 %v2233, %v2250
        %v2252 = vadd.f32 %v2251, 0.4994258
        %v2253 = vmul.f32 %v2233, %v2252
        %v2254 = vadd.f32 %v2253, 1.0
        %v2255 = vrcp.pop %v2254
        %v2256 = vmul.f32 %v2254, %v2255
        %v2257 = vsub.f32 1.0, %v2256
        %v2258 = vmul.f32 %v2255, %v2257
        %v2259 = vadd.f32 %v2255, %v2258
        %vm2260 = vweird.f32 %v2254
        %vm2261 = vweird.f32 %v2255
        %vm2262 = vmor %vm2260, %vm2261
        %v2263 = vsel %vm2262, %v2255, %v2259
        %v2264 = vand.u32 2147483647, %v2254
        %vm2265 = vcmp.eq.f32.partialorder %v2264, 8.507059e+37
        %v2266 = vand.u32 %v2254, 2147483648
        %v2267 = vor.u32 1.1754944e-38, %v2266
        %v2268 = vsel %vm2265, %v2267, %v2263
        %v2269 = vmul.f32 %v2244, %v2268
        %v2270 = vmin.f32 %v2269, 1.0
        %v2271 = vmax.f32 %v2270, -1.0
        %v2272 = vmul.f32 %v492, %v492
        %v2273 = vmin.f32 16.0, %v2272
        %v2274 = vmul.f32 %v2273, 2.1237322e-06
        %v2275 = vadd.f32 %v2274, 0.00028619796
        %v2276 = vmul.f32 %v2273, %v2275
        %v2277 = vadd.f32 %v2276, 0.0036580483
        %v2278 = vmul.f32 %v2273, %v2277
        %v2279 = vadd.f32 %v2278, 0.05243302
        %v2280 = vmul.f32 %v2273, %v2279
        %v2281 = vadd.f32 %v2280, 0.18741608
        %v2282 = vmul.f32 %v2273, %v2281
        %v2283 = vadd.f32 %v2282, 1.1283791
        %v2284 = vmul.f32 %v492, %v2283
        %v2285 = vmul.f32 %v2273, 3.8918573e-05
        %v2286 = vadd.f32 %v2285, 0.001143296
        %v2287 = vmul.f32 %v2273, %v2286
        %v2288 = vadd.f32 %v2287, 0.014752088
        %v2289 = vmul.f32 %v2273, %v2288
        %v2290 = vadd.f32 %v2289, 0.112945676
        %v2291 = vmul.f32 %v2273, %v2290
        %v2292 = vadd.f32 %v2291, 0.4994258
        %v2293 = vmul.f32 %v2273, %v2292
        %v2294 = vadd.f32 %v2293, 1.0
        %v2295 = vrcp.pop %v2294
        %v2296 = vmul.f32 %v2294, %v2295
        %v2297 = vsub.f32 1.0, %v2296
        %v2298 = vmul.f32 %v2295, %v2297
        %v2299 = vadd.f32 %v2295, %v2298
        %vm2300 = vweird.f32 %v2294
        %vm2301 = vweird.f32 %v2295
        %vm2302 = vmor %vm2300, %vm2301
        %v2303 = vsel %vm2302, %v2295, %v2299
        %v2304 = vand.u32 2147483647, %v2294
        %vm2305 = vcmp.eq.f32.partialorder %v2304, 8.507059e+37
        %v2306 = vand.u32 %v2294, 2147483648
        %v2307 = vor.u32 1.1754944e-38, %v2306
        %v2308 = vsel %vm2305, %v2307, %v2303
        %v2309 = vmul.f32 %v2284, %v2308
        %v2310 = vmin.f32 %v2309, 1.0
        %v2311 = vmax.f32 %v2310, -1.0
        %v2312 = vmul.f32 %v493, %v493
        %v2313 = vmin.f32 16.0, %v2312
        %v2314 = vmul.f32 %v2313, 2.1237322e-06
        %v2315 = vadd.f32 %v2314, 0.00028619796
        %v2316 = vmul.f32 %v2313, %v2315
        %v2317 = vadd.f32 %v2316, 0.0036580483
        %v2318 = vmul.f32 %v2313, %v2317
        %v2319 = vadd.f32 %v2318, 0.05243302
        %v2320 = vmul.f32 %v2313, %v2319
        %v2321 = vadd.f32 %v2320, 0.18741608
        %v2322 = vmul.f32 %v2313, %v2321
        %v2323 = vadd.f32 %v2322, 1.1283791
        %v2324 = vmul.f32 %v493, %v2323
        %v2325 = vmul.f32 %v2313, 3.8918573e-05
        %v2326 = vadd.f32 %v2325, 0.001143296
        %v2327 = vmul.f32 %v2313, %v2326
        %v2328 = vadd.f32 %v2327, 0.014752088
        %v2329 = vmul.f32 %v2313, %v2328
        %v2330 = vadd.f32 %v2329, 0.112945676
        %v2331 = vmul.f32 %v2313, %v2330
        %v2332 = vadd.f32 %v2331, 0.4994258
        %v2333 = vmul.f32 %v2313, %v2332
        %v2334 = vadd.f32 %v2333, 1.0
        %v2335 = vrcp.pop %v2334
        %v2336 = vmul.f32 %v2334, %v2335
        %v2337 = vsub.f32 1.0, %v2336
        %v2338 = vmul.f32 %v2335, %v2337
        %v2339 = vadd.f32 %v2335, %v2338
        %vm2340 = vweird.f32 %v2334
        %vm2341 = vweird.f32 %v2335
        %vm2342 = vmor %vm2340, %vm2341
        %v2343 = vsel %vm2342, %v2335, %v2339
        %v2344 = vand.u32 2147483647, %v2334
        %vm2345 = vcmp.eq.f32.partialorder %v2344, 8.507059e+37
        %v2346 = vand.u32 %v2334, 2147483648
        %v2347 = vor.u32 1.1754944e-38, %v2346
        %v2348 = vsel %vm2345, %v2347, %v2343
        %v2349 = vmul.f32 %v2324, %v2348
        %v2350 = vmin.f32 %v2349, 1.0
        %v2351 = vmax.f32 %v2350, -1.0
        %v2352 = vmul.f32 %v494, %v494
        %v2353 = vmin.f32 16.0, %v2352
        %v2354 = vmul.f32 %v2353, 2.1237322e-06
        %v2355 = vadd.f32 %v2354, 0.00028619796
        %v2356 = vmul.f32 %v2353, %v2355
        %v2357 = vadd.f32 %v2356, 0.0036580483
        %v2358 = vmul.f32 %v2353, %v2357
        %v2359 = vadd.f32 %v2358, 0.05243302
        %v2360 = vmul.f32 %v2353, %v2359
        %v2361 = vadd.f32 %v2360, 0.18741608
        %v2362 = vmul.f32 %v2353, %v2361
        %v2363 = vadd.f32 %v2362, 1.1283791
        %v2364 = vmul.f32 %v494, %v2363
        %v2365 = vmul.f32 %v2353, 3.8918573e-05
        %v2366 = vadd.f32 %v2365, 0.001143296
        %v2367 = vmul.f32 %v2353, %v2366
        %v2368 = vadd.f32 %v2367, 0.014752088
        %v2369 = vmul.f32 %v2353, %v2368
        %v2370 = vadd.f32 %v2369, 0.112945676
        %v2371 = vmul.f32 %v2353, %v2370
        %v2372 = vadd.f32 %v2371, 0.4994258
        %v2373 = vmul.f32 %v2353, %v2372
        %v2374 = vadd.f32 %v2373, 1.0
        %v2375 = vrcp.pop %v2374
        %v2376 = vmul.f32 %v2374, %v2375
        %v2377 = vsub.f32 1.0, %v2376
        %v2378 = vmul.f32 %v2375, %v2377
        %v2379 = vadd.f32 %v2375, %v2378
        %vm2380 = vweird.f32 %v2374
        %vm2381 = vweird.f32 %v2375
        %vm2382 = vmor %vm2380, %vm2381
        %v2383 = vsel %vm2382, %v2375, %v2379
        %v2384 = vand.u32 2147483647, %v2374
        %vm2385 = vcmp.eq.f32.partialorder %v2384, 8.507059e+37
        %v2386 = vand.u32 %v2374, 2147483648
        %v2387 = vor.u32 1.1754944e-38, %v2386
        %v2388 = vsel %vm2385, %v2387, %v2383
        %v2389 = vmul.f32 %v2364, %v2388
        %v2390 = vmin.f32 %v2389, 1.0
        %v2391 = vmax.f32 %v2390, -1.0
        %v2392 = vmul.f32 %v495, %v495
        %v2393 = vmin.f32 16.0, %v2392
        %v2394 = vmul.f32 %v2393, 2.1237322e-06
        %v2395 = vadd.f32 %v2394, 0.00028619796
        %v2396 = vmul.f32 %v2393, %v2395
        %v2397 = vadd.f32 %v2396, 0.0036580483
        %v2398 = vmul.f32 %v2393, %v2397
        %v2399 = vadd.f32 %v2398, 0.05243302
        %v2400 = vmul.f32 %v2393, %v2399
        %v2401 = vadd.f32 %v2400, 0.18741608
        %v2402 = vmul.f32 %v2393, %v2401
        %v2403 = vadd.f32 %v2402, 1.1283791
        %v2404 = vmul.f32 %v495, %v2403
        %v2405 = vmul.f32 %v2393, 3.8918573e-05
        %v2406 = vadd.f32 %v2405, 0.001143296
        %v2407 = vmul.f32 %v2393, %v2406
        %v2408 = vadd.f32 %v2407, 0.014752088
        %v2409 = vmul.f32 %v2393, %v2408
        %v2410 = vadd.f32 %v2409, 0.112945676
        %v2411 = vmul.f32 %v2393, %v2410
        %v2412 = vadd.f32 %v2411, 0.4994258
        %v2413 = vmul.f32 %v2393, %v2412
        %v2414 = vadd.f32 %v2413, 1.0
        %v2415 = vrcp.pop %v2414
        %v2416 = vmul.f32 %v2414, %v2415
        %v2417 = vsub.f32 1.0, %v2416
        %v2418 = vmul.f32 %v2415, %v2417
        %v2419 = vadd.f32 %v2415, %v2418
        %vm2420 = vweird.f32 %v2414
        %vm2421 = vweird.f32 %v2415
        %vm2422 = vmor %vm2420, %vm2421
        %v2423 = vsel %vm2422, %v2415, %v2419
        %v2424 = vand.u32 2147483647, %v2414
        %vm2425 = vcmp.eq.f32.partialorder %v2424, 8.507059e+37
        %v2426 = vand.u32 %v2414, 2147483648
        %v2427 = vor.u32 1.1754944e-38, %v2426
        %v2428 = vsel %vm2425, %v2427, %v2423
        %v2429 = vmul.f32 %v2404, %v2428
        %v2430 = vmin.f32 %v2429, 1.0
        %v2431 = vmax.f32 %v2430, -1.0
        %v2432 = vmul.f32 %v496, %v496
        %v2433 = vmin.f32 16.0, %v2432
        %v2434 = vmul.f32 %v2433, 2.1237322e-06
        %v2435 = vadd.f32 %v2434, 0.00028619796
        %v2436 = vmul.f32 %v2433, %v2435
        %v2437 = vadd.f32 %v2436, 0.0036580483
        %v2438 = vmul.f32 %v2433, %v2437
        %v2439 = vadd.f32 %v2438, 0.05243302
        %v2440 = vmul.f32 %v2433, %v2439
        %v2441 = vadd.f32 %v2440, 0.18741608
        %v2442 = vmul.f32 %v2433, %v2441
        %v2443 = vadd.f32 %v2442, 1.1283791
        %v2444 = vmul.f32 %v496, %v2443
        %v2445 = vmul.f32 %v2433, 3.8918573e-05
        %v2446 = vadd.f32 %v2445, 0.001143296
        %v2447 = vmul.f32 %v2433, %v2446
        %v2448 = vadd.f32 %v2447, 0.014752088
        %v2449 = vmul.f32 %v2433, %v2448
        %v2450 = vadd.f32 %v2449, 0.112945676
        %v2451 = vmul.f32 %v2433, %v2450
        %v2452 = vadd.f32 %v2451, 0.4994258
        %v2453 = vmul.f32 %v2433, %v2452
        %v2454 = vadd.f32 %v2453, 1.0
        %v2455 = vrcp.pop %v2454
        %v2456 = vmul.f32 %v2454, %v2455
        %v2457 = vsub.f32 1.0, %v2456
        %v2458 = vmul.f32 %v2455, %v2457
        %v2459 = vadd.f32 %v2455, %v2458
        %vm2460 = vweird.f32 %v2454
        %vm2461 = vweird.f32 %v2455
        %vm2462 = vmor %vm2460, %vm2461
        %v2463 = vsel %vm2462, %v2455, %v2459
        %v2464 = vand.u32 2147483647, %v2454
        %vm2465 = vcmp.eq.f32.partialorder %v2464, 8.507059e+37
        %v2466 = vand.u32 %v2454, 2147483648
        %v2467 = vor.u32 1.1754944e-38, %v2466
        %v2468 = vsel %vm2465, %v2467, %v2463
        %v2469 = vmul.f32 %v2444, %v2468
        %v2470 = vmin.f32 %v2469, 1.0
        %v2471 = vmax.f32 %v2470, -1.0
        %v2472 = vmul.f32 %v497, %v497
        %v2473 = vmin.f32 16.0, %v2472
        %v2474 = vmul.f32 %v2473, 2.1237322e-06
        %v2475 = vadd.f32 %v2474, 0.00028619796
        %v2476 = vmul.f32 %v2473, %v2475
        %v2477 = vadd.f32 %v2476, 0.0036580483
        %v2478 = vmul.f32 %v2473, %v2477
        %v2479 = vadd.f32 %v2478, 0.05243302
        %v2480 = vmul.f32 %v2473, %v2479
        %v2481 = vadd.f32 %v2480, 0.18741608
        %v2482 = vmul.f32 %v2473, %v2481
        %v2483 = vadd.f32 %v2482, 1.1283791
        %v2484 = vmul.f32 %v497, %v2483
        %v2485 = vmul.f32 %v2473, 3.8918573e-05
        %v2486 = vadd.f32 %v2485, 0.001143296
        %v2487 = vmul.f32 %v2473, %v2486
        %v2488 = vadd.f32 %v2487, 0.014752088
        %v2489 = vmul.f32 %v2473, %v2488
        %v2490 = vadd.f32 %v2489, 0.112945676
        %v2491 = vmul.f32 %v2473, %v2490
        %v2492 = vadd.f32 %v2491, 0.4994258
        %v2493 = vmul.f32 %v2473, %v2492
        %v2494 = vadd.f32 %v2493, 1.0
        %v2495 = vrcp.pop %v2494
        %v2496 = vmul.f32 %v2494, %v2495
        %v2497 = vsub.f32 1.0, %v2496
        %v2498 = vmul.f32 %v2495, %v2497
        %v2499 = vadd.f32 %v2495, %v2498
        %vm2500 = vweird.f32 %v2494
        %vm2501 = vweird.f32 %v2495
        %vm2502 = vmor %vm2500, %vm2501
        %v2503 = vsel %vm2502, %v2495, %v2499
        %v2504 = vand.u32 2147483647, %v2494
        %vm2505 = vcmp.eq.f32.partialorder %v2504, 8.507059e+37
        %v2506 = vand.u32 %v2494, 2147483648
        %v2507 = vor.u32 1.1754944e-38, %v2506
        %v2508 = vsel %vm2505, %v2507, %v2503
        %v2509 = vmul.f32 %v2484, %v2508
        %v2510 = vmin.f32 %v2509, 1.0
        %v2511 = vmax.f32 %v2510, -1.0
        %v2512 = vmul.f32 %v498, %v498
        %v2513 = vmin.f32 16.0, %v2512
        %v2514 = vmul.f32 %v2513, 2.1237322e-06
        %v2515 = vadd.f32 %v2514, 0.00028619796
        %v2516 = vmul.f32 %v2513, %v2515
        %v2517 = vadd.f32 %v2516, 0.0036580483
        %v2518 = vmul.f32 %v2513, %v2517
        %v2519 = vadd.f32 %v2518, 0.05243302
        %v2520 = vmul.f32 %v2513, %v2519
        %v2521 = vadd.f32 %v2520, 0.18741608
        %v2522 = vmul.f32 %v2513, %v2521
        %v2523 = vadd.f32 %v2522, 1.1283791
        %v2524 = vmul.f32 %v498, %v2523
        %v2525 = vmul.f32 %v2513, 3.8918573e-05
        %v2526 = vadd.f32 %v2525, 0.001143296
        %v2527 = vmul.f32 %v2513, %v2526
        %v2528 = vadd.f32 %v2527, 0.014752088
        %v2529 = vmul.f32 %v2513, %v2528
        %v2530 = vadd.f32 %v2529, 0.112945676
        %v2531 = vmul.f32 %v2513, %v2530
        %v2532 = vadd.f32 %v2531, 0.4994258
        %v2533 = vmul.f32 %v2513, %v2532
        %v2534 = vadd.f32 %v2533, 1.0
        %v2535 = vrcp.pop %v2534
        %v2536 = vmul.f32 %v2534, %v2535
        %v2537 = vsub.f32 1.0, %v2536
        %v2538 = vmul.f32 %v2535, %v2537
        %v2539 = vadd.f32 %v2535, %v2538
        %vm2540 = vweird.f32 %v2534
        %vm2541 = vweird.f32 %v2535
        %vm2542 = vmor %vm2540, %vm2541
        %v2543 = vsel %vm2542, %v2535, %v2539
        %v2544 = vand.u32 2147483647, %v2534
        %vm2545 = vcmp.eq.f32.partialorder %v2544, 8.507059e+37
        %v2546 = vand.u32 %v2534, 2147483648
        %v2547 = vor.u32 1.1754944e-38, %v2546
        %v2548 = vsel %vm2545, %v2547, %v2543
        %v2549 = vmul.f32 %v2524, %v2548
        %v2550 = vmin.f32 %v2549, 1.0
        %v2551 = vmax.f32 %v2550, -1.0
        %v2552 = vmul.f32 %v499, %v499
        %v2553 = vmin.f32 16.0, %v2552
        %v2554 = vmul.f32 %v2553, 2.1237322e-06
        %v2555 = vadd.f32 %v2554, 0.00028619796
        %v2556 = vmul.f32 %v2553, %v2555
        %v2557 = vadd.f32 %v2556, 0.0036580483
        %v2558 = vmul.f32 %v2553, %v2557
        %v2559 = vadd.f32 %v2558, 0.05243302
        %v2560 = vmul.f32 %v2553, %v2559
        %v2561 = vadd.f32 %v2560, 0.18741608
        %v2562 = vmul.f32 %v2553, %v2561
        %v2563 = vadd.f32 %v2562, 1.1283791
        %v2564 = vmul.f32 %v499, %v2563
        %v2565 = vmul.f32 %v2553, 3.8918573e-05
        %v2566 = vadd.f32 %v2565, 0.001143296
        %v2567 = vmul.f32 %v2553, %v2566
        %v2568 = vadd.f32 %v2567, 0.014752088
        %v2569 = vmul.f32 %v2553, %v2568
        %v2570 = vadd.f32 %v2569, 0.112945676
        %v2571 = vmul.f32 %v2553, %v2570
        %v2572 = vadd.f32 %v2571, 0.4994258
        %v2573 = vmul.f32 %v2553, %v2572
        %v2574 = vadd.f32 %v2573, 1.0
        %v2575 = vrcp.pop %v2574
        %v2576 = vmul.f32 %v2574, %v2575
        %v2577 = vsub.f32 1.0, %v2576
        %v2578 = vmul.f32 %v2575, %v2577
        %v2579 = vadd.f32 %v2575, %v2578
        %vm2580 = vweird.f32 %v2574
        %vm2581 = vweird.f32 %v2575
        %vm2582 = vmor %vm2580, %vm2581
        %v2583 = vsel %vm2582, %v2575, %v2579
        %v2584 = vand.u32 2147483647, %v2574
        %vm2585 = vcmp.eq.f32.partialorder %v2584, 8.507059e+37
        %v2586 = vand.u32 %v2574, 2147483648
        %v2587 = vor.u32 1.1754944e-38, %v2586
        %v2588 = vsel %vm2585, %v2587, %v2583
        %v2589 = vmul.f32 %v2564, %v2588
        %v2590 = vmin.f32 %v2589, 1.0
        %v2591 = vmax.f32 %v2590, -1.0
        %v2592 = vmul.f32 %v500, %v500
        %v2593 = vmin.f32 16.0, %v2592
        %v2594 = vmul.f32 %v2593, 2.1237322e-06
        %v2595 = vadd.f32 %v2594, 0.00028619796
        %v2596 = vmul.f32 %v2593, %v2595
        %v2597 = vadd.f32 %v2596, 0.0036580483
        %v2598 = vmul.f32 %v2593, %v2597
        %v2599 = vadd.f32 %v2598, 0.05243302
        %v2600 = vmul.f32 %v2593, %v2599
        %v2601 = vadd.f32 %v2600, 0.18741608
        %v2602 = vmul.f32 %v2593, %v2601
        %v2603 = vadd.f32 %v2602, 1.1283791
        %v2604 = vmul.f32 %v500, %v2603
        %v2605 = vmul.f32 %v2593, 3.8918573e-05
        %v2606 = vadd.f32 %v2605, 0.001143296
        %v2607 = vmul.f32 %v2593, %v2606
        %v2608 = vadd.f32 %v2607, 0.014752088
        %v2609 = vmul.f32 %v2593, %v2608
        %v2610 = vadd.f32 %v2609, 0.112945676
        %v2611 = vmul.f32 %v2593, %v2610
        %v2612 = vadd.f32 %v2611, 0.4994258
        %v2613 = vmul.f32 %v2593, %v2612
        %v2614 = vadd.f32 %v2613, 1.0
        %v2615 = vrcp.pop %v2614
        %v2616 = vmul.f32 %v2614, %v2615
        %v2617 = vsub.f32 1.0, %v2616
        %v2618 = vmul.f32 %v2615, %v2617
        %v2619 = vadd.f32 %v2615, %v2618
        %vm2620 = vweird.f32 %v2614
        %vm2621 = vweird.f32 %v2615
        %vm2622 = vmor %vm2620, %vm2621
        %v2623 = vsel %vm2622, %v2615, %v2619
        %v2624 = vand.u32 2147483647, %v2614
        %vm2625 = vcmp.eq.f32.partialorder %v2624, 8.507059e+37
        %v2626 = vand.u32 %v2614, 2147483648
        %v2627 = vor.u32 1.1754944e-38, %v2626
        %v2628 = vsel %vm2625, %v2627, %v2623
        %v2629 = vmul.f32 %v2604, %v2628
        %v2630 = vmin.f32 %v2629, 1.0
        %v2631 = vmax.f32 %v2630, -1.0
        %v2632 = vmul.f32 %v501, %v501
        %v2633 = vmin.f32 16.0, %v2632
        %v2634 = vmul.f32 %v2633, 2.1237322e-06
        %v2635 = vadd.f32 %v2634, 0.00028619796
        %v2636 = vmul.f32 %v2633, %v2635
        %v2637 = vadd.f32 %v2636, 0.0036580483
        %v2638 = vmul.f32 %v2633, %v2637
        %v2639 = vadd.f32 %v2638, 0.05243302
        %v2640 = vmul.f32 %v2633, %v2639
        %v2641 = vadd.f32 %v2640, 0.18741608
        %v2642 = vmul.f32 %v2633, %v2641
        %v2643 = vadd.f32 %v2642, 1.1283791
        %v2644 = vmul.f32 %v501, %v2643
        %v2645 = vmul.f32 %v2633, 3.8918573e-05
        %v2646 = vadd.f32 %v2645, 0.001143296
        %v2647 = vmul.f32 %v2633, %v2646
        %v2648 = vadd.f32 %v2647, 0.014752088
        %v2649 = vmul.f32 %v2633, %v2648
        %v2650 = vadd.f32 %v2649, 0.112945676
        %v2651 = vmul.f32 %v2633, %v2650
        %v2652 = vadd.f32 %v2651, 0.4994258
        %v2653 = vmul.f32 %v2633, %v2652
        %v2654 = vadd.f32 %v2653, 1.0
        %v2655 = vrcp.pop %v2654
        %v2656 = vmul.f32 %v2654, %v2655
        %v2657 = vsub.f32 1.0, %v2656
        %v2658 = vmul.f32 %v2655, %v2657
        %v2659 = vadd.f32 %v2655, %v2658
        %vm2660 = vweird.f32 %v2654
        %vm2661 = vweird.f32 %v2655
        %vm2662 = vmor %vm2660, %vm2661
        %v2663 = vsel %vm2662, %v2655, %v2659
        %v2664 = vand.u32 2147483647, %v2654
        %vm2665 = vcmp.eq.f32.partialorder %v2664, 8.507059e+37
        %v2666 = vand.u32 %v2654, 2147483648
        %v2667 = vor.u32 1.1754944e-38, %v2666
        %v2668 = vsel %vm2665, %v2667, %v2663
        %v2669 = vmul.f32 %v2644, %v2668
        %v2670 = vmin.f32 %v2669, 1.0
        %v2671 = vmax.f32 %v2670, -1.0
        %v2672 = vmul.f32 %v502, %v502
        %v2673 = vmin.f32 16.0, %v2672
        %v2674 = vmul.f32 %v2673, 2.1237322e-06
        %v2675 = vadd.f32 %v2674, 0.00028619796
        %v2676 = vmul.f32 %v2673, %v2675
        %v2677 = vadd.f32 %v2676, 0.0036580483
        %v2678 = vmul.f32 %v2673, %v2677
        %v2679 = vadd.f32 %v2678, 0.05243302
        %v2680 = vmul.f32 %v2673, %v2679
        %v2681 = vadd.f32 %v2680, 0.18741608
        %v2682 = vmul.f32 %v2673, %v2681
        %v2683 = vadd.f32 %v2682, 1.1283791
        %v2684 = vmul.f32 %v502, %v2683
        %v2685 = vmul.f32 %v2673, 3.8918573e-05
        %v2686 = vadd.f32 %v2685, 0.001143296
        %v2687 = vmul.f32 %v2673, %v2686
        %v2688 = vadd.f32 %v2687, 0.014752088
        %v2689 = vmul.f32 %v2673, %v2688
        %v2690 = vadd.f32 %v2689, 0.112945676
        %v2691 = vmul.f32 %v2673, %v2690
        %v2692 = vadd.f32 %v2691, 0.4994258
        %v2693 = vmul.f32 %v2673, %v2692
        %v2694 = vadd.f32 %v2693, 1.0
        %v2695 = vrcp.pop %v2694
        %v2696 = vmul.f32 %v2694, %v2695
        %v2697 = vsub.f32 1.0, %v2696
        %v2698 = vmul.f32 %v2695, %v2697
        %v2699 = vadd.f32 %v2695, %v2698
        %vm2700 = vweird.f32 %v2694
        %vm2701 = vweird.f32 %v2695
        %vm2702 = vmor %vm2700, %vm2701
        %v2703 = vsel %vm2702, %v2695, %v2699
        %v2704 = vand.u32 2147483647, %v2694
        %vm2705 = vcmp.eq.f32.partialorder %v2704, 8.507059e+37
        %v2706 = vand.u32 %v2694, 2147483648
        %v2707 = vor.u32 1.1754944e-38, %v2706
        %v2708 = vsel %vm2705, %v2707, %v2703
        %v2709 = vmul.f32 %v2684, %v2708
        %v2710 = vmin.f32 %v2709, 1.0
        %v2711 = vmax.f32 %v2710, -1.0
        %v2712 = vmul.f32 %v503, %v503
        %v2713 = vmin.f32 16.0, %v2712
        %v2714 = vmul.f32 %v2713, 2.1237322e-06
        %v2715 = vadd.f32 %v2714, 0.00028619796
        %v2716 = vmul.f32 %v2713, %v2715
        %v2717 = vadd.f32 %v2716, 0.0036580483
        %v2718 = vmul.f32 %v2713, %v2717
        %v2719 = vadd.f32 %v2718, 0.05243302
        %v2720 = vmul.f32 %v2713, %v2719
        %v2721 = vadd.f32 %v2720, 0.18741608
        %v2722 = vmul.f32 %v2713, %v2721
        %v2723 = vadd.f32 %v2722, 1.1283791
        %v2724 = vmul.f32 %v503, %v2723
        %v2725 = vmul.f32 %v2713, 3.8918573e-05
        %v2726 = vadd.f32 %v2725, 0.001143296
        %v2727 = vmul.f32 %v2713, %v2726
        %v2728 = vadd.f32 %v2727, 0.014752088
        %v2729 = vmul.f32 %v2713, %v2728
        %v2730 = vadd.f32 %v2729, 0.112945676
        %v2731 = vmul.f32 %v2713, %v2730
        %v2732 = vadd.f32 %v2731, 0.4994258
        %v2733 = vmul.f32 %v2713, %v2732
        %v2734 = vadd.f32 %v2733, 1.0
        %v2735 = vrcp.pop %v2734
        %v2736 = vmul.f32 %v2734, %v2735
        %v2737 = vsub.f32 1.0, %v2736
        %v2738 = vmul.f32 %v2735, %v2737
        %v2739 = vadd.f32 %v2735, %v2738
        %vm2740 = vweird.f32 %v2734
        %vm2741 = vweird.f32 %v2735
        %vm2742 = vmor %vm2740, %vm2741
        %v2743 = vsel %vm2742, %v2735, %v2739
        %v2744 = vand.u32 2147483647, %v2734
        %vm2745 = vcmp.eq.f32.partialorder %v2744, 8.507059e+37
        %v2746 = vand.u32 %v2734, 2147483648
        %v2747 = vor.u32 1.1754944e-38, %v2746
        %v2748 = vsel %vm2745, %v2747, %v2743
        %v2749 = vmul.f32 %v2724, %v2748
        %v2750 = vmin.f32 %v2749, 1.0
        %v2751 = vmax.f32 %v2750, -1.0
        %v2752 = vmul.f32 %v504, %v504
        %v2753 = vmin.f32 16.0, %v2752
        %v2754 = vmul.f32 %v2753, 2.1237322e-06
        %v2755 = vadd.f32 %v2754, 0.00028619796
        %v2756 = vmul.f32 %v2753, %v2755
        %v2757 = vadd.f32 %v2756, 0.0036580483
        %v2758 = vmul.f32 %v2753, %v2757
        %v2759 = vadd.f32 %v2758, 0.05243302
        %v2760 = vmul.f32 %v2753, %v2759
        %v2761 = vadd.f32 %v2760, 0.18741608
        %v2762 = vmul.f32 %v2753, %v2761
        %v2763 = vadd.f32 %v2762, 1.1283791
        %v2764 = vmul.f32 %v504, %v2763
        %v2765 = vmul.f32 %v2753, 3.8918573e-05
        %v2766 = vadd.f32 %v2765, 0.001143296
        %v2767 = vmul.f32 %v2753, %v2766
        %v2768 = vadd.f32 %v2767, 0.014752088
        %v2769 = vmul.f32 %v2753, %v2768
        %v2770 = vadd.f32 %v2769, 0.112945676
        %v2771 = vmul.f32 %v2753, %v2770
        %v2772 = vadd.f32 %v2771, 0.4994258
        %v2773 = vmul.f32 %v2753, %v2772
        %v2774 = vadd.f32 %v2773, 1.0
        %v2775 = vrcp.pop %v2774
        %v2776 = vmul.f32 %v2774, %v2775
        %v2777 = vsub.f32 1.0, %v2776
        %v2778 = vmul.f32 %v2775, %v2777
        %v2779 = vadd.f32 %v2775, %v2778
        %vm2780 = vweird.f32 %v2774
        %vm2781 = vweird.f32 %v2775
        %vm2782 = vmor %vm2780, %vm2781
        %v2783 = vsel %vm2782, %v2775, %v2779
        %v2784 = vand.u32 2147483647, %v2774
        %vm2785 = vcmp.eq.f32.partialorder %v2784, 8.507059e+37
        %v2786 = vand.u32 %v2774, 2147483648
        %v2787 = vor.u32 1.1754944e-38, %v2786
        %v2788 = vsel %vm2785, %v2787, %v2783
        %v2789 = vmul.f32 %v2764, %v2788
        %v2790 = vmin.f32 %v2789, 1.0
        %v2791 = vmax.f32 %v2790, -1.0
        %v2792 = vmul.f32 %v505, %v505
        %v2793 = vmin.f32 16.0, %v2792
        %v2794 = vmul.f32 %v2793, 2.1237322e-06
        %v2795 = vadd.f32 %v2794, 0.00028619796
        %v2796 = vmul.f32 %v2793, %v2795
        %v2797 = vadd.f32 %v2796, 0.0036580483
        %v2798 = vmul.f32 %v2793, %v2797
        %v2799 = vadd.f32 %v2798, 0.05243302
        %v2800 = vmul.f32 %v2793, %v2799
        %v2801 = vadd.f32 %v2800, 0.18741608
        %v2802 = vmul.f32 %v2793, %v2801
        %v2803 = vadd.f32 %v2802, 1.1283791
        %v2804 = vmul.f32 %v505, %v2803
        %v2805 = vmul.f32 %v2793, 3.8918573e-05
        %v2806 = vadd.f32 %v2805, 0.001143296
        %v2807 = vmul.f32 %v2793, %v2806
        %v2808 = vadd.f32 %v2807, 0.014752088
        %v2809 = vmul.f32 %v2793, %v2808
        %v2810 = vadd.f32 %v2809, 0.112945676
        %v2811 = vmul.f32 %v2793, %v2810
        %v2812 = vadd.f32 %v2811, 0.4994258
        %v2813 = vmul.f32 %v2793, %v2812
        %v2814 = vadd.f32 %v2813, 1.0
        %v2815 = vrcp.pop %v2814
        %v2816 = vmul.f32 %v2814, %v2815
        %v2817 = vsub.f32 1.0, %v2816
        %v2818 = vmul.f32 %v2815, %v2817
        %v2819 = vadd.f32 %v2815, %v2818
        %vm2820 = vweird.f32 %v2814
        %vm2821 = vweird.f32 %v2815
        %vm2822 = vmor %vm2820, %vm2821
        %v2823 = vsel %vm2822, %v2815, %v2819
        %v2824 = vand.u32 2147483647, %v2814
        %vm2825 = vcmp.eq.f32.partialorder %v2824, 8.507059e+37
        %v2826 = vand.u32 %v2814, 2147483648
        %v2827 = vor.u32 1.1754944e-38, %v2826
        %v2828 = vsel %vm2825, %v2827, %v2823
        %v2829 = vmul.f32 %v2804, %v2828
        %v2830 = vmin.f32 %v2829, 1.0
        %v2831 = vmax.f32 %v2830, -1.0
        %v2832 = vmul.f32 %v506, %v506
        %v2833 = vmin.f32 16.0, %v2832
        %v2834 = vmul.f32 %v2833, 2.1237322e-06
        %v2835 = vadd.f32 %v2834, 0.00028619796
        %v2836 = vmul.f32 %v2833, %v2835
        %v2837 = vadd.f32 %v2836, 0.0036580483
        %v2838 = vmul.f32 %v2833, %v2837
        %v2839 = vadd.f32 %v2838, 0.05243302
        %v2840 = vmul.f32 %v2833, %v2839
        %v2841 = vadd.f32 %v2840, 0.18741608
        %v2842 = vmul.f32 %v2833, %v2841
        %v2843 = vadd.f32 %v2842, 1.1283791
        %v2844 = vmul.f32 %v506, %v2843
        %v2845 = vmul.f32 %v2833, 3.8918573e-05
        %v2846 = vadd.f32 %v2845, 0.001143296
        %v2847 = vmul.f32 %v2833, %v2846
        %v2848 = vadd.f32 %v2847, 0.014752088
        %v2849 = vmul.f32 %v2833, %v2848
        %v2850 = vadd.f32 %v2849, 0.112945676
        %v2851 = vmul.f32 %v2833, %v2850
        %v2852 = vadd.f32 %v2851, 0.4994258
        %v2853 = vmul.f32 %v2833, %v2852
        %v2854 = vadd.f32 %v2853, 1.0
        %v2855 = vrcp.pop %v2854
        %v2856 = vmul.f32 %v2854, %v2855
        %v2857 = vsub.f32 1.0, %v2856
        %v2858 = vmul.f32 %v2855, %v2857
        %v2859 = vadd.f32 %v2855, %v2858
        %vm2860 = vweird.f32 %v2854
        %vm2861 = vweird.f32 %v2855
        %vm2862 = vmor %vm2860, %vm2861
        %v2863 = vsel %vm2862, %v2855, %v2859
        %v2864 = vand.u32 2147483647, %v2854
        %vm2865 = vcmp.eq.f32.partialorder %v2864, 8.507059e+37
        %v2866 = vand.u32 %v2854, 2147483648
        %v2867 = vor.u32 1.1754944e-38, %v2866
        %v2868 = vsel %vm2865, %v2867, %v2863
        %v2869 = vmul.f32 %v2844, %v2868
        %v2870 = vmin.f32 %v2869, 1.0
        %v2871 = vmax.f32 %v2870, -1.0
        %v2872 = vmul.f32 %v507, %v507
        %v2873 = vmin.f32 16.0, %v2872
        %v2874 = vmul.f32 %v2873, 2.1237322e-06
        %v2875 = vadd.f32 %v2874, 0.00028619796
        %v2876 = vmul.f32 %v2873, %v2875
        %v2877 = vadd.f32 %v2876, 0.0036580483
        %v2878 = vmul.f32 %v2873, %v2877
        %v2879 = vadd.f32 %v2878, 0.05243302
        %v2880 = vmul.f32 %v2873, %v2879
        %v2881 = vadd.f32 %v2880, 0.18741608
        %v2882 = vmul.f32 %v2873, %v2881
        %v2883 = vadd.f32 %v2882, 1.1283791
        %v2884 = vmul.f32 %v507, %v2883
        %v2885 = vmul.f32 %v2873, 3.8918573e-05
        %v2886 = vadd.f32 %v2885, 0.001143296
        %v2887 = vmul.f32 %v2873, %v2886
        %v2888 = vadd.f32 %v2887, 0.014752088
        %v2889 = vmul.f32 %v2873, %v2888
        %v2890 = vadd.f32 %v2889, 0.112945676
        %v2891 = vmul.f32 %v2873, %v2890
        %v2892 = vadd.f32 %v2891, 0.4994258
        %v2893 = vmul.f32 %v2873, %v2892
        %v2894 = vadd.f32 %v2893, 1.0
        %v2895 = vrcp.pop %v2894
        %v2896 = vmul.f32 %v2894, %v2895
        %v2897 = vsub.f32 1.0, %v2896
        %v2898 = vmul.f32 %v2895, %v2897
        %v2899 = vadd.f32 %v2895, %v2898
        %vm2900 = vweird.f32 %v2894
        %vm2901 = vweird.f32 %v2895
        %vm2902 = vmor %vm2900, %vm2901
        %v2903 = vsel %vm2902, %v2895, %v2899
        %v2904 = vand.u32 2147483647, %v2894
        %vm2905 = vcmp.eq.f32.partialorder %v2904, 8.507059e+37
        %v2906 = vand.u32 %v2894, 2147483648
        %v2907 = vor.u32 1.1754944e-38, %v2906
        %v2908 = vsel %vm2905, %v2907, %v2903
        %v2909 = vmul.f32 %v2884, %v2908
        %v2910 = vmin.f32 %v2909, 1.0
        %v2911 = vmax.f32 %v2910, -1.0
        %v2912 = vmul.f32 %v508, %v508
        %v2913 = vmin.f32 16.0, %v2912
        %v2914 = vmul.f32 %v2913, 2.1237322e-06
        %v2915 = vadd.f32 %v2914, 0.00028619796
        %v2916 = vmul.f32 %v2913, %v2915
        %v2917 = vadd.f32 %v2916, 0.0036580483
        %v2918 = vmul.f32 %v2913, %v2917
        %v2919 = vadd.f32 %v2918, 0.05243302
        %v2920 = vmul.f32 %v2913, %v2919
        %v2921 = vadd.f32 %v2920, 0.18741608
        %v2922 = vmul.f32 %v2913, %v2921
        %v2923 = vadd.f32 %v2922, 1.1283791
        %v2924 = vmul.f32 %v508, %v2923
        %v2925 = vmul.f32 %v2913, 3.8918573e-05
        %v2926 = vadd.f32 %v2925, 0.001143296
        %v2927 = vmul.f32 %v2913, %v2926
        %v2928 = vadd.f32 %v2927, 0.014752088
        %v2929 = vmul.f32 %v2913, %v2928
        %v2930 = vadd.f32 %v2929, 0.112945676
        %v2931 = vmul.f32 %v2913, %v2930
        %v2932 = vadd.f32 %v2931, 0.4994258
        %v2933 = vmul.f32 %v2913, %v2932
        %v2934 = vadd.f32 %v2933, 1.0
        %v2935 = vrcp.pop %v2934
        %v2936 = vmul.f32 %v2934, %v2935
        %v2937 = vsub.f32 1.0, %v2936
        %v2938 = vmul.f32 %v2935, %v2937
        %v2939 = vadd.f32 %v2935, %v2938
        %vm2940 = vweird.f32 %v2934
        %vm2941 = vweird.f32 %v2935
        %vm2942 = vmor %vm2940, %vm2941
        %v2943 = vsel %vm2942, %v2935, %v2939
        %v2944 = vand.u32 2147483647, %v2934
        %vm2945 = vcmp.eq.f32.partialorder %v2944, 8.507059e+37
        %v2946 = vand.u32 %v2934, 2147483648
        %v2947 = vor.u32 1.1754944e-38, %v2946
        %v2948 = vsel %vm2945, %v2947, %v2943
        %v2949 = vmul.f32 %v2924, %v2948
        %v2950 = vmin.f32 %v2949, 1.0
        %v2951 = vmax.f32 %v2950, -1.0
        %v2952 = vmul.f32 %v509, %v509
        %v2953 = vmin.f32 16.0, %v2952
        %v2954 = vmul.f32 %v2953, 2.1237322e-06
        %v2955 = vadd.f32 %v2954, 0.00028619796
        %v2956 = vmul.f32 %v2953, %v2955
        %v2957 = vadd.f32 %v2956, 0.0036580483
        %v2958 = vmul.f32 %v2953, %v2957
        %v2959 = vadd.f32 %v2958, 0.05243302
        %v2960 = vmul.f32 %v2953, %v2959
        %v2961 = vadd.f32 %v2960, 0.18741608
        %v2962 = vmul.f32 %v2953, %v2961
        %v2963 = vadd.f32 %v2962, 1.1283791
        %v2964 = vmul.f32 %v509, %v2963
        %v2965 = vmul.f32 %v2953, 3.8918573e-05
        %v2966 = vadd.f32 %v2965, 0.001143296
        %v2967 = vmul.f32 %v2953, %v2966
        %v2968 = vadd.f32 %v2967, 0.014752088
        %v2969 = vmul.f32 %v2953, %v2968
        %v2970 = vadd.f32 %v2969, 0.112945676
        %v2971 = vmul.f32 %v2953, %v2970
        %v2972 = vadd.f32 %v2971, 0.4994258
        %v2973 = vmul.f32 %v2953, %v2972
        %v2974 = vadd.f32 %v2973, 1.0
        %v2975 = vrcp.pop %v2974
        %v2976 = vmul.f32 %v2974, %v2975
        %v2977 = vsub.f32 1.0, %v2976
        %v2978 = vmul.f32 %v2975, %v2977
        %v2979 = vadd.f32 %v2975, %v2978
        %vm2980 = vweird.f32 %v2974
        %vm2981 = vweird.f32 %v2975
        %vm2982 = vmor %vm2980, %vm2981
        %v2983 = vsel %vm2982, %v2975, %v2979
        %v2984 = vand.u32 2147483647, %v2974
        %vm2985 = vcmp.eq.f32.partialorder %v2984, 8.507059e+37
        %v2986 = vand.u32 %v2974, 2147483648
        %v2987 = vor.u32 1.1754944e-38, %v2986
        %v2988 = vsel %vm2985, %v2987, %v2983
        %v2989 = vmul.f32 %v2964, %v2988
        %v2990 = vmin.f32 %v2989, 1.0
        %v2991 = vmax.f32 %v2990, -1.0
        %v2992 = vmul.f32 %v510, %v510
        %v2993 = vmin.f32 16.0, %v2992
        %v2994 = vmul.f32 %v2993, 2.1237322e-06
        %v2995 = vadd.f32 %v2994, 0.00028619796
        %v2996 = vmul.f32 %v2993, %v2995
        %v2997 = vadd.f32 %v2996, 0.0036580483
        %v2998 = vmul.f32 %v2993, %v2997
        %v2999 = vadd.f32 %v2998, 0.05243302
        %v3000 = vmul.f32 %v2993, %v2999
        %v3001 = vadd.f32 %v3000, 0.18741608
        %v3002 = vmul.f32 %v2993, %v3001
        %v3003 = vadd.f32 %v3002, 1.1283791
        %v3004 = vmul.f32 %v510, %v3003
        %v3005 = vmul.f32 %v2993, 3.8918573e-05
        %v3006 = vadd.f32 %v3005, 0.001143296
        %v3007 = vmul.f32 %v2993, %v3006
        %v3008 = vadd.f32 %v3007, 0.014752088
        %v3009 = vmul.f32 %v2993, %v3008
        %v3010 = vadd.f32 %v3009, 0.112945676
        %v3011 = vmul.f32 %v2993, %v3010
        %v3012 = vadd.f32 %v3011, 0.4994258
        %v3013 = vmul.f32 %v2993, %v3012
        %v3014 = vadd.f32 %v3013, 1.0
        %v3015 = vrcp.pop %v3014
        %v3016 = vmul.f32 %v3014, %v3015
        %v3017 = vsub.f32 1.0, %v3016
        %v3018 = vmul.f32 %v3015, %v3017
        %v3019 = vadd.f32 %v3015, %v3018
        %vm3020 = vweird.f32 %v3014
        %vm3021 = vweird.f32 %v3015
        %vm3022 = vmor %vm3020, %vm3021
        %v3023 = vsel %vm3022, %v3015, %v3019
        %v3024 = vand.u32 2147483647, %v3014
        %vm3025 = vcmp.eq.f32.partialorder %v3024, 8.507059e+37
        %v3026 = vand.u32 %v3014, 2147483648
        %v3027 = vor.u32 1.1754944e-38, %v3026
        %v3028 = vsel %vm3025, %v3027, %v3023
        %v3029 = vmul.f32 %v3004, %v3028
        %v3030 = vmin.f32 %v3029, 1.0
        %v3031 = vmax.f32 %v3030, -1.0
        %v3032 = vmul.f32 %v511, %v511
        %v3033 = vmin.f32 16.0, %v3032
        %v3034 = vmul.f32 %v3033, 2.1237322e-06
        %v3035 = vadd.f32 %v3034, 0.00028619796
        %v3036 = vmul.f32 %v3033, %v3035
        %v3037 = vadd.f32 %v3036, 0.0036580483
        %v3038 = vmul.f32 %v3033, %v3037
        %v3039 = vadd.f32 %v3038, 0.05243302
        %v3040 = vmul.f32 %v3033, %v3039
        %v3041 = vadd.f32 %v3040, 0.18741608
        %v3042 = vmul.f32 %v3033, %v3041
        %v3043 = vadd.f32 %v3042, 1.1283791
        %v3044 = vmul.f32 %v511, %v3043
        %v3045 = vmul.f32 %v3033, 3.8918573e-05
        %v3046 = vadd.f32 %v3045, 0.001143296
        %v3047 = vmul.f32 %v3033, %v3046
        %v3048 = vadd.f32 %v3047, 0.014752088
        %v3049 = vmul.f32 %v3033, %v3048
        %v3050 = vadd.f32 %v3049, 0.112945676
        %v3051 = vmul.f32 %v3033, %v3050
        %v3052 = vadd.f32 %v3051, 0.4994258
        %v3053 = vmul.f32 %v3033, %v3052
        %v3054 = vadd.f32 %v3053, 1.0
        %v3055 = vrcp.pop %v3054
        %v3056 = vmul.f32 %v3054, %v3055
        %v3057 = vsub.f32 1.0, %v3056
        %v3058 = vmul.f32 %v3055, %v3057
        %v3059 = vadd.f32 %v3055, %v3058
        %vm3060 = vweird.f32 %v3054
        %vm3061 = vweird.f32 %v3055
        %vm3062 = vmor %vm3060, %vm3061
        %v3063 = vsel %vm3062, %v3055, %v3059
        %v3064 = vand.u32 2147483647, %v3054
        %vm3065 = vcmp.eq.f32.partialorder %v3064, 8.507059e+37
        %v3066 = vand.u32 %v3054, 2147483648
        %v3067 = vor.u32 1.1754944e-38, %v3066
        %v3068 = vsel %vm3065, %v3067, %v3063
        %v3069 = vmul.f32 %v3044, %v3068
        %v3070 = vmin.f32 %v3069, 1.0
        %v3071 = vmax.f32 %v3070, -1.0
        %v3072 = vadd.f32 %v551, 1.0
        %v3073 = vadd.f32 %v591, 1.0
        %v3074 = vadd.f32 %v631, 1.0
        %v3075 = vadd.f32 %v671, 1.0
        %v3076 = vadd.f32 %v711, 1.0
        %v3077 = vadd.f32 %v751, 1.0
        %v3078 = vadd.f32 %v791, 1.0
        %v3079 = vadd.f32 %v831, 1.0
        %v3080 = vadd.f32 %v871, 1.0
        %v3081 = vadd.f32 %v911, 1.0
        %v3082 = vadd.f32 %v951, 1.0
        %v3083 = vadd.f32 %v991, 1.0
        %v3084 = vadd.f32 %v1031, 1.0
        %v3085 = vadd.f32 %v1071, 1.0
        %v3086 = vadd.f32 %v1111, 1.0
        %v3087 = vadd.f32 %v1151, 1.0
        %v3088 = vadd.f32 %v1191, 1.0
        %v3089 = vadd.f32 %v1231, 1.0
        %v3090 = vadd.f32 %v1271, 1.0
        %v3091 = vadd.f32 %v1311, 1.0
        %v3092 = vadd.f32 %v1351, 1.0
        %v3093 = vadd.f32 %v1391, 1.0
        %v3094 = vadd.f32 %v1431, 1.0
        %v3095 = vadd.f32 %v1471, 1.0
        %v3096 = vadd.f32 %v1511, 1.0
        %v3097 = vadd.f32 %v1551, 1.0
        %v3098 = vadd.f32 %v1591, 1.0
        %v3099 = vadd.f32 %v1631, 1.0
        %v3100 = vadd.f32 %v1671, 1.0
        %v3101 = vadd.f32 %v1711, 1.0
        %v3102 = vadd.f32 %v1751, 1.0
        %v3103 = vadd.f32 %v1791, 1.0
        %v3104 = vadd.f32 %v1831, 1.0
        %v3105 = vadd.f32 %v1871, 1.0
        %v3106 = vadd.f32 %v1911, 1.0
        %v3107 = vadd.f32 %v1951, 1.0
        %v3108 = vadd.f32 %v1991, 1.0
        %v3109 = vadd.f32 %v2031, 1.0
        %v3110 = vadd.f32 %v2071, 1.0
        %v3111 = vadd.f32 %v2111, 1.0
        %v3112 = vadd.f32 %v2151, 1.0
        %v3113 = vadd.f32 %v2191, 1.0
        %v3114 = vadd.f32 %v2231, 1.0
        %v3115 = vadd.f32 %v2271, 1.0
        %v3116 = vadd.f32 %v2311, 1.0
        %v3117 = vadd.f32 %v2351, 1.0
        %v3118 = vadd.f32 %v2391, 1.0
        %v3119 = vadd.f32 %v2431, 1.0
        %v3120 = vadd.f32 %v2471, 1.0
        %v3121 = vadd.f32 %v2511, 1.0
        %v3122 = vadd.f32 %v2551, 1.0
        %v3123 = vadd.f32 %v2591, 1.0
        %v3124 = vadd.f32 %v2631, 1.0
        %v3125 = vadd.f32 %v2671, 1.0
        %v3126 = vadd.f32 %v2711, 1.0
        %v3127 = vadd.f32 %v2751, 1.0
        %v3128 = vadd.f32 %v2791, 1.0
        %v3129 = vadd.f32 %v2831, 1.0
        %v3130 = vadd.f32 %v2871, 1.0
        %v3131 = vadd.f32 %v2911, 1.0
        %v3132 = vadd.f32 %v2951, 1.0
        %v3133 = vadd.f32 %v2991, 1.0
        %v3134 = vadd.f32 %v3031, 1.0
        %v3135 = vadd.f32 %v3071, 1.0
        %v3136 = vmul.f32 %v384, %v3072
        %v3137 = vmul.f32 %v385, %v3073
        %v3138 = vmul.f32 %v386, %v3074
        %v3139 = vmul.f32 %v387, %v3075
        %v3140 = vmul.f32 %v388, %v3076
        %v3141 = vmul.f32 %v389, %v3077
        %v3142 = vmul.f32 %v390, %v3078
        %v3143 = vmul.f32 %v391, %v3079
        %v3144 = vmul.f32 %v392, %v3080
        %v3145 = vmul.f32 %v393, %v3081
        %v3146 = vmul.f32 %v394, %v3082
        %v3147 = vmul.f32 %v395, %v3083
        %v3148 = vmul.f32 %v396, %v3084
        %v3149 = vmul.f32 %v397, %v3085
        %v3150 = vmul.f32 %v398, %v3086
        %v3151 = vmul.f32 %v399, %v3087
        %v3152 = vmul.f32 %v400, %v3088
        %v3153 = vmul.f32 %v401, %v3089
        %v3154 = vmul.f32 %v402, %v3090
        %v3155 = vmul.f32 %v403, %v3091
        %v3156 = vmul.f32 %v404, %v3092
        %v3157 = vmul.f32 %v405, %v3093
        %v3158 = vmul.f32 %v406, %v3094
        %v3159 = vmul.f32 %v407, %v3095
        %v3160 = vmul.f32 %v408, %v3096
        %v3161 = vmul.f32 %v409, %v3097
        %v3162 = vmul.f32 %v410, %v3098
        %v3163 = vmul.f32 %v411, %v3099
        %v3164 = vmul.f32 %v412, %v3100
        %v3165 = vmul.f32 %v413, %v3101
        %v3166 = vmul.f32 %v414, %v3102
        %v3167 = vmul.f32 %v415, %v3103
        %v3168 = vmul.f32 %v416, %v3104
        %v3169 = vmul.f32 %v417, %v3105
        %v3170 = vmul.f32 %v418, %v3106
        %v3171 = vmul.f32 %v419, %v3107
        %v3172 = vmul.f32 %v420, %v3108
        %v3173 = vmul.f32 %v421, %v3109
        %v3174 = vmul.f32 %v422, %v3110
        %v3175 = vmul.f32 %v423, %v3111
        %v3176 = vmul.f32 %v424, %v3112
        %v3177 = vmul.f32 %v425, %v3113
        %v3178 = vmul.f32 %v426, %v3114
        %v3179 = vmul.f32 %v427, %v3115
        %v3180 = vmul.f32 %v428, %v3116
        %v3181 = vmul.f32 %v429, %v3117
        %v3182 = vmul.f32 %v430, %v3118
        %v3183 = vmul.f32 %v431, %v3119
        %v3184 = vmul.f32 %v432, %v3120
        %v3185 = vmul.f32 %v433, %v3121
        %v3186 = vmul.f32 %v434, %v3122
        %v3187 = vmul.f32 %v435, %v3123
        %v3188 = vmul.f32 %v436, %v3124
        %v3189 = vmul.f32 %v437, %v3125
        %v3190 = vmul.f32 %v438, %v3126
        %v3191 = vmul.f32 %v439, %v3127
        %v3192 = vmul.f32 %v440, %v3128
        %v3193 = vmul.f32 %v441, %v3129
        %v3194 = vmul.f32 %v442, %v3130
        %v3195 = vmul.f32 %v443, %v3131
        %v3196 = vmul.f32 %v444, %v3132
        %v3197 = vmul.f32 %v445, %v3133
        %v3198 = vmul.f32 %v446, %v3134
        %v3199 = vmul.f32 %v447, %v3135
        %v3200 = vld [vmem:[%s230] sm:$0xff]
        %v3201 = vld [vmem:[%s230 + $0x8] sm:$0xff]
        %v3202 = vld [vmem:[%s230 + $0x10] sm:$0xff]
        %v3203 = vld [vmem:[%s230 + $0x18] sm:$0xff]
        %v3204 = vld [vmem:[%s230 + $0x20] sm:$0xff]
        %v3205 = vld [vmem:[%s230 + $0x28] sm:$0xff]
        %v3206 = vld [vmem:[%s230 + $0x30] sm:$0xff]
        %v3207 = vld [vmem:[%s230 + $0x38] sm:$0xff]
        %v3208 = vld [vmem:[%s230 + $0x40] sm:$0xff]
        %v3209 = vld [vmem:[%s230 + $0x48] sm:$0xff]
        %v3210 = vld [vmem:[%s230 + $0x50] sm:$0xff]
        %v3211 = vld [vmem:[%s230 + $0x58] sm:$0xff]
        %v3212 = vld [vmem:[%s230 + $0x60] sm:$0xff]
        %v3213 = vld [vmem:[%s230 + $0x68] sm:$0xff]
        %v3214 = vld [vmem:[%s230 + $0x70] sm:$0xff]
        %v3215 = vld [vmem:[%s230 + $0x78] sm:$0xff]
        %v3216 = vld [vmem:[%s230 + $0x80] sm:$0xff]
        %v3217 = vld [vmem:[%s230 + $0x88] sm:$0xff]
        %v3218 = vld [vmem:[%s230 + $0x90] sm:$0xff]
        %v3219 = vld [vmem:[%s230 + $0x98] sm:$0xff]
        %v3220 = vld [vmem:[%s230 + $0xa0] sm:$0xff]
        %v3221 = vld [vmem:[%s230 + $0xa8] sm:$0xff]
        %v3222 = vld [vmem:[%s230 + $0xb0] sm:$0xff]
        %v3223 = vld [vmem:[%s230 + $0xb8] sm:$0xff]
        %v3224 = vld [vmem:[%s230 + $0xc0] sm:$0xff]
        %v3225 = vld [vmem:[%s230 + $0xc8] sm:$0xff]
        %v3226 = vld [vmem:[%s230 + $0xd0] sm:$0xff]
        %v3227 = vld [vmem:[%s230 + $0xd8] sm:$0xff]
        %v3228 = vld [vmem:[%s230 + $0xe0] sm:$0xff]
        %v3229 = vld [vmem:[%s230 + $0xe8] sm:$0xff]
        %v3230 = vld [vmem:[%s230 + $0xf0] sm:$0xff]
        %v3231 = vld [vmem:[%s230 + $0xf8] sm:$0xff]
        %v3232 = vld [vmem:[%s230 + $0x100] sm:$0xff]
        %v3233 = vld [vmem:[%s230 + $0x108] sm:$0xff]
        %v3234 = vld [vmem:[%s230 + $0x110] sm:$0xff]
        %v3235 = vld [vmem:[%s230 + $0x118] sm:$0xff]
        %v3236 = vld [vmem:[%s230 + $0x120] sm:$0xff]
        %v3237 = vld [vmem:[%s230 + $0x128] sm:$0xff]
        %v3238 = vld [vmem:[%s230 + $0x130] sm:$0xff]
        %v3239 = vld [vmem:[%s230 + $0x138] sm:$0xff]
        %v3240 = vld [vmem:[%s230 + $0x140] sm:$0xff]
        %v3241 = vld [vmem:[%s230 + $0x148] sm:$0xff]
        %v3242 = vld [vmem:[%s230 + $0x150] sm:$0xff]
        %v3243 = vld [vmem:[%s230 + $0x158] sm:$0xff]
        %v3244 = vld [vmem:[%s230 + $0x160] sm:$0xff]
        %v3245 = vld [vmem:[%s230 + $0x168] sm:$0xff]
        %v3246 = vld [vmem:[%s230 + $0x170] sm:$0xff]
        %v3247 = vld [vmem:[%s230 + $0x178] sm:$0xff]
        %v3248 = vld [vmem:[%s230 + $0x180] sm:$0xff]
        %v3249 = vld [vmem:[%s230 + $0x188] sm:$0xff]
        %v3250 = vld [vmem:[%s230 + $0x190] sm:$0xff]
        %v3251 = vld [vmem:[%s230 + $0x198] sm:$0xff]
        %v3252 = vld [vmem:[%s230 + $0x1a0] sm:$0xff]
        %v3253 = vld [vmem:[%s230 + $0x1a8] sm:$0xff]
        %v3254 = vld [vmem:[%s230 + $0x1b0] sm:$0xff]
        %v3255 = vld [vmem:[%s230 + $0x1b8] sm:$0xff]
        %v3256 = vld [vmem:[%s230 + $0x1c0] sm:$0xff]
        %v3257 = vld [vmem:[%s230 + $0x1c8] sm:$0xff]
        %v3258 = vld [vmem:[%s230 + $0x1d0] sm:$0xff]
        %v3259 = vld [vmem:[%s230 + $0x1d8] sm:$0xff]
        %v3260 = vld [vmem:[%s230 + $0x1e0] sm:$0xff]
        %v3261 = vld [vmem:[%s230 + $0x1e8] sm:$0xff]
        %v3262 = vld [vmem:[%s230 + $0x1f0] sm:$0xff]
        %v3263 = vld [vmem:[%s230 + $0x1f8] sm:$0xff]
        %v3264 = vld [vmem:[%s230 + $0x200] sm:$0xff]
        %v3265 = vld [vmem:[%s230 + $0x208] sm:$0xff]
        %v3266 = vld [vmem:[%s230 + $0x210] sm:$0xff]
        %v3267 = vld [vmem:[%s230 + $0x218] sm:$0xff]
        %v3268 = vld [vmem:[%s230 + $0x220] sm:$0xff]
        %v3269 = vld [vmem:[%s230 + $0x228] sm:$0xff]
        %v3270 = vld [vmem:[%s230 + $0x230] sm:$0xff]
        %v3271 = vld [vmem:[%s230 + $0x238] sm:$0xff]
        %v3272 = vld [vmem:[%s230 + $0x240] sm:$0xff]
        %v3273 = vld [vmem:[%s230 + $0x248] sm:$0xff]
        %v3274 = vld [vmem:[%s230 + $0x250] sm:$0xff]
        %v3275 = vld [vmem:[%s230 + $0x258] sm:$0xff]
        %v3276 = vld [vmem:[%s230 + $0x260] sm:$0xff]
        %v3277 = vld [vmem:[%s230 + $0x268] sm:$0xff]
        %v3278 = vld [vmem:[%s230 + $0x270] sm:$0xff]
        %v3279 = vld [vmem:[%s230 + $0x278] sm:$0xff]
        %v3280 = vld [vmem:[%s230 + $0x280] sm:$0xff]
        %v3281 = vld [vmem:[%s230 + $0x288] sm:$0xff]
        %v3282 = vld [vmem:[%s230 + $0x290] sm:$0xff]
        %v3283 = vld [vmem:[%s230 + $0x298] sm:$0xff]
        %v3284 = vld [vmem:[%s230 + $0x2a0] sm:$0xff]
        %v3285 = vld [vmem:[%s230 + $0x2a8] sm:$0xff]
        %v3286 = vld [vmem:[%s230 + $0x2b0] sm:$0xff]
        %v3287 = vld [vmem:[%s230 + $0x2b8] sm:$0xff]
        %v3288 = vld [vmem:[%s230 + $0x2c0] sm:$0xff]
        %v3289 = vld [vmem:[%s230 + $0x2c8] sm:$0xff]
        %v3290 = vld [vmem:[%s230 + $0x2d0] sm:$0xff]
        %v3291 = vld [vmem:[%s230 + $0x2d8] sm:$0xff]
        %v3292 = vld [vmem:[%s230 + $0x2e0] sm:$0xff]
        %v3293 = vld [vmem:[%s230 + $0x2e8] sm:$0xff]
        %v3294 = vld [vmem:[%s230 + $0x2f0] sm:$0xff]
        %v3295 = vld [vmem:[%s230 + $0x2f8] sm:$0xff]
        %v3296 = vld [vmem:[%s230 + $0x300] sm:$0xff]
        %v3297 = vld [vmem:[%s230 + $0x308] sm:$0xff]
        %v3298 = vld [vmem:[%s230 + $0x310] sm:$0xff]
        %v3299 = vld [vmem:[%s230 + $0x318] sm:$0xff]
        %v3300 = vld [vmem:[%s230 + $0x320] sm:$0xff]
        %v3301 = vld [vmem:[%s230 + $0x328] sm:$0xff]
        %v3302 = vld [vmem:[%s230 + $0x330] sm:$0xff]
        %v3303 = vld [vmem:[%s230 + $0x338] sm:$0xff]
        %v3304 = vld [vmem:[%s230 + $0x340] sm:$0xff]
        %v3305 = vld [vmem:[%s230 + $0x348] sm:$0xff]
        %v3306 = vld [vmem:[%s230 + $0x350] sm:$0xff]
        %v3307 = vld [vmem:[%s230 + $0x358] sm:$0xff]
        %v3308 = vld [vmem:[%s230 + $0x360] sm:$0xff]
        %v3309 = vld [vmem:[%s230 + $0x368] sm:$0xff]
        %v3310 = vld [vmem:[%s230 + $0x370] sm:$0xff]
        %v3311 = vld [vmem:[%s230 + $0x378] sm:$0xff]
        %v3312 = vld [vmem:[%s230 + $0x380] sm:$0xff]
        %v3313 = vld [vmem:[%s230 + $0x388] sm:$0xff]
        %v3314 = vld [vmem:[%s230 + $0x390] sm:$0xff]
        %v3315 = vld [vmem:[%s230 + $0x398] sm:$0xff]
        %v3316 = vld [vmem:[%s230 + $0x3a0] sm:$0xff]
        %v3317 = vld [vmem:[%s230 + $0x3a8] sm:$0xff]
        %v3318 = vld [vmem:[%s230 + $0x3b0] sm:$0xff]
        %v3319 = vld [vmem:[%s230 + $0x3b8] sm:$0xff]
        %v3320 = vld [vmem:[%s230 + $0x3c0] sm:$0xff]
        %v3321 = vld [vmem:[%s230 + $0x3c8] sm:$0xff]
        %v3322 = vld [vmem:[%s230 + $0x3d0] sm:$0xff]
        %v3323 = vld [vmem:[%s230 + $0x3d8] sm:$0xff]
        %v3324 = vld [vmem:[%s230 + $0x3e0] sm:$0xff]
        %v3325 = vld [vmem:[%s230 + $0x3e8] sm:$0xff]
        %v3326 = vld [vmem:[%s230 + $0x3f0] sm:$0xff]
        %v3327 = vld [vmem:[%s230 + $0x3f8] sm:$0xff]
        %v3328 = vld [vmem:[%s230 + $0x400] sm:$0xff]
        %v3329 = vld [vmem:[%s230 + $0x408] sm:$0xff]
        %v3330 = vld [vmem:[%s230 + $0x410] sm:$0xff]
        %v3331 = vld [vmem:[%s230 + $0x418] sm:$0xff]
        %v3332 = vld [vmem:[%s230 + $0x420] sm:$0xff]
        %v3333 = vld [vmem:[%s230 + $0x428] sm:$0xff]
        %v3334 = vld [vmem:[%s230 + $0x430] sm:$0xff]
        %v3335 = vld [vmem:[%s230 + $0x438] sm:$0xff]
        %v3336 = vld [vmem:[%s230 + $0x440] sm:$0xff]
        %v3337 = vld [vmem:[%s230 + $0x448] sm:$0xff]
        %v3338 = vld [vmem:[%s230 + $0x450] sm:$0xff]
        %v3339 = vld [vmem:[%s230 + $0x458] sm:$0xff]
        %v3340 = vld [vmem:[%s230 + $0x460] sm:$0xff]
        %v3341 = vld [vmem:[%s230 + $0x468] sm:$0xff]
        %v3342 = vld [vmem:[%s230 + $0x470] sm:$0xff]
        %v3343 = vld [vmem:[%s230 + $0x478] sm:$0xff]
        %v3344 = vld [vmem:[%s230 + $0x480] sm:$0xff]
        %v3345 = vld [vmem:[%s230 + $0x488] sm:$0xff]
        %v3346 = vld [vmem:[%s230 + $0x490] sm:$0xff]
        %v3347 = vld [vmem:[%s230 + $0x498] sm:$0xff]
        %v3348 = vld [vmem:[%s230 + $0x4a0] sm:$0xff]
        %v3349 = vld [vmem:[%s230 + $0x4a8] sm:$0xff]
        %v3350 = vld [vmem:[%s230 + $0x4b0] sm:$0xff]
        %v3351 = vld [vmem:[%s230 + $0x4b8] sm:$0xff]
        %v3352 = vld [vmem:[%s230 + $0x4c0] sm:$0xff]
        %v3353 = vld [vmem:[%s230 + $0x4c8] sm:$0xff]
        %v3354 = vld [vmem:[%s230 + $0x4d0] sm:$0xff]
        %v3355 = vld [vmem:[%s230 + $0x4d8] sm:$0xff]
        %v3356 = vld [vmem:[%s230 + $0x4e0] sm:$0xff]
        %v3357 = vld [vmem:[%s230 + $0x4e8] sm:$0xff]
        %v3358 = vld [vmem:[%s230 + $0x4f0] sm:$0xff]
        %v3359 = vld [vmem:[%s230 + $0x4f8] sm:$0xff]
        %v3360 = vld [vmem:[%s230 + $0x500] sm:$0xff]
        %v3361 = vld [vmem:[%s230 + $0x508] sm:$0xff]
        %v3362 = vld [vmem:[%s230 + $0x510] sm:$0xff]
        %v3363 = vld [vmem:[%s230 + $0x518] sm:$0xff]
        %v3364 = vld [vmem:[%s230 + $0x520] sm:$0xff]
        %v3365 = vld [vmem:[%s230 + $0x528] sm:$0xff]
        %v3366 = vld [vmem:[%s230 + $0x530] sm:$0xff]
        %v3367 = vld [vmem:[%s230 + $0x538] sm:$0xff]
        %v3368 = vld [vmem:[%s230 + $0x540] sm:$0xff]
        %v3369 = vld [vmem:[%s230 + $0x548] sm:$0xff]
        %v3370 = vld [vmem:[%s230 + $0x550] sm:$0xff]
        %v3371 = vld [vmem:[%s230 + $0x558] sm:$0xff]
        %v3372 = vld [vmem:[%s230 + $0x560] sm:$0xff]
        %v3373 = vld [vmem:[%s230 + $0x568] sm:$0xff]
        %v3374 = vld [vmem:[%s230 + $0x570] sm:$0xff]
        %v3375 = vld [vmem:[%s230 + $0x578] sm:$0xff]
        %v3376 = vld [vmem:[%s230 + $0x580] sm:$0xff]
        %v3377 = vld [vmem:[%s230 + $0x588] sm:$0xff]
        %v3378 = vld [vmem:[%s230 + $0x590] sm:$0xff]
        %v3379 = vld [vmem:[%s230 + $0x598] sm:$0xff]
        %v3380 = vld [vmem:[%s230 + $0x5a0] sm:$0xff]
        %v3381 = vld [vmem:[%s230 + $0x5a8] sm:$0xff]
        %v3382 = vld [vmem:[%s230 + $0x5b0] sm:$0xff]
        %v3383 = vld [vmem:[%s230 + $0x5b8] sm:$0xff]
        %v3384 = vld [vmem:[%s230 + $0x5c0] sm:$0xff]
        %v3385 = vld [vmem:[%s230 + $0x5c8] sm:$0xff]
        %v3386 = vld [vmem:[%s230 + $0x5d0] sm:$0xff]
        %v3387 = vld [vmem:[%s230 + $0x5d8] sm:$0xff]
        %v3388 = vld [vmem:[%s230 + $0x5e0] sm:$0xff]
        %v3389 = vld [vmem:[%s230 + $0x5e8] sm:$0xff]
        %v3390 = vld [vmem:[%s230 + $0x5f0] sm:$0xff]
        %v3391 = vld [vmem:[%s230 + $0x5f8] sm:$0xff]
        %v3392 = vld [vmem:[#allocation2] sm:$0xff]
        %v3393 = vld [vmem:[#allocation2 + $0x8] sm:$0xff]
        %v3394 = vld [vmem:[#allocation2 + $0x10] sm:$0xff]
        %v3395 = vld [vmem:[#allocation2 + $0x18] sm:$0xff]
        %v3396 = vld [vmem:[#allocation2 + $0x20] sm:$0xff]
        %v3397 = vld [vmem:[#allocation2 + $0x28] sm:$0xff]
        %v3398 = vld [vmem:[#allocation2 + $0x30] sm:$0xff]
        %v3399 = vld [vmem:[#allocation2 + $0x38] sm:$0xff]
        %v3400 = vld [vmem:[#allocation2 + $0x40] sm:$0xff]
        %v3401 = vld [vmem:[#allocation2 + $0x48] sm:$0xff]
        %v3402 = vld [vmem:[#allocation2 + $0x50] sm:$0xff]
        %v3403 = vld [vmem:[#allocation2 + $0x58] sm:$0xff]
        %v3404 = vld [vmem:[#allocation2 + $0x60] sm:$0xff]
        %v3405 = vld [vmem:[#allocation2 + $0x68] sm:$0xff]
        %v3406 = vld [vmem:[#allocation2 + $0x70] sm:$0xff]
        %v3407 = vld [vmem:[#allocation2 + $0x78] sm:$0xff]
        %v3408 = vld [vmem:[#allocation2 + $0x80] sm:$0xff]
        %v3409 = vld [vmem:[#allocation2 + $0x88] sm:$0xff]
        %v3410 = vld [vmem:[#allocation2 + $0x90] sm:$0xff]
        %v3411 = vld [vmem:[#allocation2 + $0x98] sm:$0xff]
        %v3412 = vld [vmem:[#allocation2 + $0xa0] sm:$0xff]
        %v3413 = vld [vmem:[#allocation2 + $0xa8] sm:$0xff]
        %v3414 = vld [vmem:[#allocation2 + $0xb0] sm:$0xff]
        %v3415 = vld [vmem:[#allocation2 + $0xb8] sm:$0xff]
        %v3416 = vld [vmem:[#allocation2 + $0xc0] sm:$0xff]
        %v3417 = vld [vmem:[#allocation2 + $0xc8] sm:$0xff]
        %v3418 = vld [vmem:[#allocation2 + $0xd0] sm:$0xff]
        %v3419 = vld [vmem:[#allocation2 + $0xd8] sm:$0xff]
        %v3420 = vld [vmem:[#allocation2 + $0xe0] sm:$0xff]
        %v3421 = vld [vmem:[#allocation2 + $0xe8] sm:$0xff]
        %v3422 = vld [vmem:[#allocation2 + $0xf0] sm:$0xff]
        %v3423 = vld [vmem:[#allocation2 + $0xf8] sm:$0xff]
        %v3424 = vld [vmem:[#allocation2 + $0x100] sm:$0xff]
        %v3425 = vld [vmem:[#allocation2 + $0x108] sm:$0xff]
        %v3426 = vld [vmem:[#allocation2 + $0x110] sm:$0xff]
        %v3427 = vld [vmem:[#allocation2 + $0x118] sm:$0xff]
        %v3428 = vld [vmem:[#allocation2 + $0x120] sm:$0xff]
        %v3429 = vld [vmem:[#allocation2 + $0x128] sm:$0xff]
        %v3430 = vld [vmem:[#allocation2 + $0x130] sm:$0xff]
        %v3431 = vld [vmem:[#allocation2 + $0x138] sm:$0xff]
        %v3432 = vld [vmem:[#allocation2 + $0x140] sm:$0xff]
        %v3433 = vld [vmem:[#allocation2 + $0x148] sm:$0xff]
        %v3434 = vld [vmem:[#allocation2 + $0x150] sm:$0xff]
        %v3435 = vld [vmem:[#allocation2 + $0x158] sm:$0xff]
        %v3436 = vld [vmem:[#allocation2 + $0x160] sm:$0xff]
        %v3437 = vld [vmem:[#allocation2 + $0x168] sm:$0xff]
        %v3438 = vld [vmem:[#allocation2 + $0x170] sm:$0xff]
        %v3439 = vld [vmem:[#allocation2 + $0x178] sm:$0xff]
        %3440 = vmatpush.xpose.msra.mxu0 %v3260
        %3441 = vmatpush.xpose.msra.mxu0 %v3256
        %3442 = vmatpush.xpose.msra.mxu0 %v3252
        %3443 = vmatpush.xpose.msra.mxu0 %v3248
        %3444 = vmatpush.xpose.msra.mxu0 %v3244
        %3445 = vmatpush.xpose.msra.mxu0 %v3240
        %3446 = vmatpush.xpose.msra.mxu0 %v3236
        %3447 = vmatpush.xpose.msra.mxu0 %v3232
        %3448 = vmatpush.xpose.msra.mxu0 %v3228
        %3449 = vmatpush.xpose.msra.mxu0 %v3224
        %3450 = vmatpush.xpose.msra.mxu0 %v3220
        %3451 = vmatpush.xpose.msra.mxu0 %v3216
        %3452 = vmatpush.xpose.msra.mxu0 %v3212
        %3453 = vmatpush.xpose.msra.mxu0 %v3208
        %3454 = vmatpush.xpose.msra.mxu0 %v3204
        %3455 = vmatpush.xpose.msra.mxu0 %v3200
        %3456 = vmatmul.f32.gmra.mxu0 %v3136
        %v3457 = vpop.f32.mrf.mxu0
        %v3458 = vadd.f32 0.0, %v3457
        %3459 = vmatmul.f32.gmra.mxu0 %v3140
        %v3460 = vpop.f32.mrf.mxu0
        %v3461 = vadd.f32 0.0, %v3460
        %3462 = vmatmul.f32.gmra.mxu0 %v3144
        %v3463 = vpop.f32.mrf.mxu0
        %v3464 = vadd.f32 0.0, %v3463
        %3465 = vmatmul.f32.gmra.mxu0 %v3148
        %v3466 = vpop.f32.mrf.mxu0
        %v3467 = vadd.f32 0.0, %v3466
        %3468 = vmatmul.f32.gmra.mxu0 %v3152
        %v3469 = vpop.f32.mrf.mxu0
        %v3470 = vadd.f32 0.0, %v3469
        %3471 = vmatmul.f32.gmra.mxu0 %v3156
        %v3472 = vpop.f32.mrf.mxu0
        %v3473 = vadd.f32 0.0, %v3472
        %3474 = vmatmul.f32.gmra.mxu0 %v3160
        %v3475 = vpop.f32.mrf.mxu0
        %v3476 = vadd.f32 0.0, %v3475
        %3477 = vmatmul.f32.gmra.mxu0 %v3164
        %v3478 = vpop.f32.mrf.mxu0
        %v3479 = vadd.f32 0.0, %v3478
        %3480 = vmatmul.f32.gmra.mxu0 %v3168
        %v3481 = vpop.f32.mrf.mxu0
        %v3482 = vadd.f32 0.0, %v3481
        %3483 = vmatmul.f32.gmra.mxu0 %v3172
        %v3484 = vpop.f32.mrf.mxu0
        %v3485 = vadd.f32 0.0, %v3484
        %3486 = vmatmul.f32.gmra.mxu0 %v3176
        %v3487 = vpop.f32.mrf.mxu0
        %v3488 = vadd.f32 0.0, %v3487
        %3489 = vmatmul.f32.gmra.mxu0 %v3180
        %v3490 = vpop.f32.mrf.mxu0
        %v3491 = vadd.f32 0.0, %v3490
        %3492 = vmatmul.f32.gmra.mxu0 %v3184
        %v3493 = vpop.f32.mrf.mxu0
        %v3494 = vadd.f32 0.0, %v3493
        %3495 = vmatmul.f32.gmra.mxu0 %v3188
        %v3496 = vpop.f32.mrf.mxu0
        %v3497 = vadd.f32 0.0, %v3496
        %3498 = vmatmul.f32.gmra.mxu0 %v3192
        %v3499 = vpop.f32.mrf.mxu0
        %v3500 = vadd.f32 0.0, %v3499
        %3501 = vmatmul.f32.gmra.mxu0 %v3196
        %v3502 = vpop.f32.mrf.mxu0
        %v3503 = vadd.f32 0.0, %v3502
        %3504 = vdwg.mxu0
        %3505 = vmatpush.xpose.msra.mxu0 %v3261
        %3506 = vmatpush.xpose.msra.mxu0 %v3257
        %3507 = vmatpush.xpose.msra.mxu0 %v3253
        %3508 = vmatpush.xpose.msra.mxu0 %v3249
        %3509 = vmatpush.xpose.msra.mxu0 %v3245
        %3510 = vmatpush.xpose.msra.mxu0 %v3241
        %3511 = vmatpush.xpose.msra.mxu0 %v3237
        %3512 = vmatpush.xpose.msra.mxu0 %v3233
        %3513 = vmatpush.xpose.msra.mxu0 %v3229
        %3514 = vmatpush.xpose.msra.mxu0 %v3225
        %3515 = vmatpush.xpose.msra.mxu0 %v3221
        %3516 = vmatpush.xpose.msra.mxu0 %v3217
        %3517 = vmatpush.xpose.msra.mxu0 %v3213
        %3518 = vmatpush.xpose.msra.mxu0 %v3209
        %3519 = vmatpush.xpose.msra.mxu0 %v3205
        %3520 = vmatpush.xpose.msra.mxu0 %v3201
        %3521 = vmatmul.f32.gmra.mxu0 %v3137
        %v3522 = vpop.f32.mrf.mxu0
        %v3523 = vadd.f32 %v3458, %v3522
        %3524 = vmatmul.f32.gmra.mxu0 %v3141
        %v3525 = vpop.f32.mrf.mxu0
        %v3526 = vadd.f32 %v3461, %v3525
        %3527 = vmatmul.f32.gmra.mxu0 %v3145
        %v3528 = vpop.f32.mrf.mxu0
        %v3529 = vadd.f32 %v3464, %v3528
        %3530 = vmatmul.f32.gmra.mxu0 %v3149
        %v3531 = vpop.f32.mrf.mxu0
        %v3532 = vadd.f32 %v3467, %v3531
        %3533 = vmatmul.f32.gmra.mxu0 %v3153
        %v3534 = vpop.f32.mrf.mxu0
        %v3535 = vadd.f32 %v3470, %v3534
        %3536 = vmatmul.f32.gmra.mxu0 %v3157
        %v3537 = vpop.f32.mrf.mxu0
        %v3538 = vadd.f32 %v3473, %v3537
        %3539 = vmatmul.f32.gmra.mxu0 %v3161
        %v3540 = vpop.f32.mrf.mxu0
        %v3541 = vadd.f32 %v3476, %v3540
        %3542 = vmatmul.f32.gmra.mxu0 %v3165
        %v3543 = vpop.f32.mrf.mxu0
        %v3544 = vadd.f32 %v3479, %v3543
        %3545 = vmatmul.f32.gmra.mxu0 %v3169
        %v3546 = vpop.f32.mrf.mxu0
        %v3547 = vadd.f32 %v3482, %v3546
        %3548 = vmatmul.f32.gmra.mxu0 %v3173
        %v3549 = vpop.f32.mrf.mxu0
        %v3550 = vadd.f32 %v3485, %v3549
        %3551 = vmatmul.f32.gmra.mxu0 %v3177
        %v3552 = vpop.f32.mrf.mxu0
        %v3553 = vadd.f32 %v3488, %v3552
        %3554 = vmatmul.f32.gmra.mxu0 %v3181
        %v3555 = vpop.f32.mrf.mxu0
        %v3556 = vadd.f32 %v3491, %v3555
        %3557 = vmatmul.f32.gmra.mxu0 %v3185
        %v3558 = vpop.f32.mrf.mxu0
        %v3559 = vadd.f32 %v3494, %v3558
        %3560 = vmatmul.f32.gmra.mxu0 %v3189
        %v3561 = vpop.f32.mrf.mxu0
        %v3562 = vadd.f32 %v3497, %v3561
        %3563 = vmatmul.f32.gmra.mxu0 %v3193
        %v3564 = vpop.f32.mrf.mxu0
        %v3565 = vadd.f32 %v3500, %v3564
        %3566 = vmatmul.f32.gmra.mxu0 %v3197
        %v3567 = vpop.f32.mrf.mxu0
        %v3568 = vadd.f32 %v3503, %v3567
        %3569 = vdwg.mxu0
        %3570 = vmatpush.xpose.msra.mxu0 %v3262
        %3571 = vmatpush.xpose.msra.mxu0 %v3258
        %3572 = vmatpush.xpose.msra.mxu0 %v3254
        %3573 = vmatpush.xpose.msra.mxu0 %v3250
        %3574 = vmatpush.xpose.msra.mxu0 %v3246
        %3575 = vmatpush.xpose.msra.mxu0 %v3242
        %3576 = vmatpush.xpose.msra.mxu0 %v3238
        %3577 = vmatpush.xpose.msra.mxu0 %v3234
        %3578 = vmatpush.xpose.msra.mxu0 %v3230
        %3579 = vmatpush.xpose.msra.mxu0 %v3226
        %3580 = vmatpush.xpose.msra.mxu0 %v3222
        %3581 = vmatpush.xpose.msra.mxu0 %v3218
        %3582 = vmatpush.xpose.msra.mxu0 %v3214
        %3583 = vmatpush.xpose.msra.mxu0 %v3210
        %3584 = vmatpush.xpose.msra.mxu0 %v3206
        %3585 = vmatpush.xpose.msra.mxu0 %v3202
        %3586 = vmatmul.f32.gmra.mxu0 %v3138
        %v3587 = vpop.f32.mrf.mxu0
        %v3588 = vadd.f32 %v3523, %v3587
        %3589 = vmatmul.f32.gmra.mxu0 %v3142
        %v3590 = vpop.f32.mrf.mxu0
        %v3591 = vadd.f32 %v3526, %v3590
        %3592 = vmatmul.f32.gmra.mxu0 %v3146
        %v3593 = vpop.f32.mrf.mxu0
        %v3594 = vadd.f32 %v3529, %v3593
        %3595 = vmatmul.f32.gmra.mxu0 %v3150
        %v3596 = vpop.f32.mrf.mxu0
        %v3597 = vadd.f32 %v3532, %v3596
        %3598 = vmatmul.f32.gmra.mxu0 %v3154
        %v3599 = vpop.f32.mrf.mxu0
        %v3600 = vadd.f32 %v3535, %v3599
        %3601 = vmatmul.f32.gmra.mxu0 %v3158
        %v3602 = vpop.f32.mrf.mxu0
        %v3603 = vadd.f32 %v3538, %v3602
        %3604 = vmatmul.f32.gmra.mxu0 %v3162
        %v3605 = vpop.f32.mrf.mxu0
        %v3606 = vadd.f32 %v3541, %v3605
        %3607 = vmatmul.f32.gmra.mxu0 %v3166
        %v3608 = vpop.f32.mrf.mxu0
        %v3609 = vadd.f32 %v3544, %v3608
        %3610 = vmatmul.f32.gmra.mxu0 %v3170
        %v3611 = vpop.f32.mrf.mxu0
        %v3612 = vadd.f32 %v3547, %v3611
        %3613 = vmatmul.f32.gmra.mxu0 %v3174
        %v3614 = vpop.f32.mrf.mxu0
        %v3615 = vadd.f32 %v3550, %v3614
        %3616 = vmatmul.f32.gmra.mxu0 %v3178
        %v3617 = vpop.f32.mrf.mxu0
        %v3618 = vadd.f32 %v3553, %v3617
        %3619 = vmatmul.f32.gmra.mxu0 %v3182
        %v3620 = vpop.f32.mrf.mxu0
        %v3621 = vadd.f32 %v3556, %v3620
        %3622 = vmatmul.f32.gmra.mxu0 %v3186
        %v3623 = vpop.f32.mrf.mxu0
        %v3624 = vadd.f32 %v3559, %v3623
        %3625 = vmatmul.f32.gmra.mxu0 %v3190
        %v3626 = vpop.f32.mrf.mxu0
        %v3627 = vadd.f32 %v3562, %v3626
        %3628 = vmatmul.f32.gmra.mxu0 %v3194
        %v3629 = vpop.f32.mrf.mxu0
        %v3630 = vadd.f32 %v3565, %v3629
        %3631 = vmatmul.f32.gmra.mxu0 %v3198
        %v3632 = vpop.f32.mrf.mxu0
        %v3633 = vadd.f32 %v3568, %v3632
        %3634 = vdwg.mxu0
        %3635 = vmatpush.xpose.msra.mxu0 %v3263
        %3636 = vmatpush.xpose.msra.mxu0 %v3259
        %3637 = vmatpush.xpose.msra.mxu0 %v3255
        %3638 = vmatpush.xpose.msra.mxu0 %v3251
        %3639 = vmatpush.xpose.msra.mxu0 %v3247
        %3640 = vmatpush.xpose.msra.mxu0 %v3243
        %3641 = vmatpush.xpose.msra.mxu0 %v3239
        %3642 = vmatpush.xpose.msra.mxu0 %v3235
        %3643 = vmatpush.xpose.msra.mxu0 %v3231
        %3644 = vmatpush.xpose.msra.mxu0 %v3227
        %3645 = vmatpush.xpose.msra.mxu0 %v3223
        %3646 = vmatpush.xpose.msra.mxu0 %v3219
        %3647 = vmatpush.xpose.msra.mxu0 %v3215
        %3648 = vmatpush.xpose.msra.mxu0 %v3211
        %3649 = vmatpush.xpose.msra.mxu0 %v3207
        %3650 = vmatpush.xpose.msra.mxu0 %v3203
        %3651 = vmatmul.f32.gmra.mxu0 %v3139
        %v3652 = vpop.f32.mrf.mxu0
        %v3653 = vadd.f32 %v3588, %v3652
        %3654 = vmatmul.f32.gmra.mxu0 %v3143
        %v3655 = vpop.f32.mrf.mxu0
        %v3656 = vadd.f32 %v3591, %v3655
        %3657 = vmatmul.f32.gmra.mxu0 %v3147
        %v3658 = vpop.f32.mrf.mxu0
        %v3659 = vadd.f32 %v3594, %v3658
        %3660 = vmatmul.f32.gmra.mxu0 %v3151
        %v3661 = vpop.f32.mrf.mxu0
        %v3662 = vadd.f32 %v3597, %v3661
        %3663 = vmatmul.f32.gmra.mxu0 %v3155
        %v3664 = vpop.f32.mrf.mxu0
        %v3665 = vadd.f32 %v3600, %v3664
        %3666 = vmatmul.f32.gmra.mxu0 %v3159
        %v3667 = vpop.f32.mrf.mxu0
        %v3668 = vadd.f32 %v3603, %v3667
        %3669 = vmatmul.f32.gmra.mxu0 %v3163
        %v3670 = vpop.f32.mrf.mxu0
        %v3671 = vadd.f32 %v3606, %v3670
        %3672 = vmatmul.f32.gmra.mxu0 %v3167
        %v3673 = vpop.f32.mrf.mxu0
        %v3674 = vadd.f32 %v3609, %v3673
        %3675 = vmatmul.f32.gmra.mxu0 %v3171
        %v3676 = vpop.f32.mrf.mxu0
        %v3677 = vadd.f32 %v3612, %v3676
        %3678 = vmatmul.f32.gmra.mxu0 %v3175
        %v3679 = vpop.f32.mrf.mxu0
        %v3680 = vadd.f32 %v3615, %v3679
        %3681 = vmatmul.f32.gmra.mxu0 %v3179
        %v3682 = vpop.f32.mrf.mxu0
        %v3683 = vadd.f32 %v3618, %v3682
        %3684 = vmatmul.f32.gmra.mxu0 %v3183
        %v3685 = vpop.f32.mrf.mxu0
        %v3686 = vadd.f32 %v3621, %v3685
        %3687 = vmatmul.f32.gmra.mxu0 %v3187
        %v3688 = vpop.f32.mrf.mxu0
        %v3689 = vadd.f32 %v3624, %v3688
        %3690 = vmatmul.f32.gmra.mxu0 %v3191
        %v3691 = vpop.f32.mrf.mxu0
        %v3692 = vadd.f32 %v3627, %v3691
        %3693 = vmatmul.f32.gmra.mxu0 %v3195
        %v3694 = vpop.f32.mrf.mxu0
        %v3695 = vadd.f32 %v3630, %v3694
        %3696 = vmatmul.f32.gmra.mxu0 %v3199
        %v3697 = vpop.f32.mrf.mxu0
        %v3698 = vadd.f32 %v3633, %v3697
        %3699 = vdwg.mxu0
        %3700 = vmatpush.xpose.msra.mxu0 %v3324
        %3701 = vmatpush.xpose.msra.mxu0 %v3320
        %3702 = vmatpush.xpose.msra.mxu0 %v3316
        %3703 = vmatpush.xpose.msra.mxu0 %v3312
        %3704 = vmatpush.xpose.msra.mxu0 %v3308
        %3705 = vmatpush.xpose.msra.mxu0 %v3304
        %3706 = vmatpush.xpose.msra.mxu0 %v3300
        %3707 = vmatpush.xpose.msra.mxu0 %v3296
        %3708 = vmatpush.xpose.msra.mxu0 %v3292
        %3709 = vmatpush.xpose.msra.mxu0 %v3288
        %3710 = vmatpush.xpose.msra.mxu0 %v3284
        %3711 = vmatpush.xpose.msra.mxu0 %v3280
        %3712 = vmatpush.xpose.msra.mxu0 %v3276
        %3713 = vmatpush.xpose.msra.mxu0 %v3272
        %3714 = vmatpush.xpose.msra.mxu0 %v3268
        %3715 = vmatpush.xpose.msra.mxu0 %v3264
        %3716 = vmatmul.f32.gmra.mxu0 %v3136
        %v3717 = vpop.f32.mrf.mxu0
        %v3718 = vadd.f32 0.0, %v3717
        %3719 = vmatmul.f32.gmra.mxu0 %v3140
        %v3720 = vpop.f32.mrf.mxu0
        %v3721 = vadd.f32 0.0, %v3720
        %3722 = vmatmul.f32.gmra.mxu0 %v3144
        %v3723 = vpop.f32.mrf.mxu0
        %v3724 = vadd.f32 0.0, %v3723
        %3725 = vmatmul.f32.gmra.mxu0 %v3148
        %v3726 = vpop.f32.mrf.mxu0
        %v3727 = vadd.f32 0.0, %v3726
        %3728 = vmatmul.f32.gmra.mxu0 %v3152
        %v3729 = vpop.f32.mrf.mxu0
        %v3730 = vadd.f32 0.0, %v3729
        %3731 = vmatmul.f32.gmra.mxu0 %v3156
        %v3732 = vpop.f32.mrf.mxu0
        %v3733 = vadd.f32 0.0, %v3732
        %3734 = vmatmul.f32.gmra.mxu0 %v3160
        %v3735 = vpop.f32.mrf.mxu0
        %v3736 = vadd.f32 0.0, %v3735
        %3737 = vmatmul.f32.gmra.mxu0 %v3164
        %v3738 = vpop.f32.mrf.mxu0
        %v3739 = vadd.f32 0.0, %v3738
        %3740 = vmatmul.f32.gmra.mxu0 %v3168
        %v3741 = vpop.f32.mrf.mxu0
        %v3742 = vadd.f32 0.0, %v3741
        %3743 = vmatmul.f32.gmra.mxu0 %v3172
        %v3744 = vpop.f32.mrf.mxu0
        %v3745 = vadd.f32 0.0, %v3744
        %3746 = vmatmul.f32.gmra.mxu0 %v3176
        %v3747 = vpop.f32.mrf.mxu0
        %v3748 = vadd.f32 0.0, %v3747
        %3749 = vmatmul.f32.gmra.mxu0 %v3180
        %v3750 = vpop.f32.mrf.mxu0
        %v3751 = vadd.f32 0.0, %v3750
        %3752 = vmatmul.f32.gmra.mxu0 %v3184
        %v3753 = vpop.f32.mrf.mxu0
        %v3754 = vadd.f32 0.0, %v3753
        %3755 = vmatmul.f32.gmra.mxu0 %v3188
        %v3756 = vpop.f32.mrf.mxu0
        %v3757 = vadd.f32 0.0, %v3756
        %3758 = vmatmul.f32.gmra.mxu0 %v3192
        %v3759 = vpop.f32.mrf.mxu0
        %v3760 = vadd.f32 0.0, %v3759
        %3761 = vmatmul.f32.gmra.mxu0 %v3196
        %v3762 = vpop.f32.mrf.mxu0
        %v3763 = vadd.f32 0.0, %v3762
        %3764 = vdwg.mxu0
        %3765 = vmatpush.xpose.msra.mxu0 %v3325
        %3766 = vmatpush.xpose.msra.mxu0 %v3321
        %3767 = vmatpush.xpose.msra.mxu0 %v3317
        %3768 = vmatpush.xpose.msra.mxu0 %v3313
        %3769 = vmatpush.xpose.msra.mxu0 %v3309
        %3770 = vmatpush.xpose.msra.mxu0 %v3305
        %3771 = vmatpush.xpose.msra.mxu0 %v3301
        %3772 = vmatpush.xpose.msra.mxu0 %v3297
        %3773 = vmatpush.xpose.msra.mxu0 %v3293
        %3774 = vmatpush.xpose.msra.mxu0 %v3289
        %3775 = vmatpush.xpose.msra.mxu0 %v3285
        %3776 = vmatpush.xpose.msra.mxu0 %v3281
        %3777 = vmatpush.xpose.msra.mxu0 %v3277
        %3778 = vmatpush.xpose.msra.mxu0 %v3273
        %3779 = vmatpush.xpose.msra.mxu0 %v3269
        %3780 = vmatpush.xpose.msra.mxu0 %v3265
        %3781 = vmatmul.f32.gmra.mxu0 %v3137
        %v3782 = vpop.f32.mrf.mxu0
        %v3783 = vadd.f32 %v3718, %v3782
        %3784 = vmatmul.f32.gmra.mxu0 %v3141
        %v3785 = vpop.f32.mrf.mxu0
        %v3786 = vadd.f32 %v3721, %v3785
        %3787 = vmatmul.f32.gmra.mxu0 %v3145
        %v3788 = vpop.f32.mrf.mxu0
        %v3789 = vadd.f32 %v3724, %v3788
        %3790 = vmatmul.f32.gmra.mxu0 %v3149
        %v3791 = vpop.f32.mrf.mxu0
        %v3792 = vadd.f32 %v3727, %v3791
        %3793 = vmatmul.f32.gmra.mxu0 %v3153
        %v3794 = vpop.f32.mrf.mxu0
        %v3795 = vadd.f32 %v3730, %v3794
        %3796 = vmatmul.f32.gmra.mxu0 %v3157
        %v3797 = vpop.f32.mrf.mxu0
        %v3798 = vadd.f32 %v3733, %v3797
        %3799 = vmatmul.f32.gmra.mxu0 %v3161
        %v3800 = vpop.f32.mrf.mxu0
        %v3801 = vadd.f32 %v3736, %v3800
        %3802 = vmatmul.f32.gmra.mxu0 %v3165
        %v3803 = vpop.f32.mrf.mxu0
        %v3804 = vadd.f32 %v3739, %v3803
        %3805 = vmatmul.f32.gmra.mxu0 %v3169
        %v3806 = vpop.f32.mrf.mxu0
        %v3807 = vadd.f32 %v3742, %v3806
        %3808 = vmatmul.f32.gmra.mxu0 %v3173
        %v3809 = vpop.f32.mrf.mxu0
        %v3810 = vadd.f32 %v3745, %v3809
        %3811 = vmatmul.f32.gmra.mxu0 %v3177
        %v3812 = vpop.f32.mrf.mxu0
        %v3813 = vadd.f32 %v3748, %v3812
        %3814 = vmatmul.f32.gmra.mxu0 %v3181
        %v3815 = vpop.f32.mrf.mxu0
        %v3816 = vadd.f32 %v3751, %v3815
        %3817 = vmatmul.f32.gmra.mxu0 %v3185
        %v3818 = vpop.f32.mrf.mxu0
        %v3819 = vadd.f32 %v3754, %v3818
        %3820 = vmatmul.f32.gmra.mxu0 %v3189
        %v3821 = vpop.f32.mrf.mxu0
        %v3822 = vadd.f32 %v3757, %v3821
        %3823 = vmatmul.f32.gmra.mxu0 %v3193
        %v3824 = vpop.f32.mrf.mxu0
        %v3825 = vadd.f32 %v3760, %v3824
        %3826 = vmatmul.f32.gmra.mxu0 %v3197
        %v3827 = vpop.f32.mrf.mxu0
        %v3828 = vadd.f32 %v3763, %v3827
        %3829 = vdwg.mxu0
        %3830 = vmatpush.xpose.msra.mxu0 %v3326
        %3831 = vmatpush.xpose.msra.mxu0 %v3322
        %3832 = vmatpush.xpose.msra.mxu0 %v3318
        %3833 = vmatpush.xpose.msra.mxu0 %v3314
        %3834 = vmatpush.xpose.msra.mxu0 %v3310
        %3835 = vmatpush.xpose.msra.mxu0 %v3306
        %3836 = vmatpush.xpose.msra.mxu0 %v3302
        %3837 = vmatpush.xpose.msra.mxu0 %v3298
        %3838 = vmatpush.xpose.msra.mxu0 %v3294
        %3839 = vmatpush.xpose.msra.mxu0 %v3290
        %3840 = vmatpush.xpose.msra.mxu0 %v3286
        %3841 = vmatpush.xpose.msra.mxu0 %v3282
        %3842 = vmatpush.xpose.msra.mxu0 %v3278
        %3843 = vmatpush.xpose.msra.mxu0 %v3274
        %3844 = vmatpush.xpose.msra.mxu0 %v3270
        %3845 = vmatpush.xpose.msra.mxu0 %v3266
        %3846 = vmatmul.f32.gmra.mxu0 %v3138
        %v3847 = vpop.f32.mrf.mxu0
        %v3848 = vadd.f32 %v3783, %v3847
        %3849 = vmatmul.f32.gmra.mxu0 %v3142
        %v3850 = vpop.f32.mrf.mxu0
        %v3851 = vadd.f32 %v3786, %v3850
        %3852 = vmatmul.f32.gmra.mxu0 %v3146
        %v3853 = vpop.f32.mrf.mxu0
        %v3854 = vadd.f32 %v3789, %v3853
        %3855 = vmatmul.f32.gmra.mxu0 %v3150
        %v3856 = vpop.f32.mrf.mxu0
        %v3857 = vadd.f32 %v3792, %v3856
        %3858 = vmatmul.f32.gmra.mxu0 %v3154
        %v3859 = vpop.f32.mrf.mxu0
        %v3860 = vadd.f32 %v3795, %v3859
        %3861 = vmatmul.f32.gmra.mxu0 %v3158
        %v3862 = vpop.f32.mrf.mxu0
        %v3863 = vadd.f32 %v3798, %v3862
        %3864 = vmatmul.f32.gmra.mxu0 %v3162
        %v3865 = vpop.f32.mrf.mxu0
        %v3866 = vadd.f32 %v3801, %v3865
        %3867 = vmatmul.f32.gmra.mxu0 %v3166
        %v3868 = vpop.f32.mrf.mxu0
        %v3869 = vadd.f32 %v3804, %v3868
        %3870 = vmatmul.f32.gmra.mxu0 %v3170
        %v3871 = vpop.f32.mrf.mxu0
        %v3872 = vadd.f32 %v3807, %v3871
        %3873 = vmatmul.f32.gmra.mxu0 %v3174
        %v3874 = vpop.f32.mrf.mxu0
        %v3875 = vadd.f32 %v3810, %v3874
        %3876 = vmatmul.f32.gmra.mxu0 %v3178
        %v3877 = vpop.f32.mrf.mxu0
        %v3878 = vadd.f32 %v3813, %v3877
        %3879 = vmatmul.f32.gmra.mxu0 %v3182
        %v3880 = vpop.f32.mrf.mxu0
        %v3881 = vadd.f32 %v3816, %v3880
        %3882 = vmatmul.f32.gmra.mxu0 %v3186
        %v3883 = vpop.f32.mrf.mxu0
        %v3884 = vadd.f32 %v3819, %v3883
        %3885 = vmatmul.f32.gmra.mxu0 %v3190
        %v3886 = vpop.f32.mrf.mxu0
        %v3887 = vadd.f32 %v3822, %v3886
        %3888 = vmatmul.f32.gmra.mxu0 %v3194
        %v3889 = vpop.f32.mrf.mxu0
        %v3890 = vadd.f32 %v3825, %v3889
        %3891 = vmatmul.f32.gmra.mxu0 %v3198
        %v3892 = vpop.f32.mrf.mxu0
        %v3893 = vadd.f32 %v3828, %v3892
        %3894 = vdwg.mxu0
        %3895 = vmatpush.xpose.msra.mxu0 %v3327
        %3896 = vmatpush.xpose.msra.mxu0 %v3323
        %3897 = vmatpush.xpose.msra.mxu0 %v3319
        %3898 = vmatpush.xpose.msra.mxu0 %v3315
        %3899 = vmatpush.xpose.msra.mxu0 %v3311
        %3900 = vmatpush.xpose.msra.mxu0 %v3307
        %3901 = vmatpush.xpose.msra.mxu0 %v3303
        %3902 = vmatpush.xpose.msra.mxu0 %v3299
        %3903 = vmatpush.xpose.msra.mxu0 %v3295
        %3904 = vmatpush.xpose.msra.mxu0 %v3291
        %3905 = vmatpush.xpose.msra.mxu0 %v3287
        %3906 = vmatpush.xpose.msra.mxu0 %v3283
        %3907 = vmatpush.xpose.msra.mxu0 %v3279
        %3908 = vmatpush.xpose.msra.mxu0 %v3275
        %3909 = vmatpush.xpose.msra.mxu0 %v3271
        %3910 = vmatpush.xpose.msra.mxu0 %v3267
        %3911 = vmatmul.f32.gmra.mxu0 %v3139
        %v3912 = vpop.f32.mrf.mxu0
        %v3913 = vadd.f32 %v3848, %v3912
        %3914 = vmatmul.f32.gmra.mxu0 %v3143
        %v3915 = vpop.f32.mrf.mxu0
        %v3916 = vadd.f32 %v3851, %v3915
        %3917 = vmatmul.f32.gmra.mxu0 %v3147
        %v3918 = vpop.f32.mrf.mxu0
        %v3919 = vadd.f32 %v3854, %v3918
        %3920 = vmatmul.f32.gmra.mxu0 %v3151
        %v3921 = vpop.f32.mrf.mxu0
        %v3922 = vadd.f32 %v3857, %v3921
        %3923 = vmatmul.f32.gmra.mxu0 %v3155
        %v3924 = vpop.f32.mrf.mxu0
        %v3925 = vadd.f32 %v3860, %v3924
        %3926 = vmatmul.f32.gmra.mxu0 %v3159
        %v3927 = vpop.f32.mrf.mxu0
        %v3928 = vadd.f32 %v3863, %v3927
        %3929 = vmatmul.f32.gmra.mxu0 %v3163
        %v3930 = vpop.f32.mrf.mxu0
        %v3931 = vadd.f32 %v3866, %v3930
        %3932 = vmatmul.f32.gmra.mxu0 %v3167
        %v3933 = vpop.f32.mrf.mxu0
        %v3934 = vadd.f32 %v3869, %v3933
        %3935 = vmatmul.f32.gmra.mxu0 %v3171
        %v3936 = vpop.f32.mrf.mxu0
        %v3937 = vadd.f32 %v3872, %v3936
        %3938 = vmatmul.f32.gmra.mxu0 %v3175
        %v3939 = vpop.f32.mrf.mxu0
        %v3940 = vadd.f32 %v3875, %v3939
        %3941 = vmatmul.f32.gmra.mxu0 %v3179
        %v3942 = vpop.f32.mrf.mxu0
        %v3943 = vadd.f32 %v3878, %v3942
        %3944 = vmatmul.f32.gmra.mxu0 %v3183
        %v3945 = vpop.f32.mrf.mxu0
        %v3946 = vadd.f32 %v3881, %v3945
        %3947 = vmatmul.f32.gmra.mxu0 %v3187
        %v3948 = vpop.f32.mrf.mxu0
        %v3949 = vadd.f32 %v3884, %v3948
        %3950 = vmatmul.f32.gmra.mxu0 %v3191
        %v3951 = vpop.f32.mrf.mxu0
        %v3952 = vadd.f32 %v3887, %v3951
        %3953 = vmatmul.f32.gmra.mxu0 %v3195
        %v3954 = vpop.f32.mrf.mxu0
        %v3955 = vadd.f32 %v3890, %v3954
        %3956 = vmatmul.f32.gmra.mxu0 %v3199
        %v3957 = vpop.f32.mrf.mxu0
        %v3958 = vadd.f32 %v3893, %v3957
        %3959 = vdwg.mxu0
        %3960 = vmatpush.xpose.msra.mxu0 %v3388
        %3961 = vmatpush.xpose.msra.mxu0 %v3384
        %3962 = vmatpush.xpose.msra.mxu0 %v3380
        %3963 = vmatpush.xpose.msra.mxu0 %v3376
        %3964 = vmatpush.xpose.msra.mxu0 %v3372
        %3965 = vmatpush.xpose.msra.mxu0 %v3368
        %3966 = vmatpush.xpose.msra.mxu0 %v3364
        %3967 = vmatpush.xpose.msra.mxu0 %v3360
        %3968 = vmatpush.xpose.msra.mxu0 %v3356
        %3969 = vmatpush.xpose.msra.mxu0 %v3352
        %3970 = vmatpush.xpose.msra.mxu0 %v3348
        %3971 = vmatpush.xpose.msra.mxu0 %v3344
        %3972 = vmatpush.xpose.msra.mxu0 %v3340
        %3973 = vmatpush.xpose.msra.mxu0 %v3336
        %3974 = vmatpush.xpose.msra.mxu0 %v3332
        %3975 = vmatpush.xpose.msra.mxu0 %v3328
        %3976 = vmatmul.f32.gmra.mxu0 %v3136
        %v3977 = vpop.f32.mrf.mxu0
        %v3978 = vadd.f32 0.0, %v3977
        %3979 = vmatmul.f32.gmra.mxu0 %v3140
        %v3980 = vpop.f32.mrf.mxu0
        %v3981 = vadd.f32 0.0, %v3980
        %3982 = vmatmul.f32.gmra.mxu0 %v3144
        %v3983 = vpop.f32.mrf.mxu0
        %v3984 = vadd.f32 0.0, %v3983
        %3985 = vmatmul.f32.gmra.mxu0 %v3148
        %v3986 = vpop.f32.mrf.mxu0
        %v3987 = vadd.f32 0.0, %v3986
        %3988 = vmatmul.f32.gmra.mxu0 %v3152
        %v3989 = vpop.f32.mrf.mxu0
        %v3990 = vadd.f32 0.0, %v3989
        %3991 = vmatmul.f32.gmra.mxu0 %v3156
        %v3992 = vpop.f32.mrf.mxu0
        %v3993 = vadd.f32 0.0, %v3992
        %3994 = vmatmul.f32.gmra.mxu0 %v3160
        %v3995 = vpop.f32.mrf.mxu0
        %v3996 = vadd.f32 0.0, %v3995
        %3997 = vmatmul.f32.gmra.mxu0 %v3164
        %v3998 = vpop.f32.mrf.mxu0
        %v3999 = vadd.f32 0.0, %v3998
        %4000 = vmatmul.f32.gmra.mxu0 %v3168
        %v4001 = vpop.f32.mrf.mxu0
        %v4002 = vadd.f32 0.0, %v4001
        %4003 = vmatmul.f32.gmra.mxu0 %v3172
        %v4004 = vpop.f32.mrf.mxu0
        %v4005 = vadd.f32 0.0, %v4004
        %4006 = vmatmul.f32.gmra.mxu0 %v3176
        %v4007 = vpop.f32.mrf.mxu0
        %v4008 = vadd.f32 0.0, %v4007
        %4009 = vmatmul.f32.gmra.mxu0 %v3180
        %v4010 = vpop.f32.mrf.mxu0
        %v4011 = vadd.f32 0.0, %v4010
        %4012 = vmatmul.f32.gmra.mxu0 %v3184
        %v4013 = vpop.f32.mrf.mxu0
        %v4014 = vadd.f32 0.0, %v4013
        %4015 = vmatmul.f32.gmra.mxu0 %v3188
        %v4016 = vpop.f32.mrf.mxu0
        %v4017 = vadd.f32 0.0, %v4016
        %4018 = vmatmul.f32.gmra.mxu0 %v3192
        %v4019 = vpop.f32.mrf.mxu0
        %v4020 = vadd.f32 0.0, %v4019
        %4021 = vmatmul.f32.gmra.mxu0 %v3196
        %v4022 = vpop.f32.mrf.mxu0
        %v4023 = vadd.f32 0.0, %v4022
        %4024 = vdwg.mxu0
        %4025 = vmatpush.xpose.msra.mxu0 %v3389
        %4026 = vmatpush.xpose.msra.mxu0 %v3385
        %4027 = vmatpush.xpose.msra.mxu0 %v3381
        %4028 = vmatpush.xpose.msra.mxu0 %v3377
        %4029 = vmatpush.xpose.msra.mxu0 %v3373
        %4030 = vmatpush.xpose.msra.mxu0 %v3369
        %4031 = vmatpush.xpose.msra.mxu0 %v3365
        %4032 = vmatpush.xpose.msra.mxu0 %v3361
        %4033 = vmatpush.xpose.msra.mxu0 %v3357
        %4034 = vmatpush.xpose.msra.mxu0 %v3353
        %4035 = vmatpush.xpose.msra.mxu0 %v3349
        %4036 = vmatpush.xpose.msra.mxu0 %v3345
        %4037 = vmatpush.xpose.msra.mxu0 %v3341
        %4038 = vmatpush.xpose.msra.mxu0 %v3337
        %4039 = vmatpush.xpose.msra.mxu0 %v3333
        %4040 = vmatpush.xpose.msra.mxu0 %v3329
        %4041 = vmatmul.f32.gmra.mxu0 %v3137
        %v4042 = vpop.f32.mrf.mxu0
        %v4043 = vadd.f32 %v3978, %v4042
        %4044 = vmatmul.f32.gmra.mxu0 %v3141
        %v4045 = vpop.f32.mrf.mxu0
        %v4046 = vadd.f32 %v3981, %v4045
        %4047 = vmatmul.f32.gmra.mxu0 %v3145
        %v4048 = vpop.f32.mrf.mxu0
        %v4049 = vadd.f32 %v3984, %v4048
        %4050 = vmatmul.f32.gmra.mxu0 %v3149
        %v4051 = vpop.f32.mrf.mxu0
        %v4052 = vadd.f32 %v3987, %v4051
        %4053 = vmatmul.f32.gmra.mxu0 %v3153
        %v4054 = vpop.f32.mrf.mxu0
        %v4055 = vadd.f32 %v3990, %v4054
        %4056 = vmatmul.f32.gmra.mxu0 %v3157
        %v4057 = vpop.f32.mrf.mxu0
        %v4058 = vadd.f32 %v3993, %v4057
        %4059 = vmatmul.f32.gmra.mxu0 %v3161
        %v4060 = vpop.f32.mrf.mxu0
        %v4061 = vadd.f32 %v3996, %v4060
        %4062 = vmatmul.f32.gmra.mxu0 %v3165
        %v4063 = vpop.f32.mrf.mxu0
        %v4064 = vadd.f32 %v3999, %v4063
        %4065 = vmatmul.f32.gmra.mxu0 %v3169
        %v4066 = vpop.f32.mrf.mxu0
        %v4067 = vadd.f32 %v4002, %v4066
        %4068 = vmatmul.f32.gmra.mxu0 %v3173
        %v4069 = vpop.f32.mrf.mxu0
        %v4070 = vadd.f32 %v4005, %v4069
        %4071 = vmatmul.f32.gmra.mxu0 %v3177
        %v4072 = vpop.f32.mrf.mxu0
        %v4073 = vadd.f32 %v4008, %v4072
        %4074 = vmatmul.f32.gmra.mxu0 %v3181
        %v4075 = vpop.f32.mrf.mxu0
        %v4076 = vadd.f32 %v4011, %v4075
        %4077 = vmatmul.f32.gmra.mxu0 %v3185
        %v4078 = vpop.f32.mrf.mxu0
        %v4079 = vadd.f32 %v4014, %v4078
        %4080 = vmatmul.f32.gmra.mxu0 %v3189
        %v4081 = vpop.f32.mrf.mxu0
        %v4082 = vadd.f32 %v4017, %v4081
        %4083 = vmatmul.f32.gmra.mxu0 %v3193
        %v4084 = vpop.f32.mrf.mxu0
        %v4085 = vadd.f32 %v4020, %v4084
        %4086 = vmatmul.f32.gmra.mxu0 %v3197
        %v4087 = vpop.f32.mrf.mxu0
        %v4088 = vadd.f32 %v4023, %v4087
        %4089 = vdwg.mxu0
        %4090 = vmatpush.xpose.msra.mxu0 %v3390
        %4091 = vmatpush.xpose.msra.mxu0 %v3386
        %4092 = vmatpush.xpose.msra.mxu0 %v3382
        %4093 = vmatpush.xpose.msra.mxu0 %v3378
        %4094 = vmatpush.xpose.msra.mxu0 %v3374
        %4095 = vmatpush.xpose.msra.mxu0 %v3370
        %4096 = vmatpush.xpose.msra.mxu0 %v3366
        %4097 = vmatpush.xpose.msra.mxu0 %v3362
        %4098 = vmatpush.xpose.msra.mxu0 %v3358
        %4099 = vmatpush.xpose.msra.mxu0 %v3354
        %4100 = vmatpush.xpose.msra.mxu0 %v3350
        %4101 = vmatpush.xpose.msra.mxu0 %v3346
        %4102 = vmatpush.xpose.msra.mxu0 %v3342
        %4103 = vmatpush.xpose.msra.mxu0 %v3338
        %4104 = vmatpush.xpose.msra.mxu0 %v3334
        %4105 = vmatpush.xpose.msra.mxu0 %v3330
        %4106 = vmatmul.f32.gmra.mxu0 %v3138
        %v4107 = vpop.f32.mrf.mxu0
        %v4108 = vadd.f32 %v4043, %v4107
        %4109 = vmatmul.f32.gmra.mxu0 %v3142
        %v4110 = vpop.f32.mrf.mxu0
        %v4111 = vadd.f32 %v4046, %v4110
        %4112 = vmatmul.f32.gmra.mxu0 %v3146
        %v4113 = vpop.f32.mrf.mxu0
        %v4114 = vadd.f32 %v4049, %v4113
        %4115 = vmatmul.f32.gmra.mxu0 %v3150
        %v4116 = vpop.f32.mrf.mxu0
        %v4117 = vadd.f32 %v4052, %v4116
        %4118 = vmatmul.f32.gmra.mxu0 %v3154
        %v4119 = vpop.f32.mrf.mxu0
        %v4120 = vadd.f32 %v4055, %v4119
        %4121 = vmatmul.f32.gmra.mxu0 %v3158
        %v4122 = vpop.f32.mrf.mxu0
        %v4123 = vadd.f32 %v4058, %v4122
        %4124 = vmatmul.f32.gmra.mxu0 %v3162
        %v4125 = vpop.f32.mrf.mxu0
        %v4126 = vadd.f32 %v4061, %v4125
        %4127 = vmatmul.f32.gmra.mxu0 %v3166
        %v4128 = vpop.f32.mrf.mxu0
        %v4129 = vadd.f32 %v4064, %v4128
        %4130 = vmatmul.f32.gmra.mxu0 %v3170
        %v4131 = vpop.f32.mrf.mxu0
        %v4132 = vadd.f32 %v4067, %v4131
        %4133 = vmatmul.f32.gmra.mxu0 %v3174
        %v4134 = vpop.f32.mrf.mxu0
        %v4135 = vadd.f32 %v4070, %v4134
        %4136 = vmatmul.f32.gmra.mxu0 %v3178
        %v4137 = vpop.f32.mrf.mxu0
        %v4138 = vadd.f32 %v4073, %v4137
        %4139 = vmatmul.f32.gmra.mxu0 %v3182
        %v4140 = vpop.f32.mrf.mxu0
        %v4141 = vadd.f32 %v4076, %v4140
        %4142 = vmatmul.f32.gmra.mxu0 %v3186
        %v4143 = vpop.f32.mrf.mxu0
        %v4144 = vadd.f32 %v4079, %v4143
        %4145 = vmatmul.f32.gmra.mxu0 %v3190
        %v4146 = vpop.f32.mrf.mxu0
        %v4147 = vadd.f32 %v4082, %v4146
        %4148 = vmatmul.f32.gmra.mxu0 %v3194
        %v4149 = vpop.f32.mrf.mxu0
        %v4150 = vadd.f32 %v4085, %v4149
        %4151 = vmatmul.f32.gmra.mxu0 %v3198
        %v4152 = vpop.f32.mrf.mxu0
        %v4153 = vadd.f32 %v4088, %v4152
        %4154 = vdwg.mxu0
        %4155 = vmatpush.xpose.msra.mxu0 %v3391
        %4156 = vmatpush.xpose.msra.mxu0 %v3387
        %4157 = vmatpush.xpose.msra.mxu0 %v3383
        %4158 = vmatpush.xpose.msra.mxu0 %v3379
        %4159 = vmatpush.xpose.msra.mxu0 %v3375
        %4160 = vmatpush.xpose.msra.mxu0 %v3371
        %4161 = vmatpush.xpose.msra.mxu0 %v3367
        %4162 = vmatpush.xpose.msra.mxu0 %v3363
        %4163 = vmatpush.xpose.msra.mxu0 %v3359
        %4164 = vmatpush.xpose.msra.mxu0 %v3355
        %4165 = vmatpush.xpose.msra.mxu0 %v3351
        %4166 = vmatpush.xpose.msra.mxu0 %v3347
        %4167 = vmatpush.xpose.msra.mxu0 %v3343
        %4168 = vmatpush.xpose.msra.mxu0 %v3339
        %4169 = vmatpush.xpose.msra.mxu0 %v3335
        %4170 = vmatpush.xpose.msra.mxu0 %v3331
        %4171 = vmatmul.f32.gmra.mxu0 %v3139
        %v4172 = vpop.f32.mrf.mxu0
        %v4173 = vadd.f32 %v4108, %v4172
        %4174 = vmatmul.f32.gmra.mxu0 %v3143
        %v4175 = vpop.f32.mrf.mxu0
        %v4176 = vadd.f32 %v4111, %v4175
        %4177 = vmatmul.f32.gmra.mxu0 %v3147
        %v4178 = vpop.f32.mrf.mxu0
        %v4179 = vadd.f32 %v4114, %v4178
        %4180 = vmatmul.f32.gmra.mxu0 %v3151
        %v4181 = vpop.f32.mrf.mxu0
        %v4182 = vadd.f32 %v4117, %v4181
        %4183 = vmatmul.f32.gmra.mxu0 %v3155
        %v4184 = vpop.f32.mrf.mxu0
        %v4185 = vadd.f32 %v4120, %v4184
        %4186 = vmatmul.f32.gmra.mxu0 %v3159
        %v4187 = vpop.f32.mrf.mxu0
        %v4188 = vadd.f32 %v4123, %v4187
        %4189 = vmatmul.f32.gmra.mxu0 %v3163
        %v4190 = vpop.f32.mrf.mxu0
        %v4191 = vadd.f32 %v4126, %v4190
        %4192 = vmatmul.f32.gmra.mxu0 %v3167
        %v4193 = vpop.f32.mrf.mxu0
        %v4194 = vadd.f32 %v4129, %v4193
        %4195 = vmatmul.f32.gmra.mxu0 %v3171
        %v4196 = vpop.f32.mrf.mxu0
        %v4197 = vadd.f32 %v4132, %v4196
        %4198 = vmatmul.f32.gmra.mxu0 %v3175
        %v4199 = vpop.f32.mrf.mxu0
        %v4200 = vadd.f32 %v4135, %v4199
        %4201 = vmatmul.f32.gmra.mxu0 %v3179
        %v4202 = vpop.f32.mrf.mxu0
        %v4203 = vadd.f32 %v4138, %v4202
        %4204 = vmatmul.f32.gmra.mxu0 %v3183
        %v4205 = vpop.f32.mrf.mxu0
        %v4206 = vadd.f32 %v4141, %v4205
        %4207 = vmatmul.f32.gmra.mxu0 %v3187
        %v4208 = vpop.f32.mrf.mxu0
        %v4209 = vadd.f32 %v4144, %v4208
        %4210 = vmatmul.f32.gmra.mxu0 %v3191
        %v4211 = vpop.f32.mrf.mxu0
        %v4212 = vadd.f32 %v4147, %v4211
        %4213 = vmatmul.f32.gmra.mxu0 %v3195
        %v4214 = vpop.f32.mrf.mxu0
        %v4215 = vadd.f32 %v4150, %v4214
        %4216 = vmatmul.f32.gmra.mxu0 %v3199
        %v4217 = vpop.f32.mrf.mxu0
        %v4218 = vadd.f32 %v4153, %v4217
        %4219 = vdwg.mxu0
        %v4220 = vadd.f32 %v3392, %v3653
        %v4221 = vadd.f32 %v3393, %v3913
        %v4222 = vadd.f32 %v3394, %v4173
        %v4223 = vadd.f32 %v3395, %v3656
        %v4224 = vadd.f32 %v3396, %v3916
        %v4225 = vadd.f32 %v3397, %v4176
        %v4226 = vadd.f32 %v3398, %v3659
        %v4227 = vadd.f32 %v3399, %v3919
        %v4228 = vadd.f32 %v3400, %v4179
        %v4229 = vadd.f32 %v3401, %v3662
        %v4230 = vadd.f32 %v3402, %v3922
        %v4231 = vadd.f32 %v3403, %v4182
        %v4232 = vadd.f32 %v3404, %v3665
        %v4233 = vadd.f32 %v3405, %v3925
        %v4234 = vadd.f32 %v3406, %v4185
        %v4235 = vadd.f32 %v3407, %v3668
        %v4236 = vadd.f32 %v3408, %v3928
        %v4237 = vadd.f32 %v3409, %v4188
        %v4238 = vadd.f32 %v3410, %v3671
        %v4239 = vadd.f32 %v3411, %v3931
        %v4240 = vadd.f32 %v3412, %v4191
        %v4241 = vadd.f32 %v3413, %v3674
        %v4242 = vadd.f32 %v3414, %v3934
        %v4243 = vadd.f32 %v3415, %v4194
        %v4244 = vadd.f32 %v3416, %v3677
        %v4245 = vadd.f32 %v3417, %v3937
        %v4246 = vadd.f32 %v3418, %v4197
        %v4247 = vadd.f32 %v3419, %v3680
        %v4248 = vadd.f32 %v3420, %v3940
        %v4249 = vadd.f32 %v3421, %v4200
        %v4250 = vadd.f32 %v3422, %v3683
        %v4251 = vadd.f32 %v3423, %v3943
        %v4252 = vadd.f32 %v3424, %v4203
        %v4253 = vadd.f32 %v3425, %v3686
        %v4254 = vadd.f32 %v3426, %v3946
        %v4255 = vadd.f32 %v3427, %v4206
        %v4256 = vadd.f32 %v3428, %v3689
        %v4257 = vadd.f32 %v3429, %v3949
        %v4258 = vadd.f32 %v3430, %v4209
        %v4259 = vadd.f32 %v3431, %v3692
        %v4260 = vadd.f32 %v3432, %v3952
        %v4261 = vadd.f32 %v3433, %v4212
        %v4262 = vadd.f32 %v3434, %v3695
        %v4263 = vadd.f32 %v3435, %v3955
        %v4264 = vadd.f32 %v3436, %v4215
        %v4265 = vadd.f32 %v3437, %v3698
        %v4266 = vadd.f32 %v3438, %v3958
        %v4267 = vadd.f32 %v3439, %v4218
        %4268 = vst [vmem:[#allocation2] sm:$0xff] %v4220
        %4269 = vst [vmem:[#allocation2 + $0x8] sm:$0xff] %v4221
        %4270 = vst [vmem:[#allocation2 + $0x10] sm:$0xff] %v4222
        %4271 = vst [vmem:[#allocation2 + $0x18] sm:$0xff] %v4223
        %4272 = vst [vmem:[#allocation2 + $0x20] sm:$0xff] %v4224
        %4273 = vst [vmem:[#allocation2 + $0x28] sm:$0xff] %v4225
        %4274 = vst [vmem:[#allocation2 + $0x30] sm:$0xff] %v4226
        %4275 = vst [vmem:[#allocation2 + $0x38] sm:$0xff] %v4227
        %4276 = vst [vmem:[#allocation2 + $0x40] sm:$0xff] %v4228
        %4277 = vst [vmem:[#allocation2 + $0x48] sm:$0xff] %v4229
        %4278 = vst [vmem:[#allocation2 + $0x50] sm:$0xff] %v4230
        %4279 = vst [vmem:[#allocation2 + $0x58] sm:$0xff] %v4231
        %4280 = vst [vmem:[#allocation2 + $0x60] sm:$0xff] %v4232
        %4281 = vst [vmem:[#allocation2 + $0x68] sm:$0xff] %v4233
        %4282 = vst [vmem:[#allocation2 + $0x70] sm:$0xff] %v4234
        %4283 = vst [vmem:[#allocation2 + $0x78] sm:$0xff] %v4235
        %4284 = vst [vmem:[#allocation2 + $0x80] sm:$0xff] %v4236
        %4285 = vst [vmem:[#allocation2 + $0x88] sm:$0xff] %v4237
        %4286 = vst [vmem:[#allocation2 + $0x90] sm:$0xff] %v4238
        %4287 = vst [vmem:[#allocation2 + $0x98] sm:$0xff] %v4239
        %4288 = vst [vmem:[#allocation2 + $0xa0] sm:$0xff] %v4240
        %4289 = vst [vmem:[#allocation2 + $0xa8] sm:$0xff] %v4241
        %4290 = vst [vmem:[#allocation2 + $0xb0] sm:$0xff] %v4242
        %4291 = vst [vmem:[#allocation2 + $0xb8] sm:$0xff] %v4243
        %4292 = vst [vmem:[#allocation2 + $0xc0] sm:$0xff] %v4244
        %4293 = vst [vmem:[#allocation2 + $0xc8] sm:$0xff] %v4245
        %4294 = vst [vmem:[#allocation2 + $0xd0] sm:$0xff] %v4246
        %4295 = vst [vmem:[#allocation2 + $0xd8] sm:$0xff] %v4247
        %4296 = vst [vmem:[#allocation2 + $0xe0] sm:$0xff] %v4248
        %4297 = vst [vmem:[#allocation2 + $0xe8] sm:$0xff] %v4249
        %4298 = vst [vmem:[#allocation2 + $0xf0] sm:$0xff] %v4250
        %4299 = vst [vmem:[#allocation2 + $0xf8] sm:$0xff] %v4251
        %4300 = vst [vmem:[#allocation2 + $0x100] sm:$0xff] %v4252
        %4301 = vst [vmem:[#allocation2 + $0x108] sm:$0xff] %v4253
        %4302 = vst [vmem:[#allocation2 + $0x110] sm:$0xff] %v4254
        %4303 = vst [vmem:[#allocation2 + $0x118] sm:$0xff] %v4255
        %4304 = vst [vmem:[#allocation2 + $0x120] sm:$0xff] %v4256
        %4305 = vst [vmem:[#allocation2 + $0x128] sm:$0xff] %v4257
        %4306 = vst [vmem:[#allocation2 + $0x130] sm:$0xff] %v4258
        %4307 = vst [vmem:[#allocation2 + $0x138] sm:$0xff] %v4259
        %4308 = vst [vmem:[#allocation2 + $0x140] sm:$0xff] %v4260
        %4309 = vst [vmem:[#allocation2 + $0x148] sm:$0xff] %v4261
        %4310 = vst [vmem:[#allocation2 + $0x150] sm:$0xff] %v4262
        %4311 = vst [vmem:[#allocation2 + $0x158] sm:$0xff] %v4263
        %4312 = vst [vmem:[#allocation2 + $0x160] sm:$0xff] %v4264
        %4313 = vst [vmem:[#allocation2 + $0x168] sm:$0xff] %v4265
        %4314 = vst [vmem:[#allocation2 + $0x170] sm:$0xff] %v4266
        %4315 = vst [vmem:[#allocation2 + $0x178] sm:$0xff] %v4267
        %p4316 = scmp.eq.s32.totalorder %s28, 2
        // Predicated region
        $region49: #{tpu_custom_call.1} parent=31 // pred_check
          %p4317 = pneg %p4316
        $region50: #{tpu_custom_call.1} parent=31 // pred_check_branch
          %4319 = sbr.rel (%p4317) target = $region52
        $region51: #{tpu_custom_call.1} parent=31 // pred_region
          %v4320 = vld [vmem:[#allocation2] sm:$0xff]
          %v4321 = vld [vmem:[#allocation2 + $0x8] sm:$0xff]
          %v4322 = vld [vmem:[#allocation2 + $0x10] sm:$0xff]
          %v4323 = vld [vmem:[#allocation2 + $0x18] sm:$0xff]
          %v4324 = vld [vmem:[#allocation2 + $0x20] sm:$0xff]
          %v4325 = vld [vmem:[#allocation2 + $0x28] sm:$0xff]
          %v4326 = vld [vmem:[#allocation2 + $0x30] sm:$0xff]
          %v4327 = vld [vmem:[#allocation2 + $0x38] sm:$0xff]
          %v4328 = vld [vmem:[#allocation2 + $0x40] sm:$0xff]
          %v4329 = vld [vmem:[#allocation2 + $0x48] sm:$0xff]
          %v4330 = vld [vmem:[#allocation2 + $0x50] sm:$0xff]
          %v4331 = vld [vmem:[#allocation2 + $0x58] sm:$0xff]
          %v4332 = vld [vmem:[#allocation2 + $0x60] sm:$0xff]
          %v4333 = vld [vmem:[#allocation2 + $0x68] sm:$0xff]
          %v4334 = vld [vmem:[#allocation2 + $0x70] sm:$0xff]
          %v4335 = vld [vmem:[#allocation2 + $0x78] sm:$0xff]
          %v4336 = vld [vmem:[#allocation2 + $0x80] sm:$0xff]
          %v4337 = vld [vmem:[#allocation2 + $0x88] sm:$0xff]
          %v4338 = vld [vmem:[#allocation2 + $0x90] sm:$0xff]
          %v4339 = vld [vmem:[#allocation2 + $0x98] sm:$0xff]
          %v4340 = vld [vmem:[#allocation2 + $0xa0] sm:$0xff]
          %v4341 = vld [vmem:[#allocation2 + $0xa8] sm:$0xff]
          %v4342 = vld [vmem:[#allocation2 + $0xb0] sm:$0xff]
          %v4343 = vld [vmem:[#allocation2 + $0xb8] sm:$0xff]
          %v4344 = vld [vmem:[#allocation2 + $0xc0] sm:$0xff]
          %v4345 = vld [vmem:[#allocation2 + $0xc8] sm:$0xff]
          %v4346 = vld [vmem:[#allocation2 + $0xd0] sm:$0xff]
          %v4347 = vld [vmem:[#allocation2 + $0xd8] sm:$0xff]
          %v4348 = vld [vmem:[#allocation2 + $0xe0] sm:$0xff]
          %v4349 = vld [vmem:[#allocation2 + $0xe8] sm:$0xff]
          %v4350 = vld [vmem:[#allocation2 + $0xf0] sm:$0xff]
          %v4351 = vld [vmem:[#allocation2 + $0xf8] sm:$0xff]
          %v4352 = vld [vmem:[#allocation2 + $0x100] sm:$0xff]
          %v4353 = vld [vmem:[#allocation2 + $0x108] sm:$0xff]
          %v4354 = vld [vmem:[#allocation2 + $0x110] sm:$0xff]
          %v4355 = vld [vmem:[#allocation2 + $0x118] sm:$0xff]
          %v4356 = vld [vmem:[#allocation2 + $0x120] sm:$0xff]
          %v4357 = vld [vmem:[#allocation2 + $0x128] sm:$0xff]
          %v4358 = vld [vmem:[#allocation2 + $0x130] sm:$0xff]
          %v4359 = vld [vmem:[#allocation2 + $0x138] sm:$0xff]
          %v4360 = vld [vmem:[#allocation2 + $0x140] sm:$0xff]
          %v4361 = vld [vmem:[#allocation2 + $0x148] sm:$0xff]
          %v4362 = vld [vmem:[#allocation2 + $0x150] sm:$0xff]
          %v4363 = vld [vmem:[#allocation2 + $0x158] sm:$0xff]
          %v4364 = vld [vmem:[#allocation2 + $0x160] sm:$0xff]
          %v4365 = vld [vmem:[#allocation2 + $0x168] sm:$0xff]
          %v4366 = vld [vmem:[#allocation2 + $0x170] sm:$0xff]
          %v4367 = vld [vmem:[#allocation2 + $0x178] sm:$0xff]
          %v4368 = vld [vmem:[#allocation8] sm:$0x7]
          %v4370 = vperm.slane %v4368, 0
          %v4371 = vperm.slane %v4368, 1
          %v4372 = vperm.slane %v4368, 2
          %v4376 = vadd.f32 %v4320, %v4370
          %v4377 = vadd.f32 %v4321, %v4371
          %v4378 = vadd.f32 %v4322, %v4372
          %v4379 = vadd.f32 %v4323, %v4370
          %v4380 = vadd.f32 %v4324, %v4371
          %v4381 = vadd.f32 %v4325, %v4372
          %v4382 = vadd.f32 %v4326, %v4370
          %v4383 = vadd.f32 %v4327, %v4371
          %v4384 = vadd.f32 %v4328, %v4372
          %v4385 = vadd.f32 %v4329, %v4370
          %v4386 = vadd.f32 %v4330, %v4371
          %v4387 = vadd.f32 %v4331, %v4372
          %v4388 = vadd.f32 %v4332, %v4370
          %v4389 = vadd.f32 %v4333, %v4371
          %v4390 = vadd.f32 %v4334, %v4372
          %v4391 = vadd.f32 %v4335, %v4370
          %v4392 = vadd.f32 %v4336, %v4371
          %v4393 = vadd.f32 %v4337, %v4372
          %v4394 = vadd.f32 %v4338, %v4370
          %v4395 = vadd.f32 %v4339, %v4371
          %v4396 = vadd.f32 %v4340, %v4372
          %v4397 = vadd.f32 %v4341, %v4370
          %v4398 = vadd.f32 %v4342, %v4371
          %v4399 = vadd.f32 %v4343, %v4372
          %v4400 = vadd.f32 %v4344, %v4370
          %v4401 = vadd.f32 %v4345, %v4371
          %v4402 = vadd.f32 %v4346, %v4372
          %v4403 = vadd.f32 %v4347, %v4370
          %v4404 = vadd.f32 %v4348, %v4371
          %v4405 = vadd.f32 %v4349, %v4372
          %v4406 = vadd.f32 %v4350, %v4370
          %v4407 = vadd.f32 %v4351, %v4371
          %v4408 = vadd.f32 %v4352, %v4372
          %v4409 = vadd.f32 %v4353, %v4370
          %v4410 = vadd.f32 %v4354, %v4371
          %v4411 = vadd.f32 %v4355, %v4372
          %v4412 = vadd.f32 %v4356, %v4370
          %v4413 = vadd.f32 %v4357, %v4371
          %v4414 = vadd.f32 %v4358, %v4372
          %v4415 = vadd.f32 %v4359, %v4370
          %v4416 = vadd.f32 %v4360, %v4371
          %v4417 = vadd.f32 %v4361, %v4372
          %v4418 = vadd.f32 %v4362, %v4370
          %v4419 = vadd.f32 %v4363, %v4371
          %v4420 = vadd.f32 %v4364, %v4372
          %v4421 = vadd.f32 %v4365, %v4370
          %v4422 = vadd.f32 %v4366, %v4371
          %v4423 = vadd.f32 %v4367, %v4372
          %4424 = vst [vmem:[%s263] sm:$0xff] %v4376
          %4425 = vst [vmem:[%s263 + $0x8] sm:$0xff] %v4377
          %4426 = vst [vmem:[%s263 + $0x10] sm:$0xff] %v4378
          %4427 = vst [vmem:[%s263 + $0x18] sm:$0xff] %v4379
          %4428 = vst [vmem:[%s263 + $0x20] sm:$0xff] %v4380
          %4429 = vst [vmem:[%s263 + $0x28] sm:$0xff] %v4381
          %4430 = vst [vmem:[%s263 + $0x30] sm:$0xff] %v4382
          %4431 = vst [vmem:[%s263 + $0x38] sm:$0xff] %v4383
          %4432 = vst [vmem:[%s263 + $0x40] sm:$0xff] %v4384
          %4433 = vst [vmem:[%s263 + $0x48] sm:$0xff] %v4385
          %4434 = vst [vmem:[%s263 + $0x50] sm:$0xff] %v4386
          %4435 = vst [vmem:[%s263 + $0x58] sm:$0xff] %v4387
          %4436 = vst [vmem:[%s263 + $0x60] sm:$0xff] %v4388
          %4437 = vst [vmem:[%s263 + $0x68] sm:$0xff] %v4389
          %4438 = vst [vmem:[%s263 + $0x70] sm:$0xff] %v4390
          %4439 = vst [vmem:[%s263 + $0x78] sm:$0xff] %v4391
          %4440 = vst [vmem:[%s263 + $0x80] sm:$0xff] %v4392
          %4441 = vst [vmem:[%s263 + $0x88] sm:$0xff] %v4393
          %4442 = vst [vmem:[%s263 + $0x90] sm:$0xff] %v4394
          %4443 = vst [vmem:[%s263 + $0x98] sm:$0xff] %v4395
          %4444 = vst [vmem:[%s263 + $0xa0] sm:$0xff] %v4396
          %4445 = vst [vmem:[%s263 + $0xa8] sm:$0xff] %v4397
          %4446 = vst [vmem:[%s263 + $0xb0] sm:$0xff] %v4398
          %4447 = vst [vmem:[%s263 + $0xb8] sm:$0xff] %v4399
          %4448 = vst [vmem:[%s263 + $0xc0] sm:$0xff] %v4400
          %4449 = vst [vmem:[%s263 + $0xc8] sm:$0xff] %v4401
          %4450 = vst [vmem:[%s263 + $0xd0] sm:$0xff] %v4402
          %4451 = vst [vmem:[%s263 + $0xd8] sm:$0xff] %v4403
          %4452 = vst [vmem:[%s263 + $0xe0] sm:$0xff] %v4404
          %4453 = vst [vmem:[%s263 + $0xe8] sm:$0xff] %v4405
          %4454 = vst [vmem:[%s263 + $0xf0] sm:$0xff] %v4406
          %4455 = vst [vmem:[%s263 + $0xf8] sm:$0xff] %v4407
          %4456 = vst [vmem:[%s263 + $0x100] sm:$0xff] %v4408
          %4457 = vst [vmem:[%s263 + $0x108] sm:$0xff] %v4409
          %4458 = vst [vmem:[%s263 + $0x110] sm:$0xff] %v4410
          %4459 = vst [vmem:[%s263 + $0x118] sm:$0xff] %v4411
          %4460 = vst [vmem:[%s263 + $0x120] sm:$0xff] %v4412
          %4461 = vst [vmem:[%s263 + $0x128] sm:$0xff] %v4413
          %4462 = vst [vmem:[%s263 + $0x130] sm:$0xff] %v4414
          %4463 = vst [vmem:[%s263 + $0x138] sm:$0xff] %v4415
          %4464 = vst [vmem:[%s263 + $0x140] sm:$0xff] %v4416
          %4465 = vst [vmem:[%s263 + $0x148] sm:$0xff] %v4417
          %4466 = vst [vmem:[%s263 + $0x150] sm:$0xff] %v4418
          %4467 = vst [vmem:[%s263 + $0x158] sm:$0xff] %v4419
          %4468 = vst [vmem:[%s263 + $0x160] sm:$0xff] %v4420
          %4469 = vst [vmem:[%s263 + $0x168] sm:$0xff] %v4421
          %4470 = vst [vmem:[%s263 + $0x170] sm:$0xff] %v4422
          %4471 = vst [vmem:[%s263 + $0x178] sm:$0xff] %v4423
        $region52: #{tpu_custom_call.1} parent=31 // pred_fallthru
          _
        %s4472 = sand.u32 %s118, 1
        %s4473 = scalar_lea.sflag [#allocation5], %s4472
        %s4474 = sand.u32 %s118, 1
        %s4475 = smul.addr %s4474, 384
        %s4476 = scalar_lea.vmem [#allocation9], %s4475
        // Predicated region
        $region53: #{tpu_custom_call.1} parent=31 // pred_check
          %p4477 = pneg %p128
        $region54: #{tpu_custom_call.1} parent=31 // pred_check_branch
          %4479 = sbr.rel (%p4477) target = $region56
        $region55: #{tpu_custom_call.1} parent=31 // pred_region
          %s4480 = smul.u32 16, %s27
          %4482 = vsyncadd %s4473, 0
          %s4483 = smul.addr %s4480, 3
          %s4484 = smul.addr %s4483, 8
          %s4485 = scalar_lea.hbm %s3, %s4484
          %s4486 = sshll.u32 %s4476, 4
          %s4487 = int_to_ptr.vmem [resolvable:$true] %s4486
          %s4488 = sshll.u32 %s4485, 4
          %s4489 = int_to_ptr.hbm [resolvable:$true] %s4488
          %4494 = dma.vmem_to_hbm [thread:$0]  %s4487, 6144, %s4489, %s4473, 384, 384, 24
        $region56: #{tpu_custom_call.1} parent=31 // pred_fallthru
          _
      $region32: #{tpu_custom_call.1} parent=5 // pred_fallthru
        _
      %p4495 = scmp.le.s32.totalorder 2, %s18
      // Predicated region
      $region57: #{tpu_custom_call.1} parent=5 // pred_check
        %p4496 = pneg %p4495
      $region58: #{tpu_custom_call.1} parent=5 // pred_check_branch
        %4498 = sbr.rel (%p4496) target = $region60
      $region59: #{tpu_custom_call.1} parent=5 // pred_region
        %s4499 = ssub.s32 %s18, 2
        // Predicated region
        $region61: #{tpu_custom_call.1} parent=59 // pred_check
          %p4500 = pneg %p134
        $region62: #{tpu_custom_call.1} parent=59 // pred_check_branch
          %4502 = sbr.rel (%p4500) target = $region64
        $region63: #{tpu_custom_call.1} parent=59 // pred_region
          %s4503 = sand.u32 %s119, 1
          %s4504 = scalar_lea.sflag [#allocation5], %s4503
          %s4505 = sand.u32 %s119, 1
          %s4506 = smul.addr %s4505, 384
          %s4507 = scalar_lea.vmem [#allocation9], %s4506
          %4509 = dma.done %s4504, 6144
        $region64: #{tpu_custom_call.1} parent=59 // pred_fallthru
          _
      $region60: #{tpu_custom_call.1} parent=5 // pred_fallthru
        _
    $region6: #{tpu_custom_call.1} parent=1 // loop_footer
      %s22 = sadd.s32 1, %s18
    $region7: #{tpu_custom_call.1} parent=1 // loop_footer_branch
      %17 = sbr.rel target = $region3
    $region8: #{tpu_custom_call.1} parent=1 // loop_exit
      _
    %4510 = vsyncpa [#allocation4], 1
    %s4511 = scalar_lea.sflag [#allocation4], 1
    %4512 = vsyncpa %s4511, 1
    %4513 = vsyncpa [#allocation7], 1
    %s4514 = scalar_lea.sflag [#allocation7], 1
    %4515 = vsyncpa %s4514, 1
    %4516 = vsyncpa [#allocation5], 1
    %s4517 = scalar_lea.sflag [#allocation5], 1
    %4518 = vsyncpa %s4517, 1

</llo_original>
